<compile_context>
chip_gen: v5e
topology: v5e:2x2
jax: 0.10.0
libtpu: 0.0.40
codegen_flags: <defaults>
</compile_context>

<pallas_src>
import math
import numpy as np
import jax
import jax.numpy as jnp
from jax import lax
from jax.experimental import pallas as pl
from jax.experimental.pallas import tpu as pltpu

NETWORK_CHANNELS = 64
LOWEST_FREQ = 0.01
LEAK = 0.2


# ----------------------------------------------------------------------------
# In-kernel helpers (all pure jnp/lax; traced into the fused kernel body)
# ----------------------------------------------------------------------------
def _sigmoid(z):
    # == jax.nn.sigmoid, expressed via tanh (EUP slot, no inf intermediate).
    return 0.5 * (jnp.tanh(0.5 * z) + 1.0)


def _lrelu(v):
    return jnp.where(v > 0, v, LEAK * v)


def _iota2(shape, dim):
    return lax.broadcasted_iota(jnp.int32, shape, dim)


def _shift_prev_mat(L):
    # (L, L) 0/1 matrix M: (x @ M)[:, t] = x[:, t-1], zero at t == 0.
    r, c = _iota2((L, L), 0), _iota2((L, L), 1)
    return jnp.where(r + 1 == c, 1.0, 0.0)


def _shift_next_mat(L):
    # (L, L) 0/1 matrix M: (x @ M)[:, t] = x[:, t+1], zero at t == L-1.
    r, c = _iota2((L, L), 0), _iota2((L, L), 1)
    return jnp.where(r == c + 1, 1.0, 0.0)


def _conv3_lrelu_t(cur, wfold, bias):
    # Conv1d(k=3, pad=1) + LeakyReLU(0.2) in transposed (C, L) layout.
    # wfold = [W0^T | W1^T | W2^T]  (Cout, 3*Cin);  bias (Cout, 1).
    _, L = cur.shape
    prev = jnp.dot(cur, _shift_prev_mat(L), preferred_element_type=jnp.float32)
    nxt = jnp.dot(cur, _shift_next_mat(L), preferred_element_type=jnp.float32)
    im2col = jnp.concatenate([prev, cur, nxt], axis=0)            # (3*Cin, L)
    h = jnp.dot(wfold, im2col, preferred_element_type=jnp.float32) + bias
    return _lrelu(h)


# ----------------------------------------------------------------------------
# Fused forward kernel (one batch element per grid step)
# ----------------------------------------------------------------------------
def _make_fused_kernel(n_layers, n_osc, S, F, hop, W):
    def kernel(*refs):
        (x_ref, nz_ref, wnet_ref, bnet_ref, wa_ref, ba_ref, wf_ref, bf_ref,
         interp_ref, wni_ref, bni_ref) = refs[:11]
        layer_refs = refs[11:11 + 2 * n_layers]
        wsp_ref, bsp_ref, dftp_ref, idftp_ref, o_ref = refs[11 + 2 * n_layers:]

        # -------- self.net : Conv1d(64, 64, 3, 1, 1) + LeakyReLU(0.2) --------
        xT = x_ref[0]                                             # (C, T)  channels x time
        hT = _conv3_lrelu_t(xT, wnet_ref[...], bnet_ref[...])     # (C, T)

        # -------- OscillatorBank ---------------------------------------------
        zaT = jnp.dot(wa_ref[...], hT, preferred_element_type=jnp.float32) + ba_ref[...]
        zfT = jnp.dot(wf_ref[...], hT, preferred_element_type=jnp.float32) + bf_ref[...]
        ampT = _sigmoid(zaT)                                      # (n_osc, T)
        freqT = LOWEST_FREQ + _sigmoid(zfT) * (1.0 - LOWEST_FREQ)  # constrain=True
        amp_up = jnp.dot(ampT, interp_ref[...], preferred_element_type=jnp.float32)   # (n_osc, S)
        freq_up = jnp.dot(freqT, interp_ref[...], preferred_element_type=jnp.float32)
        # cumsum over upsampled time as an upper-triangular matmul.
        # TODO(synk): switch to a blocked prefix sum if band_size is scaled to audio rates.
        r, c = _iota2((S, S), 0), _iota2((S, S), 1)
        cum = jnp.where(r <= c, 1.0, 0.0)
        phase = jnp.dot(freq_up * np.float32(np.pi), cum, preferred_element_type=jnp.float32)
        sig = jnp.sin(phase) * amp_up                             # (n_osc, S)
        # sum over oscillators on the MXU -> lane-dense (1, S) row
        osc_row = jnp.dot(jnp.ones((1, n_osc), jnp.float32), sig,
                          preferred_element_type=jnp.float32)

        # -------- NoiseModel : coefficient network ---------------------------
        cur = jnp.dot(wni_ref[...], hT, preferred_element_type=jnp.float32) + bni_ref[...]
        for l in range(n_layers):
            wl_ref, bl_ref = layer_refs[2 * l], layer_refs[2 * l + 1]
            L = cur.shape[1]
            rr, cc = _iota2((L, 2 * L), 0), _iota2((L, 2 * L), 1)
            rep = jnp.where((cc == 2 * rr) | (cc == 2 * rr + 1), 1.0, 0.0)
            cur = jnp.dot(cur, rep, preferred_element_type=jnp.float32)   # nearest x2 upsample
            cur = _conv3_lrelu_t(cur, wl_ref[...], bl_ref[...])
        # TODO(synk): exact coefficient nonlinearity of NoiseModel not in provided source; using |x|.
        coefT = jnp.abs(jnp.dot(wsp_ref[...], cur, preferred_element_type=jnp.float32)
                        + bsp_ref[...])                           # (K, F)

        # -------- NoiseModel : spectral filtering of white noise + overlap-add
        nz = nz_ref[0]                                            # (hop, F): nz[j, f] = noise[f*hop + j]
        nz_next = jnp.dot(nz, _shift_next_mat(F), preferred_element_type=jnp.float32)
        framesT = jnp.concatenate([nz, nz_next], axis=0)          # (W, F): framesT[w, f] = noise[f*hop + w]
        specT = jnp.dot(dftp_ref[...], framesT, preferred_element_type=jnp.float32)    # (2K, F) = [re ; im]
        filtT = specT * jnp.concatenate([coefT, coefT], axis=0)
        recT = jnp.dot(idftp_ref[...], filtT, preferred_element_type=jnp.float32)      # (W, F)
        # overlap-add (hop = W/2) straight into a lane-dense (1, S) row:
        #   out[f*hop + w] += rec[f, w]    (taps past the band are dropped, as before)
        rf, cf = _iota2((F, S), 0), _iota2((F, S), 1)
        noise_row = jnp.zeros((1, S), jnp.float32)
        for w in range(W):
            place = jnp.where(cf == rf * hop + w, 1.0, 0.0)       # (F, S) 0/1 placement
            noise_row = noise_row + jnp.dot(recT[w:w + 1, :], place,
                                            preferred_element_type=jnp.float32)

        o_ref[0] = osc_row + noise_row                            # lane-dense (1, band_size) store
    return kernel


# ----------------------------------------------------------------------------
# Host-side parameter / constant preparation (one-time layout packing)
# ----------------------------------------------------------------------------
def _pack_conv3(w3, b):
    # conv weight (3, Cin, Cout), bias (1, Cout) -> (Cout, 3*Cin), (Cout, 1)
    wfold = jnp.concatenate([w3[0].T, w3[1].T, w3[2].T], axis=1)
    return wfold, b.T


def prepare_weights(params):
    wnet, bnet = _pack_conv3(params["net_w"], params["net_b"])
    return dict(
        wnet=wnet, bnet=bnet,
        wa=params["amp_w"].T, ba=params["amp_b"].T,
        wf=params["freq_w"].T, bf=params["freq_b"].T,
        wni=params["noise_init_w"].T, bni=params["noise_init_b"].T,
        wsp=params["noise_spec_w"].T, bsp=params["noise_spec_b"].T,
        layers=[_pack_conv3(lw, lb) for (lw, lb) in params["noise_up"]],
    )


def linear_interp_matrix(t_in, t_out):
    # F.interpolate(mode='linear', align_corners=False) as a (t_out, t_in) matrix.
    i = np.arange(t_out, dtype=np.float64)
    src = np.clip((i + 0.5) * (t_in / t_out) - 0.5, 0.0, t_in - 1)
    lo = np.floor(src).astype(np.int64)
    hi = np.minimum(lo + 1, t_in - 1)
    w_hi = src - lo
    m = np.zeros((t_out, t_in), dtype=np.float32)
    m[np.arange(t_out), lo] += (1.0 - w_hi).astype(np.float32)
    m[np.arange(t_out), hi] += w_hi.astype(np.float32)
    return m


def build_consts(band_size, t_in=32):
    n_frames = band_size // 4
    hop = band_size // n_frames
    window = 2 * hop
    k_bins = window // 2 + 1
    interp_t = jnp.asarray(linear_interp_matrix(t_in, band_size).T)         # (T, S)
    n = np.arange(window)
    k = np.arange(k_bins)
    scale = 1.0 / np.sqrt(window)
    ang = 2.0 * np.pi * np.outer(n, k) / window
    dft_re = (np.cos(ang) * scale).astype(np.float32)                       # (W, K)
    dft_im = (-np.sin(ang) * scale).astype(np.float32)
    wk = np.ones(k_bins, np.float32)
    wk[1:k_bins - 1] = 2.0                                                  # Hermitian doubling
    ang2 = 2.0 * np.pi * np.outer(k, n) / window
    idft_re = (wk[:, None] * np.cos(ang2) * scale).astype(np.float32)       # (K, W)
    idft_im = (-wk[:, None] * np.sin(ang2) * scale).astype(np.float32)
    dft_pt = jnp.asarray(np.concatenate([dft_re.T, dft_im.T], axis=0))      # (2K, W)  [re ; im]
    idft_pt = jnp.asarray(np.concatenate([idft_re.T, idft_im.T], axis=1))   # (W, 2K)  [re | im]
    return dict(interp_t=interp_t, dft_pt=dft_pt, idft_pt=idft_pt)


def init_params(key, band_size, channels=NETWORK_CHANNELS, input_size=32):
    n_noise_frames = band_size // 4
    layers = int(round(math.log2(n_noise_frames) - math.log2(input_size)))
    n_coeffs = (2 * (band_size // n_noise_frames)) // 2 + 1
    keys = jax.random.split(key, 10 + 2 * layers)

    def w(k, shape, scale=0.05):
        return (scale * jax.random.normal(k, shape)).astype(jnp.float32)

    return {
        "net_w": w(keys[0], (3, channels, channels)),
        "net_b": w(keys[1], (1, channels)),
        "amp_w": w(keys[2], (channels, channels)),
        "amp_b": w(keys[3], (1, channels)),
        "freq_w": w(keys[4], (channels, channels)),
        "freq_b": w(keys[5], (1, channels)),
        "noise_init_w": w(keys[6], (channels, channels)),
        "noise_init_b": w(keys[7], (1, channels)),
        "noise_spec_w": w(keys[8], (channels, n_coeffs)),
        "noise_spec_b": w(keys[9], (1, n_coeffs)),
        "noise_up": [(w(keys[10 + 2 * l], (3, channels, channels)),
                      w(keys[11 + 2 * l], (1, channels))) for l in range(layers)],
    }


# ----------------------------------------------------------------------------
# Forward: one pallas_call, grid over the batch
# ----------------------------------------------------------------------------
def band_upsample_forward(x, noise, weights, consts, band_size):
    # x: (B, 32, 64) -- exactly what the torch forward receives; its
    # x.permute(0, 2, 1) is realized by the transpose to (B, C, T) below.
    B, T, C = x.shape
    S = band_size
    F = band_size // 4
    hop = band_size // F
    W = 2 * hop
    n_osc = C
    n_layers = len(weights["layers"])

    xT = jnp.transpose(x, (0, 2, 1))                                  # (B, C, T)
    # white noise viewed as (B, hop, F): nz[b, j, f] = noise[b, f*hop + j]
    nz = jnp.transpose(noise.reshape(B, F, hop), (0, 2, 1))

    operands = [xT, nz,
                weights["wnet"], weights["bnet"],
                weights["wa"], weights["ba"], weights["wf"], weights["bf"],
                consts["interp_t"], weights["wni"], weights["bni"]]
    for wl, bl in weights["layers"]:
        operands += [wl, bl]
    operands += [weights["wsp"], weights["bsp"], consts["dft_pt"], consts["idft_pt"]]

    def bcast_spec(a):
        zero = (0,) * a.ndim
        return pl.BlockSpec(tuple(int(d) for d in a.shape), lambda i: zero)

    in_specs = ([pl.BlockSpec((1, C, T), lambda i: (i, 0, 0)),
                 pl.BlockSpec((1, hop, F), lambda i: (i, 0, 0))]
                + [bcast_spec(a) for a in operands[2:]])

    kernel = _make_fused_kernel(n_layers, n_osc, S, F, hop, W)
    return pl.pallas_call(
        kernel,
        out_shape=jax.ShapeDtypeStruct((B, 1, S), jnp.float32),
        grid=(B,),
        in_specs=in_specs,
        out_specs=pl.BlockSpec((1, 1, S), lambda i: (i, 0, 0)),
        compiler_params=pltpu.CompilerParams(dimension_semantics=("parallel",)),
    )(*operands)


if __name__ == "__main__":
    band_size = 128   # smallest size consistent with NoiseModel(input_size=32, n_noise_frames=band_size//4)
    batch = 2
    key = jax.random.PRNGKey(0)
    k_param, k_x, k_noise = jax.random.split(key, 3)

    params = init_params(k_param, band_size)
    weights = prepare_weights(params)
    consts = build_consts(band_size, t_in=32)

    x = jax.random.normal(k_x, (batch, 32, NETWORK_CHANNELS), dtype=jnp.float32)
    noise = jax.random.uniform(k_noise, (batch, band_size),
                               minval=-1.0, maxval=1.0, dtype=jnp.float32)

    out = band_upsample_forward(x, noise, weights, consts, band_size)
    out = jax.block_until_ready(out)

    assert out.shape == (batch, 1, band_size), out.shape
    assert bool(jnp.all(jnp.isfinite(out)))
    print("KERNEL_OK")
</pallas_src>

<mosaic_0001>
module attributes {stable_mosaic.version = 11 : i64} {
  func.func @kernel(%arg0: i32, %arg1: memref<1x64x32xf32, #tpu.memory_space<vmem>>, %arg2: memref<1x4x32xf32, #tpu.memory_space<vmem>>, %arg3: memref<64x192xf32, #tpu.memory_space<vmem>>, %arg4: memref<64x1xf32, #tpu.memory_space<vmem>>, %arg5: memref<64x64xf32, #tpu.memory_space<vmem>>, %arg6: memref<64x1xf32, #tpu.memory_space<vmem>>, %arg7: memref<64x64xf32, #tpu.memory_space<vmem>>, %arg8: memref<64x1xf32, #tpu.memory_space<vmem>>, %arg9: memref<32x128xf32, #tpu.memory_space<vmem>>, %arg10: memref<64x64xf32, #tpu.memory_space<vmem>>, %arg11: memref<64x1xf32, #tpu.memory_space<vmem>>, %arg12: memref<5x64xf32, #tpu.memory_space<vmem>>, %arg13: memref<5x1xf32, #tpu.memory_space<vmem>>, %arg14: memref<10x8xf32, #tpu.memory_space<vmem>>, %arg15: memref<8x10xf32, #tpu.memory_space<vmem>>, %arg16: memref<1x1x128xf32, #tpu.memory_space<vmem>>) attributes {dimension_semantics = [#tpu.dimension_semantics<parallel>], iteration_bounds = array<i64: 2>, scalar_prefetch = 0 : i64, scratch_operands = 0 : i64, tpu.core_type = #tpu.core_type<tc>, window_params = [{transform_indices = @transform_0, window_bounds = array<i64: 1, 64, 32>}, {transform_indices = @transform_1, window_bounds = array<i64: 1, 4, 32>}, {pipeline_mode = #tpu.pipeline_mode<synchronous>, transform_indices = @transform_2, window_bounds = array<i64: 64, 192>}, {pipeline_mode = #tpu.pipeline_mode<synchronous>, transform_indices = @transform_3, window_bounds = array<i64: 64, 1>}, {pipeline_mode = #tpu.pipeline_mode<synchronous>, transform_indices = @transform_4, window_bounds = array<i64: 64, 64>}, {pipeline_mode = #tpu.pipeline_mode<synchronous>, transform_indices = @transform_5, window_bounds = array<i64: 64, 1>}, {pipeline_mode = #tpu.pipeline_mode<synchronous>, transform_indices = @transform_6, window_bounds = array<i64: 64, 64>}, {pipeline_mode = #tpu.pipeline_mode<synchronous>, transform_indices = @transform_7, window_bounds = array<i64: 64, 1>}, {pipeline_mode = #tpu.pipeline_mode<synchronous>, transform_indices = @transform_8, window_bounds = array<i64: 32, 128>}, {pipeline_mode = #tpu.pipeline_mode<synchronous>, transform_indices = @transform_9, window_bounds = array<i64: 64, 64>}, {pipeline_mode = #tpu.pipeline_mode<synchronous>, transform_indices = @transform_10, window_bounds = array<i64: 64, 1>}, {pipeline_mode = #tpu.pipeline_mode<synchronous>, transform_indices = @transform_11, window_bounds = array<i64: 5, 64>}, {pipeline_mode = #tpu.pipeline_mode<synchronous>, transform_indices = @transform_12, window_bounds = array<i64: 5, 1>}, {pipeline_mode = #tpu.pipeline_mode<synchronous>, transform_indices = @transform_13, window_bounds = array<i64: 10, 8>}, {pipeline_mode = #tpu.pipeline_mode<synchronous>, transform_indices = @transform_14, window_bounds = array<i64: 8, 10>}, {transform_indices = @transform_15, window_bounds = array<i64: 1, 1, 128>}]} {
    %c0 = arith.constant 0 : index
    %c0_0 = arith.constant 0 : index
    %c0_1 = arith.constant 0 : index
    %0 = vector.load %arg1[%c0, %c0_0, %c0_1] : memref<1x64x32xf32, #tpu.memory_space<vmem>>, vector<1x64x32xf32>
    %1 = vector.shape_cast %0 : vector<1x64x32xf32> to vector<64x32xf32>
    %c0_2 = arith.constant 0 : index
    %c0_3 = arith.constant 0 : index
    %2 = vector.load %arg3[%c0_2, %c0_3] : memref<64x192xf32, #tpu.memory_space<vmem>>, vector<64x192xf32>
    %c0_4 = arith.constant 0 : index
    %c0_5 = arith.constant 0 : index
    %3 = vector.load %arg4[%c0_4, %c0_5] : memref<64x1xf32, #tpu.memory_space<vmem>>, vector<64x1xf32>
    %4 = tpu.iota {dimensions = array<i32: 0>} : vector<32x32xi32>
    %5 = tpu.iota {dimensions = array<i32: 1>} : vector<32x32xi32>
    %c1_i32 = arith.constant 1 : i32
    %6 = vector.broadcast %c1_i32 : i32 to vector<32x32xi32>
    %7 = arith.addi %4, %6 : vector<32x32xi32>
    %8 = arith.cmpi eq, %7, %5 : vector<32x32xi32>
    %cst = arith.constant 1.000000e+00 : f32
    %cst_6 = arith.constant 0.000000e+00 : f32
    %9 = vector.broadcast %cst : f32 to vector<32x32xf32>
    %10 = vector.broadcast %cst_6 : f32 to vector<32x32xf32>
    %11 = arith.select %8, %9, %10 : vector<32x32xi1>, vector<32x32xf32>
    %cst_7 = arith.constant dense<0.000000e+00> : vector<64x32xf32>
    %12 = tpu.matmul %1, %11, %cst_7 {dimension_numbers = #tpu.dot_dimension_numbers<[1], [0], [0], [1], [0, 0, 1, 1], [], []>} : vector<64x32xf32>, vector<32x32xf32>, vector<64x32xf32> -> vector<64x32xf32>
    %13 = tpu.iota {dimensions = array<i32: 0>} : vector<32x32xi32>
    %14 = tpu.iota {dimensions = array<i32: 1>} : vector<32x32xi32>
    %c1_i32_8 = arith.constant 1 : i32
    %15 = vector.broadcast %c1_i32_8 : i32 to vector<32x32xi32>
    %16 = arith.addi %14, %15 : vector<32x32xi32>
    %17 = arith.cmpi eq, %13, %16 : vector<32x32xi32>
    %cst_9 = arith.constant 1.000000e+00 : f32
    %cst_10 = arith.constant 0.000000e+00 : f32
    %18 = vector.broadcast %cst_9 : f32 to vector<32x32xf32>
    %19 = vector.broadcast %cst_10 : f32 to vector<32x32xf32>
    %20 = arith.select %17, %18, %19 : vector<32x32xi1>, vector<32x32xf32>
    %cst_11 = arith.constant dense<0.000000e+00> : vector<64x32xf32>
    %21 = tpu.matmul %1, %20, %cst_11 {dimension_numbers = #tpu.dot_dimension_numbers<[1], [0], [0], [1], [0, 0, 1, 1], [], []>} : vector<64x32xf32>, vector<32x32xf32>, vector<64x32xf32> -> vector<64x32xf32>
    %22 = tpu.concatenate %12, %1, %21 in 0 : vector<64x32xf32>, vector<64x32xf32>, vector<64x32xf32> -> vector<192x32xf32>
    %cst_12 = arith.constant dense<0.000000e+00> : vector<64x32xf32>
    %23 = tpu.matmul %2, %22, %cst_12 {dimension_numbers = #tpu.dot_dimension_numbers<[1], [0], [0], [1], [0, 0, 1, 1], [], []>} : vector<64x192xf32>, vector<192x32xf32>, vector<64x32xf32> -> vector<64x32xf32>
    %24 = vector.broadcast %3 : vector<64x1xf32> to vector<64x32xf32>
    %25 = arith.addf %23, %24 : vector<64x32xf32>
    %cst_13 = arith.constant 0.000000e+00 : f32
    %26 = vector.broadcast %cst_13 : f32 to vector<64x32xf32>
    %27 = arith.cmpf ogt, %25, %26 : vector<64x32xf32>
    %cst_14 = arith.constant 2.000000e-01 : f32
    %28 = vector.broadcast %cst_14 : f32 to vector<64x32xf32>
    %29 = arith.mulf %28, %25 : vector<64x32xf32>
    %30 = arith.select %27, %25, %29 : vector<64x32xi1>, vector<64x32xf32>
    %c0_15 = arith.constant 0 : index
    %c0_16 = arith.constant 0 : index
    %31 = vector.load %arg5[%c0_15, %c0_16] : memref<64x64xf32, #tpu.memory_space<vmem>>, vector<64x64xf32>
    %cst_17 = arith.constant dense<0.000000e+00> : vector<64x32xf32>
    %32 = tpu.matmul %31, %30, %cst_17 {dimension_numbers = #tpu.dot_dimension_numbers<[1], [0], [0], [1], [0, 0, 1, 1], [], []>} : vector<64x64xf32>, vector<64x32xf32>, vector<64x32xf32> -> vector<64x32xf32>
    %c0_18 = arith.constant 0 : index
    %c0_19 = arith.constant 0 : index
    %33 = vector.load %arg6[%c0_18, %c0_19] : memref<64x1xf32, #tpu.memory_space<vmem>>, vector<64x1xf32>
    %34 = vector.broadcast %33 : vector<64x1xf32> to vector<64x32xf32>
    %35 = arith.addf %32, %34 : vector<64x32xf32>
    %c0_20 = arith.constant 0 : index
    %c0_21 = arith.constant 0 : index
    %36 = vector.load %arg7[%c0_20, %c0_21] : memref<64x64xf32, #tpu.memory_space<vmem>>, vector<64x64xf32>
    %cst_22 = arith.constant dense<0.000000e+00> : vector<64x32xf32>
    %37 = tpu.matmul %36, %30, %cst_22 {dimension_numbers = #tpu.dot_dimension_numbers<[1], [0], [0], [1], [0, 0, 1, 1], [], []>} : vector<64x64xf32>, vector<64x32xf32>, vector<64x32xf32> -> vector<64x32xf32>
    %c0_23 = arith.constant 0 : index
    %c0_24 = arith.constant 0 : index
    %38 = vector.load %arg8[%c0_23, %c0_24] : memref<64x1xf32, #tpu.memory_space<vmem>>, vector<64x1xf32>
    %39 = vector.broadcast %38 : vector<64x1xf32> to vector<64x32xf32>
    %40 = arith.addf %37, %39 : vector<64x32xf32>
    %cst_25 = arith.constant 5.000000e-01 : f32
    %41 = vector.broadcast %cst_25 : f32 to vector<64x32xf32>
    %42 = arith.mulf %41, %35 : vector<64x32xf32>
    %43 = math.tanh %42 : vector<64x32xf32>
    %cst_26 = arith.constant 1.000000e+00 : f32
    %44 = vector.broadcast %cst_26 : f32 to vector<64x32xf32>
    %45 = arith.addf %43, %44 : vector<64x32xf32>
    %cst_27 = arith.constant 5.000000e-01 : f32
    %46 = vector.broadcast %cst_27 : f32 to vector<64x32xf32>
    %47 = arith.mulf %46, %45 : vector<64x32xf32>
    %cst_28 = arith.constant 5.000000e-01 : f32
    %48 = vector.broadcast %cst_28 : f32 to vector<64x32xf32>
    %49 = arith.mulf %48, %40 : vector<64x32xf32>
    %50 = math.tanh %49 : vector<64x32xf32>
    %cst_29 = arith.constant 1.000000e+00 : f32
    %51 = vector.broadcast %cst_29 : f32 to vector<64x32xf32>
    %52 = arith.addf %50, %51 : vector<64x32xf32>
    %cst_30 = arith.constant 5.000000e-01 : f32
    %53 = vector.broadcast %cst_30 : f32 to vector<64x32xf32>
    %54 = arith.mulf %53, %52 : vector<64x32xf32>
    %cst_31 = arith.constant 9.900000e-01 : f32
    %55 = vector.broadcast %cst_31 : f32 to vector<64x32xf32>
    %56 = arith.mulf %54, %55 : vector<64x32xf32>
    %cst_32 = arith.constant 0.00999999977 : f32
    %57 = vector.broadcast %cst_32 : f32 to vector<64x32xf32>
    %58 = arith.addf %57, %56 : vector<64x32xf32>
    %c0_33 = arith.constant 0 : index
    %c0_34 = arith.constant 0 : index
    %59 = vector.load %arg9[%c0_33, %c0_34] : memref<32x128xf32, #tpu.memory_space<vmem>>, vector<32x128xf32>
    %cst_35 = arith.constant dense<0.000000e+00> : vector<64x128xf32>
    %60 = tpu.matmul %47, %59, %cst_35 {dimension_numbers = #tpu.dot_dimension_numbers<[1], [0], [0], [1], [0, 0, 1, 1], [], []>} : vector<64x32xf32>, vector<32x128xf32>, vector<64x128xf32> -> vector<64x128xf32>
    %c0_36 = arith.constant 0 : index
    %c0_37 = arith.constant 0 : index
    %61 = vector.load %arg9[%c0_36, %c0_37] : memref<32x128xf32, #tpu.memory_space<vmem>>, vector<32x128xf32>
    %cst_38 = arith.constant dense<0.000000e+00> : vector<64x128xf32>
    %62 = tpu.matmul %58, %61, %cst_38 {dimension_numbers = #tpu.dot_dimension_numbers<[1], [0], [0], [1], [0, 0, 1, 1], [], []>} : vector<64x32xf32>, vector<32x128xf32>, vector<64x128xf32> -> vector<64x128xf32>
    %63 = tpu.iota {dimensions = array<i32: 0>} : vector<128x128xi32>
    %64 = tpu.iota {dimensions = array<i32: 1>} : vector<128x128xi32>
    %65 = arith.cmpi sle, %63, %64 : vector<128x128xi32>
    %cst_39 = arith.constant 1.000000e+00 : f32
    %cst_40 = arith.constant 0.000000e+00 : f32
    %66 = vector.broadcast %cst_39 : f32 to vector<128x128xf32>
    %67 = vector.broadcast %cst_40 : f32 to vector<128x128xf32>
    %68 = arith.select %65, %66, %67 : vector<128x128xi1>, vector<128x128xf32>
    %cst_41 = arith.constant 3.14159274 : f32
    %69 = vector.broadcast %cst_41 : f32 to vector<64x128xf32>
    %70 = arith.mulf %62, %69 : vector<64x128xf32>
    %cst_42 = arith.constant dense<0.000000e+00> : vector<64x128xf32>
    %71 = tpu.matmul %70, %68, %cst_42 {dimension_numbers = #tpu.dot_dimension_numbers<[1], [0], [0], [1], [0, 0, 1, 1], [], []>} : vector<64x128xf32>, vector<128x128xf32>, vector<64x128xf32> -> vector<64x128xf32>
    %72 = math.sin %71 : vector<64x128xf32>
    %73 = arith.mulf %72, %60 : vector<64x128xf32>
    %cst_43 = arith.constant 1.000000e+00 : f32
    %74 = vector.broadcast %cst_43 : f32 to vector<1x64xf32>
    %cst_44 = arith.constant dense<0.000000e+00> : vector<1x128xf32>
    %75 = tpu.matmul %74, %73, %cst_44 {dimension_numbers = #tpu.dot_dimension_numbers<[1], [0], [0], [1], [0, 0, 1, 1], [], []>} : vector<1x64xf32>, vector<64x128xf32>, vector<1x128xf32> -> vector<1x128xf32>
    %c0_45 = arith.constant 0 : index
    %c0_46 = arith.constant 0 : index
    %76 = vector.load %arg10[%c0_45, %c0_46] : memref<64x64xf32, #tpu.memory_space<vmem>>, vector<64x64xf32>
    %cst_47 = arith.constant dense<0.000000e+00> : vector<64x32xf32>
    %77 = tpu.matmul %76, %30, %cst_47 {dimension_numbers = #tpu.dot_dimension_numbers<[1], [0], [0], [1], [0, 0, 1, 1], [], []>} : vector<64x64xf32>, vector<64x32xf32>, vector<64x32xf32> -> vector<64x32xf32>
    %c0_48 = arith.constant 0 : index
    %c0_49 = arith.constant 0 : index
    %78 = vector.load %arg11[%c0_48, %c0_49] : memref<64x1xf32, #tpu.memory_space<vmem>>, vector<64x1xf32>
    %79 = vector.broadcast %78 : vector<64x1xf32> to vector<64x32xf32>
    %80 = arith.addf %77, %79 : vector<64x32xf32>
    %c0_50 = arith.constant 0 : index
    %c0_51 = arith.constant 0 : index
    %81 = vector.load %arg12[%c0_50, %c0_51] : memref<5x64xf32, #tpu.memory_space<vmem>>, vector<5x64xf32>
    %cst_52 = arith.constant dense<0.000000e+00> : vector<5x32xf32>
    %82 = tpu.matmul %81, %80, %cst_52 {dimension_numbers = #tpu.dot_dimension_numbers<[1], [0], [0], [1], [0, 0, 1, 1], [], []>} : vector<5x64xf32>, vector<64x32xf32>, vector<5x32xf32> -> vector<5x32xf32>
    %c0_53 = arith.constant 0 : index
    %c0_54 = arith.constant 0 : index
    %83 = vector.load %arg13[%c0_53, %c0_54] : memref<5x1xf32, #tpu.memory_space<vmem>>, vector<5x1xf32>
    %84 = vector.broadcast %83 : vector<5x1xf32> to vector<5x32xf32>
    %85 = arith.addf %82, %84 : vector<5x32xf32>
    %86 = math.absf %85 : vector<5x32xf32>
    %c0_55 = arith.constant 0 : index
    %c0_56 = arith.constant 0 : index
    %c0_57 = arith.constant 0 : index
    %87 = vector.load %arg2[%c0_55, %c0_56, %c0_57] : memref<1x4x32xf32, #tpu.memory_space<vmem>>, vector<1x4x32xf32>
    %88 = vector.shape_cast %87 : vector<1x4x32xf32> to vector<4x32xf32>
    %89 = tpu.iota {dimensions = array<i32: 0>} : vector<32x32xi32>
    %90 = tpu.iota {dimensions = array<i32: 1>} : vector<32x32xi32>
    %c1_i32_58 = arith.constant 1 : i32
    %91 = vector.broadcast %c1_i32_58 : i32 to vector<32x32xi32>
    %92 = arith.addi %90, %91 : vector<32x32xi32>
    %93 = arith.cmpi eq, %89, %92 : vector<32x32xi32>
    %cst_59 = arith.constant 1.000000e+00 : f32
    %cst_60 = arith.constant 0.000000e+00 : f32
    %94 = vector.broadcast %cst_59 : f32 to vector<32x32xf32>
    %95 = vector.broadcast %cst_60 : f32 to vector<32x32xf32>
    %96 = arith.select %93, %94, %95 : vector<32x32xi1>, vector<32x32xf32>
    %cst_61 = arith.constant dense<0.000000e+00> : vector<4x32xf32>
    %97 = tpu.matmul %88, %96, %cst_61 {dimension_numbers = #tpu.dot_dimension_numbers<[1], [0], [0], [1], [0, 0, 1, 1], [], []>} : vector<4x32xf32>, vector<32x32xf32>, vector<4x32xf32> -> vector<4x32xf32>
    %98 = tpu.concatenate %88, %97 in 0 : vector<4x32xf32>, vector<4x32xf32> -> vector<8x32xf32>
    %c0_62 = arith.constant 0 : index
    %c0_63 = arith.constant 0 : index
    %99 = vector.load %arg14[%c0_62, %c0_63] : memref<10x8xf32, #tpu.memory_space<vmem>>, vector<10x8xf32>
    %cst_64 = arith.constant dense<0.000000e+00> : vector<10x32xf32>
    %100 = tpu.matmul %99, %98, %cst_64 {dimension_numbers = #tpu.dot_dimension_numbers<[1], [0], [0], [1], [0, 0, 1, 1], [], []>} : vector<10x8xf32>, vector<8x32xf32>, vector<10x32xf32> -> vector<10x32xf32>
    %101 = tpu.concatenate %86, %86 in 0 : vector<5x32xf32>, vector<5x32xf32> -> vector<10x32xf32>
    %102 = arith.mulf %100, %101 : vector<10x32xf32>
    %c0_65 = arith.constant 0 : index
    %c0_66 = arith.constant 0 : index
    %103 = vector.load %arg15[%c0_65, %c0_66] : memref<8x10xf32, #tpu.memory_space<vmem>>, vector<8x10xf32>
    %cst_67 = arith.constant dense<0.000000e+00> : vector<8x32xf32>
    %104 = tpu.matmul %103, %102, %cst_67 {dimension_numbers = #tpu.dot_dimension_numbers<[1], [0], [0], [1], [0, 0, 1, 1], [], []>} : vector<8x10xf32>, vector<10x32xf32>, vector<8x32xf32> -> vector<8x32xf32>
    %105 = tpu.iota {dimensions = array<i32: 0>} : vector<32x128xi32>
    %106 = tpu.iota {dimensions = array<i32: 1>} : vector<32x128xi32>
    %cst_68 = arith.constant 0.000000e+00 : f32
    %107 = vector.broadcast %cst_68 : f32 to vector<1x128xf32>
    %c4_i32 = arith.constant 4 : i32
    %108 = vector.broadcast %c4_i32 : i32 to vector<32x128xi32>
    %109 = arith.muli %105, %108 : vector<32x128xi32>
    %c0_i32 = arith.constant 0 : i32
    %110 = vector.broadcast %c0_i32 : i32 to vector<32x128xi32>
    %111 = arith.addi %109, %110 : vector<32x128xi32>
    %112 = arith.cmpi eq, %106, %111 : vector<32x128xi32>
    %cst_69 = arith.constant 1.000000e+00 : f32
    %cst_70 = arith.constant 0.000000e+00 : f32
    %113 = vector.broadcast %cst_69 : f32 to vector<32x128xf32>
    %114 = vector.broadcast %cst_70 : f32 to vector<32x128xf32>
    %115 = arith.select %112, %113, %114 : vector<32x128xi1>, vector<32x128xf32>
    %116 = vector.extract_strided_slice %104 {offsets = [0, 0], sizes = [1, 32], strides = [1, 1]} : vector<8x32xf32> to vector<1x32xf32>
    %cst_71 = arith.constant dense<0.000000e+00> : vector<1x128xf32>
    %117 = tpu.matmul %116, %115, %cst_71 {dimension_numbers = #tpu.dot_dimension_numbers<[1], [0], [0], [1], [0, 0, 1, 1], [], []>} : vector<1x32xf32>, vector<32x128xf32>, vector<1x128xf32> -> vector<1x128xf32>
    %118 = arith.addf %107, %117 : vector<1x128xf32>
    %c4_i32_72 = arith.constant 4 : i32
    %119 = vector.broadcast %c4_i32_72 : i32 to vector<32x128xi32>
    %120 = arith.muli %105, %119 : vector<32x128xi32>
    %c1_i32_73 = arith.constant 1 : i32
    %121 = vector.broadcast %c1_i32_73 : i32 to vector<32x128xi32>
    %122 = arith.addi %120, %121 : vector<32x128xi32>
    %123 = arith.cmpi eq, %106, %122 : vector<32x128xi32>
    %cst_74 = arith.constant 1.000000e+00 : f32
    %cst_75 = arith.constant 0.000000e+00 : f32
    %124 = vector.broadcast %cst_74 : f32 to vector<32x128xf32>
    %125 = vector.broadcast %cst_75 : f32 to vector<32x128xf32>
    %126 = arith.select %123, %124, %125 : vector<32x128xi1>, vector<32x128xf32>
    %127 = vector.extract_strided_slice %104 {offsets = [1, 0], sizes = [1, 32], strides = [1, 1]} : vector<8x32xf32> to vector<1x32xf32>
    %cst_76 = arith.constant dense<0.000000e+00> : vector<1x128xf32>
    %128 = tpu.matmul %127, %126, %cst_76 {dimension_numbers = #tpu.dot_dimension_numbers<[1], [0], [0], [1], [0, 0, 1, 1], [], []>} : vector<1x32xf32>, vector<32x128xf32>, vector<1x128xf32> -> vector<1x128xf32>
    %129 = arith.addf %118, %128 : vector<1x128xf32>
    %c4_i32_77 = arith.constant 4 : i32
    %130 = vector.broadcast %c4_i32_77 : i32 to vector<32x128xi32>
    %131 = arith.muli %105, %130 : vector<32x128xi32>
    %c2_i32 = arith.constant 2 : i32
    %132 = vector.broadcast %c2_i32 : i32 to vector<32x128xi32>
    %133 = arith.addi %131, %132 : vector<32x128xi32>
    %134 = arith.cmpi eq, %106, %133 : vector<32x128xi32>
    %cst_78 = arith.constant 1.000000e+00 : f32
    %cst_79 = arith.constant 0.000000e+00 : f32
    %135 = vector.broadcast %cst_78 : f32 to vector<32x128xf32>
    %136 = vector.broadcast %cst_79 : f32 to vector<32x128xf32>
    %137 = arith.select %134, %135, %136 : vector<32x128xi1>, vector<32x128xf32>
    %138 = vector.extract_strided_slice %104 {offsets = [2, 0], sizes = [1, 32], strides = [1, 1]} : vector<8x32xf32> to vector<1x32xf32>
    %cst_80 = arith.constant dense<0.000000e+00> : vector<1x128xf32>
    %139 = tpu.matmul %138, %137, %cst_80 {dimension_numbers = #tpu.dot_dimension_numbers<[1], [0], [0], [1], [0, 0, 1, 1], [], []>} : vector<1x32xf32>, vector<32x128xf32>, vector<1x128xf32> -> vector<1x128xf32>
    %140 = arith.addf %129, %139 : vector<1x128xf32>
    %c4_i32_81 = arith.constant 4 : i32
    %141 = vector.broadcast %c4_i32_81 : i32 to vector<32x128xi32>
    %142 = arith.muli %105, %141 : vector<32x128xi32>
    %c3_i32 = arith.constant 3 : i32
    %143 = vector.broadcast %c3_i32 : i32 to vector<32x128xi32>
    %144 = arith.addi %142, %143 : vector<32x128xi32>
    %145 = arith.cmpi eq, %106, %144 : vector<32x128xi32>
    %cst_82 = arith.constant 1.000000e+00 : f32
    %cst_83 = arith.constant 0.000000e+00 : f32
    %146 = vector.broadcast %cst_82 : f32 to vector<32x128xf32>
    %147 = vector.broadcast %cst_83 : f32 to vector<32x128xf32>
    %148 = arith.select %145, %146, %147 : vector<32x128xi1>, vector<32x128xf32>
    %149 = vector.extract_strided_slice %104 {offsets = [3, 0], sizes = [1, 32], strides = [1, 1]} : vector<8x32xf32> to vector<1x32xf32>
    %cst_84 = arith.constant dense<0.000000e+00> : vector<1x128xf32>
    %150 = tpu.matmul %149, %148, %cst_84 {dimension_numbers = #tpu.dot_dimension_numbers<[1], [0], [0], [1], [0, 0, 1, 1], [], []>} : vector<1x32xf32>, vector<32x128xf32>, vector<1x128xf32> -> vector<1x128xf32>
    %151 = arith.addf %140, %150 : vector<1x128xf32>
    %c4_i32_85 = arith.constant 4 : i32
    %152 = vector.broadcast %c4_i32_85 : i32 to vector<32x128xi32>
    %153 = arith.muli %105, %152 : vector<32x128xi32>
    %c4_i32_86 = arith.constant 4 : i32
    %154 = vector.broadcast %c4_i32_86 : i32 to vector<32x128xi32>
    %155 = arith.addi %153, %154 : vector<32x128xi32>
    %156 = arith.cmpi eq, %106, %155 : vector<32x128xi32>
    %cst_87 = arith.constant 1.000000e+00 : f32
    %cst_88 = arith.constant 0.000000e+00 : f32
    %157 = vector.broadcast %cst_87 : f32 to vector<32x128xf32>
    %158 = vector.broadcast %cst_88 : f32 to vector<32x128xf32>
    %159 = arith.select %156, %157, %158 : vector<32x128xi1>, vector<32x128xf32>
    %160 = vector.extract_strided_slice %104 {offsets = [4, 0], sizes = [1, 32], strides = [1, 1]} : vector<8x32xf32> to vector<1x32xf32>
    %cst_89 = arith.constant dense<0.000000e+00> : vector<1x128xf32>
    %161 = tpu.matmul %160, %159, %cst_89 {dimension_numbers = #tpu.dot_dimension_numbers<[1], [0], [0], [1], [0, 0, 1, 1], [], []>} : vector<1x32xf32>, vector<32x128xf32>, vector<1x128xf32> -> vector<1x128xf32>
    %162 = arith.addf %151, %161 : vector<1x128xf32>
    %c4_i32_90 = arith.constant 4 : i32
    %163 = vector.broadcast %c4_i32_90 : i32 to vector<32x128xi32>
    %164 = arith.muli %105, %163 : vector<32x128xi32>
    %c5_i32 = arith.constant 5 : i32
    %165 = vector.broadcast %c5_i32 : i32 to vector<32x128xi32>
    %166 = arith.addi %164, %165 : vector<32x128xi32>
    %167 = arith.cmpi eq, %106, %166 : vector<32x128xi32>
    %cst_91 = arith.constant 1.000000e+00 : f32
    %cst_92 = arith.constant 0.000000e+00 : f32
    %168 = vector.broadcast %cst_91 : f32 to vector<32x128xf32>
    %169 = vector.broadcast %cst_92 : f32 to vector<32x128xf32>
    %170 = arith.select %167, %168, %169 : vector<32x128xi1>, vector<32x128xf32>
    %171 = vector.extract_strided_slice %104 {offsets = [5, 0], sizes = [1, 32], strides = [1, 1]} : vector<8x32xf32> to vector<1x32xf32>
    %cst_93 = arith.constant dense<0.000000e+00> : vector<1x128xf32>
    %172 = tpu.matmul %171, %170, %cst_93 {dimension_numbers = #tpu.dot_dimension_numbers<[1], [0], [0], [1], [0, 0, 1, 1], [], []>} : vector<1x32xf32>, vector<32x128xf32>, vector<1x128xf32> -> vector<1x128xf32>
    %173 = arith.addf %162, %172 : vector<1x128xf32>
    %c4_i32_94 = arith.constant 4 : i32
    %174 = vector.broadcast %c4_i32_94 : i32 to vector<32x128xi32>
    %175 = arith.muli %105, %174 : vector<32x128xi32>
    %c6_i32 = arith.constant 6 : i32
    %176 = vector.broadcast %c6_i32 : i32 to vector<32x128xi32>
    %177 = arith.addi %175, %176 : vector<32x128xi32>
    %178 = arith.cmpi eq, %106, %177 : vector<32x128xi32>
    %cst_95 = arith.constant 1.000000e+00 : f32
    %cst_96 = arith.constant 0.000000e+00 : f32
    %179 = vector.broadcast %cst_95 : f32 to vector<32x128xf32>
    %180 = vector.broadcast %cst_96 : f32 to vector<32x128xf32>
    %181 = arith.select %178, %179, %180 : vector<32x128xi1>, vector<32x128xf32>
    %182 = vector.extract_strided_slice %104 {offsets = [6, 0], sizes = [1, 32], strides = [1, 1]} : vector<8x32xf32> to vector<1x32xf32>
    %cst_97 = arith.constant dense<0.000000e+00> : vector<1x128xf32>
    %183 = tpu.matmul %182, %181, %cst_97 {dimension_numbers = #tpu.dot_dimension_numbers<[1], [0], [0], [1], [0, 0, 1, 1], [], []>} : vector<1x32xf32>, vector<32x128xf32>, vector<1x128xf32> -> vector<1x128xf32>
    %184 = arith.addf %173, %183 : vector<1x128xf32>
    %c4_i32_98 = arith.constant 4 : i32
    %185 = vector.broadcast %c4_i32_98 : i32 to vector<32x128xi32>
    %186 = arith.muli %105, %185 : vector<32x128xi32>
    %c7_i32 = arith.constant 7 : i32
    %187 = vector.broadcast %c7_i32 : i32 to vector<32x128xi32>
    %188 = arith.addi %186, %187 : vector<32x128xi32>
    %189 = arith.cmpi eq, %106, %188 : vector<32x128xi32>
    %cst_99 = arith.constant 1.000000e+00 : f32
    %cst_100 = arith.constant 0.000000e+00 : f32
    %190 = vector.broadcast %cst_99 : f32 to vector<32x128xf32>
    %191 = vector.broadcast %cst_100 : f32 to vector<32x128xf32>
    %192 = arith.select %189, %190, %191 : vector<32x128xi1>, vector<32x128xf32>
    %193 = vector.extract_strided_slice %104 {offsets = [7, 0], sizes = [1, 32], strides = [1, 1]} : vector<8x32xf32> to vector<1x32xf32>
    %cst_101 = arith.constant dense<0.000000e+00> : vector<1x128xf32>
    %194 = tpu.matmul %193, %192, %cst_101 {dimension_numbers = #tpu.dot_dimension_numbers<[1], [0], [0], [1], [0, 0, 1, 1], [], []>} : vector<1x32xf32>, vector<32x128xf32>, vector<1x128xf32> -> vector<1x128xf32>
    %195 = arith.addf %184, %194 : vector<1x128xf32>
    %196 = arith.addf %75, %195 : vector<1x128xf32>
    %c0_102 = arith.constant 0 : index
    %c0_103 = arith.constant 0 : index
    %c0_104 = arith.constant 0 : index
    %197 = vector.load %arg16[%c0_102, %c0_103, %c0_104] : memref<1x1x128xf32, #tpu.memory_space<vmem>>, vector<1x1x128xf32>
    %198 = vector.shape_cast %197 : vector<1x1x128xf32> to vector<1x128xf32>
    %199 = vector.shape_cast %196 : vector<1x128xf32> to vector<1x1x128xf32>
    tpu.vector_store %arg16[%c0_102, %c0_103, %c0_104], %199 {strides = array<i32>} : memref<1x1x128xf32, #tpu.memory_space<vmem>>, vector<1x1x128xf32>,
    return
  }
  func.func @transform_0(%arg0: i32) -> (i32, i32, i32) {
    %c0_i32 = arith.constant 0 : i32
    %c0_i32_0 = arith.constant 0 : i32
    %c0_i32_1 = arith.constant 0 : i32
    return %arg0, %c0_i32, %c0_i32_0 : i32, i32, i32
  }
  func.func @transform_1(%arg0: i32) -> (i32, i32, i32) {
    %c0_i32 = arith.constant 0 : i32
    %c0_i32_0 = arith.constant 0 : i32
    %c0_i32_1 = arith.constant 0 : i32
    return %arg0, %c0_i32, %c0_i32_0 : i32, i32, i32
  }
  func.func @transform_2(%arg0: i32) -> (i32, i32) {
    %c0_i32 = arith.constant 0 : i32
    %c0_i32_0 = arith.constant 0 : i32
    %c0_i32_1 = arith.constant 0 : i32
    return %c0_i32, %c0_i32_0 : i32, i32
  }
  func.func @transform_3(%arg0: i32) -> (i32, i32) {
    %c0_i32 = arith.constant 0 : i32
    %c0_i32_0 = arith.constant 0 : i32
    %c0_i32_1 = arith.constant 0 : i32
    return %c0_i32, %c0_i32_0 : i32, i32
  }
  func.func @transform_4(%arg0: i32) -> (i32, i32) {
    %c0_i32 = arith.constant 0 : i32
    %c0_i32_0 = arith.constant 0 : i32
    %c0_i32_1 = arith.constant 0 : i32
    return %c0_i32, %c0_i32_0 : i32, i32
  }
  func.func @transform_5(%arg0: i32) -> (i32, i32) {
    %c0_i32 = arith.constant 0 : i32
    %c0_i32_0 = arith.constant 0 : i32
    %c0_i32_1 = arith.constant 0 : i32
    return %c0_i32, %c0_i32_0 : i32, i32
  }
  func.func @transform_6(%arg0: i32) -> (i32, i32) {
    %c0_i32 = arith.constant 0 : i32
    %c0_i32_0 = arith.constant 0 : i32
    %c0_i32_1 = arith.constant 0 : i32
    return %c0_i32, %c0_i32_0 : i32, i32
  }
  func.func @transform_7(%arg0: i32) -> (i32, i32) {
    %c0_i32 = arith.constant 0 : i32
    %c0_i32_0 = arith.constant 0 : i32
    %c0_i32_1 = arith.constant 0 : i32
    return %c0_i32, %c0_i32_0 : i32, i32
  }
  func.func @transform_8(%arg0: i32) -> (i32, i32) {
    %c0_i32 = arith.constant 0 : i32
    %c0_i32_0 = arith.constant 0 : i32
    %c0_i32_1 = arith.constant 0 : i32
    return %c0_i32, %c0_i32_0 : i32, i32
  }
  func.func @transform_9(%arg0: i32) -> (i32, i32) {
    %c0_i32 = arith.constant 0 : i32
    %c0_i32_0 = arith.constant 0 : i32
    %c0_i32_1 = arith.constant 0 : i32
    return %c0_i32, %c0_i32_0 : i32, i32
  }
  func.func @transform_10(%arg0: i32) -> (i32, i32) {
    %c0_i32 = arith.constant 0 : i32
    %c0_i32_0 = arith.constant 0 : i32
    %c0_i32_1 = arith.constant 0 : i32
    return %c0_i32, %c0_i32_0 : i32, i32
  }
  func.func @transform_11(%arg0: i32) -> (i32, i32) {
    %c0_i32 = arith.constant 0 : i32
    %c0_i32_0 = arith.constant 0 : i32
    %c0_i32_1 = arith.constant 0 : i32
    return %c0_i32, %c0_i32_0 : i32, i32
  }
  func.func @transform_12(%arg0: i32) -> (i32, i32) {
    %c0_i32 = arith.constant 0 : i32
    %c0_i32_0 = arith.constant 0 : i32
    %c0_i32_1 = arith.constant 0 : i32
    return %c0_i32, %c0_i32_0 : i32, i32
  }
  func.func @transform_13(%arg0: i32) -> (i32, i32) {
    %c0_i32 = arith.constant 0 : i32
    %c0_i32_0 = arith.constant 0 : i32
    %c0_i32_1 = arith.constant 0 : i32
    return %c0_i32, %c0_i32_0 : i32, i32
  }
  func.func @transform_14(%arg0: i32) -> (i32, i32) {
    %c0_i32 = arith.constant 0 : i32
    %c0_i32_0 = arith.constant 0 : i32
    %c0_i32_1 = arith.constant 0 : i32
    return %c0_i32, %c0_i32_0 : i32, i32
  }
  func.func @transform_15(%arg0: i32) -> (i32, i32, i32) {
    %c0_i32 = arith.constant 0 : i32
    %c0_i32_0 = arith.constant 0 : i32
    %c0_i32_1 = arith.constant 0 : i32
    return %arg0, %c0_i32, %c0_i32_0 : i32, i32, i32
  }
}

</mosaic_0001>

<llo_original>
// kernel: tpu_custom_call.1
$region0: #{tpu_custom_call.1}
  #allocation0 [shape = 'u32[]', space=smem, size = 0x4, offset = 0x4, fixed_abs, tag = 'smem constant byte address 0x4 - core index']
  #allocation1 [shape = 'u32[72,128]{1,0:T(1,128)}', space=vmem, size = 0x9000, scoped, tag = 'internal scratch']
  %s0 = inlined_call_operand.vmem [shape: f32[2,64,32], index: 0, kind: input, shape index: {}]
  %s1 = inlined_call_operand.vmem [shape: f32[2,4,32], index: 1, kind: input, shape index: {}]
  %s2 = inlined_call_operand.vmem [shape: f32[64,192], index: 2, kind: input, shape index: {}]
  %s3 = inlined_call_operand.vmem [shape: f32[64,1], index: 3, kind: input, shape index: {}]
  %s4 = inlined_call_operand.vmem [shape: f32[64,64], index: 4, kind: input, shape index: {}]
  %s5 = inlined_call_operand.vmem [shape: f32[64,1], index: 5, kind: input, shape index: {}]
  %s6 = inlined_call_operand.vmem [shape: f32[64,64], index: 6, kind: input, shape index: {}]
  %s7 = inlined_call_operand.vmem [shape: f32[64,1], index: 7, kind: input, shape index: {}]
  %s8 = inlined_call_operand.vmem [shape: f32[32,128], index: 8, kind: input, shape index: {}]
  %s9 = inlined_call_operand.vmem [shape: f32[64,64], index: 9, kind: input, shape index: {}]
  %s10 = inlined_call_operand.vmem [shape: f32[64,1], index: 10, kind: input, shape index: {}]
  %s11 = inlined_call_operand.vmem [shape: f32[5,64], index: 11, kind: input, shape index: {}]
  %s12 = inlined_call_operand.vmem [shape: f32[5,1], index: 12, kind: input, shape index: {}]
  %s13 = inlined_call_operand.vmem [shape: f32[10,8], index: 13, kind: input, shape index: {}]
  %s14 = inlined_call_operand.vmem [shape: f32[8,10], index: 14, kind: input, shape index: {}]
  %s15 = inlined_call_operand.hbm [shape: f32[2,1,128], index: 15, kind: output, shape index: {}]
  %s16 = sld [smem:[#allocation0]]
  $region93: #{tpu_custom_call.1} parent=0
    _
  %s18 = ssub.s32 1, %s16
  %s19 = scalar_select 0, %s18, %s16
  $region1: #{tpu_custom_call.1} parent=0
    #allocation2 [shape = 'u8[1024]{0}', space=vmem, size = 0x400, scoped, tag = 'output window, operand 0']
    #allocation3 [shape = 's32[2]{0}', space=sflag, size = 0x8, scoped, tag = 'scoped memory for tpu_custom_call.1']
    %20 = vsyncpa [#allocation3], 0
    %s21 = scalar_lea.sflag [#allocation3], 1
    %22 = vsyncpa %s21, 0
    loop: start=0, step=1, limit=4
    $region2: #{tpu_custom_call.1} parent=1 // loop_pre_header
      _
    $region3: #{tpu_custom_call.1} parent=1 // loop_header
      %s24 = sphi 0, %s28
      %p25 = scmp.ge.s32.totalorder %s24, 4
      %s34 = sphi 0, %s36
      %s37 = sphi 0, %s34
      %s38 = sphi 0, %s37
      %s54 = sphi 0, %s38
      %s60 = sphi 0, %s62
      %s63 = sphi 0, %s60
      %s64 = sphi 0, %s63
      %s80 = sphi 0, %s64
      %s84 = sphi 0, %s84
      %s86 = sphi 0, %s84
      %s87 = sphi 0, %s86
      %s101 = sphi 0, %s87
      %s105 = sphi 0, %s105
      %s107 = sphi 0, %s105
      %s108 = sphi 0, %s107
      %s122 = sphi 0, %s108
      %s126 = sphi 0, %s126
      %s128 = sphi 0, %s126
      %s129 = sphi 0, %s128
      %s143 = sphi 0, %s129
      %s147 = sphi 0, %s147
      %s149 = sphi 0, %s147
      %s150 = sphi 0, %s149
      %s164 = sphi 0, %s150
      %s168 = sphi 0, %s168
      %s170 = sphi 0, %s168
      %s171 = sphi 0, %s170
      %s185 = sphi 0, %s171
      %s189 = sphi 0, %s189
      %s191 = sphi 0, %s189
      %s192 = sphi 0, %s191
      %s206 = sphi 0, %s192
      %s210 = sphi 0, %s210
      %s212 = sphi 0, %s210
      %s213 = sphi 0, %s212
      %s227 = sphi 0, %s213
      %s231 = sphi 0, %s231
      %s233 = sphi 0, %s231
      %s234 = sphi 0, %s233
      %s248 = sphi 0, %s234
      %s252 = sphi 0, %s252
      %s254 = sphi 0, %s252
      %s255 = sphi 0, %s254
      %s269 = sphi 0, %s255
      %s273 = sphi 0, %s273
      %s275 = sphi 0, %s273
      %s276 = sphi 0, %s275
      %s290 = sphi 0, %s276
      %s294 = sphi 0, %s294
      %s296 = sphi 0, %s294
      %s297 = sphi 0, %s296
      %s311 = sphi 0, %s297
      %s315 = sphi 0, %s315
      %s317 = sphi 0, %s315
      %s318 = sphi 0, %s317
      %s332 = sphi 0, %s318
      %s336 = sphi 0, %s336
      %s338 = sphi 0, %s336
      %s339 = sphi 0, %s338
      %s353 = sphi 0, %s339
      %s359 = sphi 0, %s361
      %s362 = sphi 0, %s359
      %s363 = sphi 0, %s362
      %s379 = sphi 0, %s363
    $region4: #{tpu_custom_call.1} parent=1 // loop_header_branch
      %27 = sbr.rel (%p25) target = $region8
    $region5: #{tpu_custom_call.1} parent=1 // loop_body
      %s29 = ssub.s32 %s24, 1
      %s30 = ssub.s32 %s24, 2
      %s31 = sadd.s32 %s24, 1
      %s32 = ssub.s32 %s24, %s31
      %p33 = scmp.eq.s32.totalorder %s32, 0
      %s35 = sadd.s32 %s34, 1
      %s36 = scalar_select %p33, %s34, %s35
      %p39 = pneg %p33
      %p40 = scmp.eq.s32.totalorder %s24, 1
      %p41 = por %p39, %p40
      %p42 = scmp.ne.s32.totalorder %s34, %s37
      %p43 = scmp.eq.s32.totalorder %s24, 0
      %p44 = por %p42, %p43
      %p45 = scmp.ne.s32.totalorder %s34, %s37
      %p46 = scmp.eq.s32.totalorder %s29, 1
      %p47 = por %p45, %p46
      %p48 = scmp.ne.s32.totalorder %s37, %s38
      %p49 = scmp.eq.s32.totalorder %s29, 0
      %p50 = por %p48, %p49
      %p51 = scmp.ne.s32.totalorder %s37, %s38
      %p52 = scmp.eq.s32.totalorder %s30, 1
      %p53 = por %p51, %p52
      %p55 = scmp.ne.s32.totalorder %s38, %s54
      %p56 = scmp.eq.s32.totalorder %s30, 0
      %p57 = por %p55, %p56
      %s58 = ssub.s32 %s24, %s31
      %p59 = scmp.eq.s32.totalorder %s58, 0
      %s61 = sadd.s32 %s60, 1
      %s62 = scalar_select %p59, %s60, %s61
      %p65 = pneg %p59
      %p66 = scmp.eq.s32.totalorder %s24, 1
      %p67 = por %p65, %p66
      %p68 = scmp.ne.s32.totalorder %s60, %s63
      %p69 = scmp.eq.s32.totalorder %s24, 0
      %p70 = por %p68, %p69
      %p71 = scmp.ne.s32.totalorder %s60, %s63
      %p72 = scmp.eq.s32.totalorder %s29, 1
      %p73 = por %p71, %p72
      %p74 = scmp.ne.s32.totalorder %s63, %s64
      %p75 = scmp.eq.s32.totalorder %s29, 0
      %p76 = por %p74, %p75
      %p77 = scmp.ne.s32.totalorder %s63, %s64
      %p78 = scmp.eq.s32.totalorder %s30, 1
      %p79 = por %p77, %p78
      %p81 = scmp.ne.s32.totalorder %s64, %s80
      %p82 = scmp.eq.s32.totalorder %s30, 0
      %p83 = por %p81, %p82
      %s85 = sadd.s32 %s84, 1
      %p88 = scmp.eq.s32.totalorder %s24, 1
      %p89 = scmp.ne.s32.totalorder %s84, %s86
      %p90 = scmp.eq.s32.totalorder %s24, 0
      %p91 = por %p89, %p90
      %p92 = scmp.ne.s32.totalorder %s84, %s86
      %p93 = scmp.eq.s32.totalorder %s29, 1
      %p94 = por %p92, %p93
      %p95 = scmp.ne.s32.totalorder %s86, %s87
      %p96 = scmp.eq.s32.totalorder %s29, 0
      %p97 = por %p95, %p96
      %p98 = scmp.ne.s32.totalorder %s86, %s87
      %p99 = scmp.eq.s32.totalorder %s30, 1
      %p100 = por %p98, %p99
      %p102 = scmp.ne.s32.totalorder %s87, %s101
      %p103 = scmp.eq.s32.totalorder %s30, 0
      %p104 = por %p102, %p103
      %s106 = sadd.s32 %s105, 1
      %p109 = scmp.eq.s32.totalorder %s24, 1
      %p110 = scmp.ne.s32.totalorder %s105, %s107
      %p111 = scmp.eq.s32.totalorder %s24, 0
      %p112 = por %p110, %p111
      %p113 = scmp.ne.s32.totalorder %s105, %s107
      %p114 = scmp.eq.s32.totalorder %s29, 1
      %p115 = por %p113, %p114
      %p116 = scmp.ne.s32.totalorder %s107, %s108
      %p117 = scmp.eq.s32.totalorder %s29, 0
      %p118 = por %p116, %p117
      %p119 = scmp.ne.s32.totalorder %s107, %s108
      %p120 = scmp.eq.s32.totalorder %s30, 1
      %p121 = por %p119, %p120
      %p123 = scmp.ne.s32.totalorder %s108, %s122
      %p124 = scmp.eq.s32.totalorder %s30, 0
      %p125 = por %p123, %p124
      %s127 = sadd.s32 %s126, 1
      %p130 = scmp.eq.s32.totalorder %s24, 1
      %p131 = scmp.ne.s32.totalorder %s126, %s128
      %p132 = scmp.eq.s32.totalorder %s24, 0
      %p133 = por %p131, %p132
      %p134 = scmp.ne.s32.totalorder %s126, %s128
      %p135 = scmp.eq.s32.totalorder %s29, 1
      %p136 = por %p134, %p135
      %p137 = scmp.ne.s32.totalorder %s128, %s129
      %p138 = scmp.eq.s32.totalorder %s29, 0
      %p139 = por %p137, %p138
      %p140 = scmp.ne.s32.totalorder %s128, %s129
      %p141 = scmp.eq.s32.totalorder %s30, 1
      %p142 = por %p140, %p141
      %p144 = scmp.ne.s32.totalorder %s129, %s143
      %p145 = scmp.eq.s32.totalorder %s30, 0
      %p146 = por %p144, %p145
      %s148 = sadd.s32 %s147, 1
      %p151 = scmp.eq.s32.totalorder %s24, 1
      %p152 = scmp.ne.s32.totalorder %s147, %s149
      %p153 = scmp.eq.s32.totalorder %s24, 0
      %p154 = por %p152, %p153
      %p155 = scmp.ne.s32.totalorder %s147, %s149
      %p156 = scmp.eq.s32.totalorder %s29, 1
      %p157 = por %p155, %p156
      %p158 = scmp.ne.s32.totalorder %s149, %s150
      %p159 = scmp.eq.s32.totalorder %s29, 0
      %p160 = por %p158, %p159
      %p161 = scmp.ne.s32.totalorder %s149, %s150
      %p162 = scmp.eq.s32.totalorder %s30, 1
      %p163 = por %p161, %p162
      %p165 = scmp.ne.s32.totalorder %s150, %s164
      %p166 = scmp.eq.s32.totalorder %s30, 0
      %p167 = por %p165, %p166
      %s169 = sadd.s32 %s168, 1
      %p172 = scmp.eq.s32.totalorder %s24, 1
      %p173 = scmp.ne.s32.totalorder %s168, %s170
      %p174 = scmp.eq.s32.totalorder %s24, 0
      %p175 = por %p173, %p174
      %p176 = scmp.ne.s32.totalorder %s168, %s170
      %p177 = scmp.eq.s32.totalorder %s29, 1
      %p178 = por %p176, %p177
      %p179 = scmp.ne.s32.totalorder %s170, %s171
      %p180 = scmp.eq.s32.totalorder %s29, 0
      %p181 = por %p179, %p180
      %p182 = scmp.ne.s32.totalorder %s170, %s171
      %p183 = scmp.eq.s32.totalorder %s30, 1
      %p184 = por %p182, %p183
      %p186 = scmp.ne.s32.totalorder %s171, %s185
      %p187 = scmp.eq.s32.totalorder %s30, 0
      %p188 = por %p186, %p187
      %s190 = sadd.s32 %s189, 1
      %p193 = scmp.eq.s32.totalorder %s24, 1
      %p194 = scmp.ne.s32.totalorder %s189, %s191
      %p195 = scmp.eq.s32.totalorder %s24, 0
      %p196 = por %p194, %p195
      %p197 = scmp.ne.s32.totalorder %s189, %s191
      %p198 = scmp.eq.s32.totalorder %s29, 1
      %p199 = por %p197, %p198
      %p200 = scmp.ne.s32.totalorder %s191, %s192
      %p201 = scmp.eq.s32.totalorder %s29, 0
      %p202 = por %p200, %p201
      %p203 = scmp.ne.s32.totalorder %s191, %s192
      %p204 = scmp.eq.s32.totalorder %s30, 1
      %p205 = por %p203, %p204
      %p207 = scmp.ne.s32.totalorder %s192, %s206
      %p208 = scmp.eq.s32.totalorder %s30, 0
      %p209 = por %p207, %p208
      %s211 = sadd.s32 %s210, 1
      %p214 = scmp.eq.s32.totalorder %s24, 1
      %p215 = scmp.ne.s32.totalorder %s210, %s212
      %p216 = scmp.eq.s32.totalorder %s24, 0
      %p217 = por %p215, %p216
      %p218 = scmp.ne.s32.totalorder %s210, %s212
      %p219 = scmp.eq.s32.totalorder %s29, 1
      %p220 = por %p218, %p219
      %p221 = scmp.ne.s32.totalorder %s212, %s213
      %p222 = scmp.eq.s32.totalorder %s29, 0
      %p223 = por %p221, %p222
      %p224 = scmp.ne.s32.totalorder %s212, %s213
      %p225 = scmp.eq.s32.totalorder %s30, 1
      %p226 = por %p224, %p225
      %p228 = scmp.ne.s32.totalorder %s213, %s227
      %p229 = scmp.eq.s32.totalorder %s30, 0
      %p230 = por %p228, %p229
      %s232 = sadd.s32 %s231, 1
      %p235 = scmp.eq.s32.totalorder %s24, 1
      %p236 = scmp.ne.s32.totalorder %s231, %s233
      %p237 = scmp.eq.s32.totalorder %s24, 0
      %p238 = por %p236, %p237
      %p239 = scmp.ne.s32.totalorder %s231, %s233
      %p240 = scmp.eq.s32.totalorder %s29, 1
      %p241 = por %p239, %p240
      %p242 = scmp.ne.s32.totalorder %s233, %s234
      %p243 = scmp.eq.s32.totalorder %s29, 0
      %p244 = por %p242, %p243
      %p245 = scmp.ne.s32.totalorder %s233, %s234
      %p246 = scmp.eq.s32.totalorder %s30, 1
      %p247 = por %p245, %p246
      %p249 = scmp.ne.s32.totalorder %s234, %s248
      %p250 = scmp.eq.s32.totalorder %s30, 0
      %p251 = por %p249, %p250
      %s253 = sadd.s32 %s252, 1
      %p256 = scmp.eq.s32.totalorder %s24, 1
      %p257 = scmp.ne.s32.totalorder %s252, %s254
      %p258 = scmp.eq.s32.totalorder %s24, 0
      %p259 = por %p257, %p258
      %p260 = scmp.ne.s32.totalorder %s252, %s254
      %p261 = scmp.eq.s32.totalorder %s29, 1
      %p262 = por %p260, %p261
      %p263 = scmp.ne.s32.totalorder %s254, %s255
      %p264 = scmp.eq.s32.totalorder %s29, 0
      %p265 = por %p263, %p264
      %p266 = scmp.ne.s32.totalorder %s254, %s255
      %p267 = scmp.eq.s32.totalorder %s30, 1
      %p268 = por %p266, %p267
      %p270 = scmp.ne.s32.totalorder %s255, %s269
      %p271 = scmp.eq.s32.totalorder %s30, 0
      %p272 = por %p270, %p271
      %s274 = sadd.s32 %s273, 1
      %p277 = scmp.eq.s32.totalorder %s24, 1
      %p278 = scmp.ne.s32.totalorder %s273, %s275
      %p279 = scmp.eq.s32.totalorder %s24, 0
      %p280 = por %p278, %p279
      %p281 = scmp.ne.s32.totalorder %s273, %s275
      %p282 = scmp.eq.s32.totalorder %s29, 1
      %p283 = por %p281, %p282
      %p284 = scmp.ne.s32.totalorder %s275, %s276
      %p285 = scmp.eq.s32.totalorder %s29, 0
      %p286 = por %p284, %p285
      %p287 = scmp.ne.s32.totalorder %s275, %s276
      %p288 = scmp.eq.s32.totalorder %s30, 1
      %p289 = por %p287, %p288
      %p291 = scmp.ne.s32.totalorder %s276, %s290
      %p292 = scmp.eq.s32.totalorder %s30, 0
      %p293 = por %p291, %p292
      %s295 = sadd.s32 %s294, 1
      %p298 = scmp.eq.s32.totalorder %s24, 1
      %p299 = scmp.ne.s32.totalorder %s294, %s296
      %p300 = scmp.eq.s32.totalorder %s24, 0
      %p301 = por %p299, %p300
      %p302 = scmp.ne.s32.totalorder %s294, %s296
      %p303 = scmp.eq.s32.totalorder %s29, 1
      %p304 = por %p302, %p303
      %p305 = scmp.ne.s32.totalorder %s296, %s297
      %p306 = scmp.eq.s32.totalorder %s29, 0
      %p307 = por %p305, %p306
      %p308 = scmp.ne.s32.totalorder %s296, %s297
      %p309 = scmp.eq.s32.totalorder %s30, 1
      %p310 = por %p308, %p309
      %p312 = scmp.ne.s32.totalorder %s297, %s311
      %p313 = scmp.eq.s32.totalorder %s30, 0
      %p314 = por %p312, %p313
      %s316 = sadd.s32 %s315, 1
      %p319 = scmp.eq.s32.totalorder %s24, 1
      %p320 = scmp.ne.s32.totalorder %s315, %s317
      %p321 = scmp.eq.s32.totalorder %s24, 0
      %p322 = por %p320, %p321
      %p323 = scmp.ne.s32.totalorder %s315, %s317
      %p324 = scmp.eq.s32.totalorder %s29, 1
      %p325 = por %p323, %p324
      %p326 = scmp.ne.s32.totalorder %s317, %s318
      %p327 = scmp.eq.s32.totalorder %s29, 0
      %p328 = por %p326, %p327
      %p329 = scmp.ne.s32.totalorder %s317, %s318
      %p330 = scmp.eq.s32.totalorder %s30, 1
      %p331 = por %p329, %p330
      %p333 = scmp.ne.s32.totalorder %s318, %s332
      %p334 = scmp.eq.s32.totalorder %s30, 0
      %p335 = por %p333, %p334
      %s337 = sadd.s32 %s336, 1
      %p340 = scmp.eq.s32.totalorder %s24, 1
      %p341 = scmp.ne.s32.totalorder %s336, %s338
      %p342 = scmp.eq.s32.totalorder %s24, 0
      %p343 = por %p341, %p342
      %p344 = scmp.ne.s32.totalorder %s336, %s338
      %p345 = scmp.eq.s32.totalorder %s29, 1
      %p346 = por %p344, %p345
      %p347 = scmp.ne.s32.totalorder %s338, %s339
      %p348 = scmp.eq.s32.totalorder %s29, 0
      %p349 = por %p347, %p348
      %p350 = scmp.ne.s32.totalorder %s338, %s339
      %p351 = scmp.eq.s32.totalorder %s30, 1
      %p352 = por %p350, %p351
      %p354 = scmp.ne.s32.totalorder %s339, %s353
      %p355 = scmp.eq.s32.totalorder %s30, 0
      %p356 = por %p354, %p355
      %s357 = ssub.s32 %s24, %s31
      %p358 = scmp.eq.s32.totalorder %s357, 0
      %s360 = sadd.s32 %s359, 1
      %s361 = scalar_select %p358, %s359, %s360
      %p364 = pneg %p358
      %p365 = scmp.eq.s32.totalorder %s24, 1
      %p366 = por %p364, %p365
      %p367 = scmp.ne.s32.totalorder %s359, %s362
      %p368 = scmp.eq.s32.totalorder %s24, 0
      %p369 = por %p367, %p368
      %p370 = scmp.ne.s32.totalorder %s359, %s362
      %p371 = scmp.eq.s32.totalorder %s29, 1
      %p372 = por %p370, %p371
      %p373 = scmp.ne.s32.totalorder %s362, %s363
      %p374 = scmp.eq.s32.totalorder %s29, 0
      %p375 = por %p373, %p374
      %p376 = scmp.ne.s32.totalorder %s362, %s363
      %p377 = scmp.eq.s32.totalorder %s30, 1
      %p378 = por %p376, %p377
      %p380 = scmp.ne.s32.totalorder %s363, %s379
      %p381 = scmp.eq.s32.totalorder %s30, 0
      %p382 = por %p380, %p381
      %p383 = scmp.le.s32.totalorder 1, %s24
      %p384 = scmp.lt.s32.totalorder %s24, 3
      %p385 = pnand %p383, %p384
      %p386 = pneg %p385
      // Predicated region
      $region9: #{tpu_custom_call.1} parent=5 // pred_check
        _
      $region10: #{tpu_custom_call.1} parent=5 // pred_check_branch
        %388 = sbr.rel (%p385) target = $region12
      $region11: #{tpu_custom_call.1} parent=5 // pred_region
        %s389 = ssub.s32 %s24, 1
        // Predicated region
        $region13: #{tpu_custom_call.1} parent=11 // pred_check
          %p390 = pneg %p97
        $region14: #{tpu_custom_call.1} parent=11 // pred_check_branch
          %392 = sbr.rel (%p390) target = $region16
        $region15: #{tpu_custom_call.1} parent=11 // pred_region
          _
        $region16: #{tpu_custom_call.1} parent=11 // pred_fallthru
          _
        // Predicated region
        $region17: #{tpu_custom_call.1} parent=11 // pred_check
          %p393 = pneg %p118
        $region18: #{tpu_custom_call.1} parent=11 // pred_check_branch
          %395 = sbr.rel (%p393) target = $region20
        $region19: #{tpu_custom_call.1} parent=11 // pred_region
          _
        $region20: #{tpu_custom_call.1} parent=11 // pred_fallthru
          _
        // Predicated region
        $region21: #{tpu_custom_call.1} parent=11 // pred_check
          %p396 = pneg %p139
        $region22: #{tpu_custom_call.1} parent=11 // pred_check_branch
          %398 = sbr.rel (%p396) target = $region24
        $region23: #{tpu_custom_call.1} parent=11 // pred_region
          _
        $region24: #{tpu_custom_call.1} parent=11 // pred_fallthru
          _
        // Predicated region
        $region25: #{tpu_custom_call.1} parent=11 // pred_check
          %p399 = pneg %p160
        $region26: #{tpu_custom_call.1} parent=11 // pred_check_branch
          %401 = sbr.rel (%p399) target = $region28
        $region27: #{tpu_custom_call.1} parent=11 // pred_region
          _
        $region28: #{tpu_custom_call.1} parent=11 // pred_fallthru
          _
        // Predicated region
        $region29: #{tpu_custom_call.1} parent=11 // pred_check
          %p402 = pneg %p181
        $region30: #{tpu_custom_call.1} parent=11 // pred_check_branch
          %404 = sbr.rel (%p402) target = $region32
        $region31: #{tpu_custom_call.1} parent=11 // pred_region
          _
        $region32: #{tpu_custom_call.1} parent=11 // pred_fallthru
          _
        // Predicated region
        $region33: #{tpu_custom_call.1} parent=11 // pred_check
          %p405 = pneg %p202
        $region34: #{tpu_custom_call.1} parent=11 // pred_check_branch
          %407 = sbr.rel (%p405) target = $region36
        $region35: #{tpu_custom_call.1} parent=11 // pred_region
          _
        $region36: #{tpu_custom_call.1} parent=11 // pred_fallthru
          _
        // Predicated region
        $region37: #{tpu_custom_call.1} parent=11 // pred_check
          %p408 = pneg %p223
        $region38: #{tpu_custom_call.1} parent=11 // pred_check_branch
          %410 = sbr.rel (%p408) target = $region40
        $region39: #{tpu_custom_call.1} parent=11 // pred_region
          _
        $region40: #{tpu_custom_call.1} parent=11 // pred_fallthru
          _
        // Predicated region
        $region41: #{tpu_custom_call.1} parent=11 // pred_check
          %p411 = pneg %p244
        $region42: #{tpu_custom_call.1} parent=11 // pred_check_branch
          %413 = sbr.rel (%p411) target = $region44
        $region43: #{tpu_custom_call.1} parent=11 // pred_region
          _
        $region44: #{tpu_custom_call.1} parent=11 // pred_fallthru
          _
        // Predicated region
        $region45: #{tpu_custom_call.1} parent=11 // pred_check
          %p414 = pneg %p265
        $region46: #{tpu_custom_call.1} parent=11 // pred_check_branch
          %416 = sbr.rel (%p414) target = $region48
        $region47: #{tpu_custom_call.1} parent=11 // pred_region
          _
        $region48: #{tpu_custom_call.1} parent=11 // pred_fallthru
          _
        // Predicated region
        $region49: #{tpu_custom_call.1} parent=11 // pred_check
          %p417 = pneg %p286
        $region50: #{tpu_custom_call.1} parent=11 // pred_check_branch
          %419 = sbr.rel (%p417) target = $region52
        $region51: #{tpu_custom_call.1} parent=11 // pred_region
          _
        $region52: #{tpu_custom_call.1} parent=11 // pred_fallthru
          _
        // Predicated region
        $region53: #{tpu_custom_call.1} parent=11 // pred_check
          %p420 = pneg %p307
        $region54: #{tpu_custom_call.1} parent=11 // pred_check_branch
          %422 = sbr.rel (%p420) target = $region56
        $region55: #{tpu_custom_call.1} parent=11 // pred_region
          _
        $region56: #{tpu_custom_call.1} parent=11 // pred_fallthru
          _
        // Predicated region
        $region57: #{tpu_custom_call.1} parent=11 // pred_check
          %p423 = pneg %p328
        $region58: #{tpu_custom_call.1} parent=11 // pred_check_branch
          %425 = sbr.rel (%p423) target = $region60
        $region59: #{tpu_custom_call.1} parent=11 // pred_region
          _
        $region60: #{tpu_custom_call.1} parent=11 // pred_fallthru
          _
        // Predicated region
        $region61: #{tpu_custom_call.1} parent=11 // pred_check
          %p426 = pneg %p349
        $region62: #{tpu_custom_call.1} parent=11 // pred_check_branch
          %428 = sbr.rel (%p426) target = $region64
        $region63: #{tpu_custom_call.1} parent=11 // pred_region
          _
        $region64: #{tpu_custom_call.1} parent=11 // pred_fallthru
          _
      $region12: #{tpu_custom_call.1} parent=5 // pred_fallthru
        _
      %p429 = scmp.lt.s32.totalorder %s24, 2
      // Predicated region
      $region65: #{tpu_custom_call.1} parent=5 // pred_check
        %p430 = pneg %p429
      $region66: #{tpu_custom_call.1} parent=5 // pred_check_branch
        %432 = sbr.rel (%p430) target = $region68
      $region67: #{tpu_custom_call.1} parent=5 // pred_region
        // Predicated region
        $region69: #{tpu_custom_call.1} parent=67 // pred_check
          %p433 = pneg %p44
        $region70: #{tpu_custom_call.1} parent=67 // pred_check_branch
          %435 = sbr.rel (%p433) target = $region72
        $region71: #{tpu_custom_call.1} parent=67 // pred_region
          %p436 = scmp.lt.s32.totalorder %s24, 1
          %s437 = scalar_select %p436, %s24, 1
          %s438 = smul.addr %s437, 8
          %s439 = smul.addr %s438, 8
          %s440 = scalar_lea.vmem %s0, %s439
        $region72: #{tpu_custom_call.1} parent=67 // pred_fallthru
          _
        // Predicated region
        $region73: #{tpu_custom_call.1} parent=67 // pred_check
          %p441 = pneg %p70
        $region74: #{tpu_custom_call.1} parent=67 // pred_check_branch
          %443 = sbr.rel (%p441) target = $region76
        $region75: #{tpu_custom_call.1} parent=67 // pred_region
          %p444 = scmp.lt.s32.totalorder %s24, 1
          %s445 = scalar_select %p444, %s24, 1
          %s446 = smul.addr %s445, 4
          %s447 = scalar_lea.vmem %s1, %s446
        $region76: #{tpu_custom_call.1} parent=67 // pred_fallthru
          _
      $region68: #{tpu_custom_call.1} parent=5 // pred_fallthru
        _
      %p448 = scmp.le.s32.totalorder 1, %s24
      %p449 = scmp.lt.s32.totalorder %s24, 3
      %p450 = pnand %p448, %p449
      %p451 = pneg %p450
      // Predicated region
      $region77: #{tpu_custom_call.1} parent=5 // pred_check
        _
      $region78: #{tpu_custom_call.1} parent=5 // pred_check_branch
        %453 = sbr.rel (%p450) target = $region80
      $region79: #{tpu_custom_call.1} parent=5 // pred_region
        %s454 = ssub.s32 %s24, 1
        %p455 = scmp.lt.s32.totalorder %s29, 1
        %s456 = scalar_select %p455, %s29, 1
        %s457 = smul.addr %s456, 8
        %s458 = smul.addr %s457, 8
        %s459 = scalar_lea.vmem %s0, %s458
        %p460 = pneg %p50
        %p461 = pneg %p47
        %p462 = scmp.lt.s32.totalorder %s29, 1
        %s463 = scalar_select %p462, %s29, 1
        %s464 = smul.addr %s463, 4
        %s465 = scalar_lea.vmem %s1, %s464
        %p466 = pneg %p76
        %p467 = pneg %p73
        %p468 = pneg %p97
        %p469 = pneg %p94
        %p470 = pneg %p118
        %p471 = pneg %p115
        %p472 = pneg %p139
        %p473 = pneg %p136
        %p474 = pneg %p160
        %p475 = pneg %p157
        %p476 = pneg %p181
        %p477 = pneg %p178
        %p478 = pneg %p202
        %p479 = pneg %p199
        %p480 = pneg %p223
        %p481 = pneg %p220
        %p482 = pneg %p244
        %p483 = pneg %p241
        %p484 = pneg %p265
        %p485 = pneg %p262
        %p486 = pneg %p286
        %p487 = pneg %p283
        %p488 = pneg %p307
        %p489 = pneg %p304
        %p490 = pneg %p328
        %p491 = pneg %p325
        %p492 = pneg %p349
        %p493 = pneg %p346
        %p494 = pneg %p375
        %p495 = pneg %p372
        %s496 = sand.u32 %s362, 1
        %s497 = scalar_lea.sflag [#allocation3], %s496
        %s498 = sand.u32 %s362, 1
        %s499 = scalar_lea.vmem [#allocation2], %s498
        %p500 = scmp.lt.s32.totalorder %s29, 1
        %s501 = scalar_select %p500, %s29, 1
        %s502 = smul.addr %s501, 8
        %s503 = smul.addr %s502, 8
        %s504 = scalar_lea.vmem %s0, %s503
        %p505 = scmp.lt.s32.totalorder %s29, 1
        %s506 = scalar_select %p505, %s29, 1
        %s507 = smul.addr %s506, 4
        %s508 = scalar_lea.vmem %s1, %s507
        %v509 = vld [vmem:[%s504] sm:$0xff]
        %v510 = vld [vmem:[%s504 + $0x8] sm:$0xff]
        %v511 = vld [vmem:[%s504 + $0x10] sm:$0xff]
        %v512 = vld [vmem:[%s504 + $0x18] sm:$0xff]
        %v513 = vld [vmem:[%s504 + $0x20] sm:$0xff]
        %v514 = vld [vmem:[%s504 + $0x28] sm:$0xff]
        %v515 = vld [vmem:[%s504 + $0x30] sm:$0xff]
        %v516 = vld [vmem:[%s504 + $0x38] sm:$0xff]
        %v517 = vld [vmem:[%s2] sm:$0xff]
        %v518 = vld [vmem:[%s2 + $0x8] sm:$0xff]
        %v519 = vld [vmem:[%s2 + $0x10] sm:$0xff]
        %v520 = vld [vmem:[%s2 + $0x18] sm:$0xff]
        %v521 = vld [vmem:[%s2 + $0x20] sm:$0xff]
        %v522 = vld [vmem:[%s2 + $0x28] sm:$0xff]
        %v523 = vld [vmem:[%s2 + $0x30] sm:$0xff]
        %v524 = vld [vmem:[%s2 + $0x38] sm:$0xff]
        %v525 = vld [vmem:[%s2 + $0x40] sm:$0xff]
        %v526 = vld [vmem:[%s2 + $0x48] sm:$0xff]
        %v527 = vld [vmem:[%s2 + $0x50] sm:$0xff]
        %v528 = vld [vmem:[%s2 + $0x58] sm:$0xff]
        %v529 = vld [vmem:[%s2 + $0x60] sm:$0xff]
        %v530 = vld [vmem:[%s2 + $0x68] sm:$0xff]
        %v531 = vld [vmem:[%s2 + $0x70] sm:$0xff]
        %v532 = vld [vmem:[%s2 + $0x78] sm:$0xff]
        %v533 = vld [vmem:[%s3] sm:$0xff]
        %v534 = vld [vmem:[%s3 + $0x8] sm:$0xff]
        %v535 = vld [vmem:[%s3 + $0x10] sm:$0xff]
        %v536 = vld [vmem:[%s3 + $0x18] sm:$0xff]
        %v537 = vld [vmem:[%s3 + $0x20] sm:$0xff]
        %v538 = vld [vmem:[%s3 + $0x28] sm:$0xff]
        %v539 = vld [vmem:[%s3 + $0x30] sm:$0xff]
        %v540 = vld [vmem:[%s3 + $0x38] sm:$0xff]
        %v541 = vlaneseq
        %v542 = vshrl.u32 %v541, 7
        %v543 = vadd.s32 %v542, 8
        %v544 = vadd.s32 %v542, 16
        %v545 = vadd.s32 %v542, 24
        %v546 = vlaneseq
        %v547 = vand.u32 %v546, 127
        %v548 = vadd.s32 %v542, 1
        %v549 = vadd.s32 %v543, 1
        %v550 = vadd.s32 %v544, 1
        %v551 = vadd.s32 %v545, 1
        %vm552 = vcmp.eq.s32.totalorder %v548, %v547
        %vm553 = vcmp.eq.s32.totalorder %v549, %v547
        %vm554 = vcmp.eq.s32.totalorder %v550, %v547
        %vm555 = vcmp.eq.s32.totalorder %v551, %v547
        %v556 = vsel %vm552, 1.0, 0.0
        %v557 = vsel %vm553, 1.0, 0.0
        %v558 = vsel %vm554, 1.0, 0.0
        %v559 = vsel %vm555, 1.0, 0.0
        %vm560 = vcmask 261120
        %v562 = vsel %vm560, %v509, 0
        %v565 = vsel %vm560, %v510, 0
        %v568 = vsel %vm560, %v511, 0
        %v571 = vsel %vm560, %v512, 0
        %v574 = vsel %vm560, %v513, 0
        %v577 = vsel %vm560, %v514, 0
        %v580 = vsel %vm560, %v515, 0
        %v583 = vsel %vm560, %v516, 0
        %585 = vmatpush.msra.mxu0 0.0
        %586 = vmatpush.msra.mxu0 0.0
        %587 = vmatpush.msra.mxu0 0.0
        %588 = vmatpush.msra.mxu0 0.0
        %589 = vmatpush.msra.mxu0 0.0
        %590 = vmatpush.msra.mxu0 0.0
        %591 = vmatpush.msra.mxu0 0.0
        %592 = vmatpush.msra.mxu0 0.0
        %593 = vmatpush.msra.mxu0 0.0
        %594 = vmatpush.msra.mxu0 0.0
        %595 = vmatpush.msra.mxu0 0.0
        %596 = vmatpush.msra.mxu0 0.0
        %597 = vmatpush.msra.mxu0 %v559
        %598 = vmatpush.msra.mxu0 %v558
        %599 = vmatpush.msra.mxu0 %v557
        %600 = vmatpush.msra.mxu0 %v556
        %601 = vmatmul.f32.gmra.mxu0 %v562
        %v602 = vpop.f32.mrf.mxu0
        %v603 = vadd.f32 0.0, %v602
        %604 = vmatmul.f32.gmra.mxu0 %v565
        %v605 = vpop.f32.mrf.mxu0
        %v606 = vadd.f32 0.0, %v605
        %607 = vmatmul.f32.gmra.mxu0 %v568
        %v608 = vpop.f32.mrf.mxu0
        %v609 = vadd.f32 0.0, %v608
        %610 = vmatmul.f32.gmra.mxu0 %v571
        %v611 = vpop.f32.mrf.mxu0
        %v612 = vadd.f32 0.0, %v611
        %613 = vmatmul.f32.gmra.mxu0 %v574
        %v614 = vpop.f32.mrf.mxu0
        %v615 = vadd.f32 0.0, %v614
        %616 = vmatmul.f32.gmra.mxu0 %v577
        %v617 = vpop.f32.mrf.mxu0
        %v618 = vadd.f32 0.0, %v617
        %619 = vmatmul.f32.gmra.mxu0 %v580
        %v620 = vpop.f32.mrf.mxu0
        %v621 = vadd.f32 0.0, %v620
        %622 = vmatmul.f32.gmra.mxu0 %v583
        %v623 = vpop.f32.mrf.mxu0
        %v624 = vadd.f32 0.0, %v623
        %625 = vdwg.mxu0
        %v626 = vadd.s32 %v547, 1
        %vm627 = vcmp.eq.s32.totalorder %v542, %v626
        %vm628 = vcmp.eq.s32.totalorder %v543, %v626
        %vm629 = vcmp.eq.s32.totalorder %v544, %v626
        %vm630 = vcmp.eq.s32.totalorder %v545, %v626
        %v631 = vsel %vm627, 1.0, 0.0
        %v632 = vsel %vm628, 1.0, 0.0
        %v633 = vsel %vm629, 1.0, 0.0
        %v634 = vsel %vm630, 1.0, 0.0
        %635 = vmatpush.msra.mxu0 0.0
        %636 = vmatpush.msra.mxu0 0.0
        %637 = vmatpush.msra.mxu0 0.0
        %638 = vmatpush.msra.mxu0 0.0
        %639 = vmatpush.msra.mxu0 0.0
        %640 = vmatpush.msra.mxu0 0.0
        %641 = vmatpush.msra.mxu0 0.0
        %642 = vmatpush.msra.mxu0 0.0
        %643 = vmatpush.msra.mxu0 0.0
        %644 = vmatpush.msra.mxu0 0.0
        %645 = vmatpush.msra.mxu0 0.0
        %646 = vmatpush.msra.mxu0 0.0
        %647 = vmatpush.msra.mxu0 %v634
        %648 = vmatpush.msra.mxu0 %v633
        %649 = vmatpush.msra.mxu0 %v632
        %650 = vmatpush.msra.mxu0 %v631
        %651 = vmatmul.f32.gmra.mxu0 %v562
        %v652 = vpop.f32.mrf.mxu0
        %v653 = vadd.f32 0.0, %v652
        %654 = vmatmul.f32.gmra.mxu0 %v565
        %v655 = vpop.f32.mrf.mxu0
        %v656 = vadd.f32 0.0, %v655
        %657 = vmatmul.f32.gmra.mxu0 %v568
        %v658 = vpop.f32.mrf.mxu0
        %v659 = vadd.f32 0.0, %v658
        %660 = vmatmul.f32.gmra.mxu0 %v571
        %v661 = vpop.f32.mrf.mxu0
        %v662 = vadd.f32 0.0, %v661
        %663 = vmatmul.f32.gmra.mxu0 %v574
        %v664 = vpop.f32.mrf.mxu0
        %v665 = vadd.f32 0.0, %v664
        %666 = vmatmul.f32.gmra.mxu0 %v577
        %v667 = vpop.f32.mrf.mxu0
        %v668 = vadd.f32 0.0, %v667
        %669 = vmatmul.f32.gmra.mxu0 %v580
        %v670 = vpop.f32.mrf.mxu0
        %v671 = vadd.f32 0.0, %v670
        %672 = vmatmul.f32.gmra.mxu0 %v583
        %v673 = vpop.f32.mrf.mxu0
        %v674 = vadd.f32 0.0, %v673
        %675 = vdwg.mxu0
        %677 = vset.pattern.permute.xlu0 0
        %678 = vperm.xlu0 %677, %v533
        %v679 = vpop.permute.xlu0 %678
        %682 = vset.pattern.permute.xlu0 0
        %683 = vperm.xlu0 %682, %v534
        %v684 = vpop.permute.xlu0 %683
        %687 = vset.pattern.permute.xlu0 0
        %688 = vperm.xlu0 %687, %v535
        %v689 = vpop.permute.xlu0 %688
        %692 = vset.pattern.permute.xlu0 0
        %693 = vperm.xlu0 %692, %v536
        %v694 = vpop.permute.xlu0 %693
        %697 = vset.pattern.permute.xlu0 0
        %698 = vperm.xlu0 %697, %v537
        %v699 = vpop.permute.xlu0 %698
        %702 = vset.pattern.permute.xlu0 0
        %703 = vperm.xlu0 %702, %v538
        %v704 = vpop.permute.xlu0 %703
        %707 = vset.pattern.permute.xlu0 0
        %708 = vperm.xlu0 %707, %v539
        %v709 = vpop.permute.xlu0 %708
        %712 = vset.pattern.permute.xlu0 0
        %713 = vperm.xlu0 %712, %v540
        %v714 = vpop.permute.xlu0 %713
        %vm716 = vcmask 523264
        %v718 = vsel %vm716, %v518, 0
        %v721 = vsel %vm716, %v520, 0
        %v724 = vsel %vm716, %v522, 0
        %v727 = vsel %vm716, %v524, 0
        %v730 = vsel %vm716, %v526, 0
        %v733 = vsel %vm716, %v528, 0
        %v736 = vsel %vm716, %v530, 0
        %v739 = vsel %vm716, %v532, 0
        %741 = vmatpush.msra.mxu0 %v516
        %742 = vmatpush.msra.mxu0 %v515
        %743 = vmatpush.msra.mxu0 %v514
        %744 = vmatpush.msra.mxu0 %v513
        %745 = vmatpush.msra.mxu0 %v512
        %746 = vmatpush.msra.mxu0 %v511
        %747 = vmatpush.msra.mxu0 %v510
        %748 = vmatpush.msra.mxu0 %v509
        %749 = vmatpush.msra.mxu0 %v624
        %750 = vmatpush.msra.mxu0 %v621
        %751 = vmatpush.msra.mxu0 %v618
        %752 = vmatpush.msra.mxu0 %v615
        %753 = vmatpush.msra.mxu0 %v612
        %754 = vmatpush.msra.mxu0 %v609
        %755 = vmatpush.msra.mxu0 %v606
        %756 = vmatpush.msra.mxu0 %v603
        %757 = vmatmul.f32.gmra.mxu0 %v517
        %v758 = vpop.f32.mrf.mxu0
        %v759 = vadd.f32 %v679, %v758
        %760 = vmatmul.f32.gmra.mxu0 %v519
        %v761 = vpop.f32.mrf.mxu0
        %v762 = vadd.f32 %v684, %v761
        %763 = vmatmul.f32.gmra.mxu0 %v521
        %v764 = vpop.f32.mrf.mxu0
        %v765 = vadd.f32 %v689, %v764
        %766 = vmatmul.f32.gmra.mxu0 %v523
        %v767 = vpop.f32.mrf.mxu0
        %v768 = vadd.f32 %v694, %v767
        %769 = vmatmul.f32.gmra.mxu0 %v525
        %v770 = vpop.f32.mrf.mxu0
        %v771 = vadd.f32 %v699, %v770
        %772 = vmatmul.f32.gmra.mxu0 %v527
        %v773 = vpop.f32.mrf.mxu0
        %v774 = vadd.f32 %v704, %v773
        %775 = vmatmul.f32.gmra.mxu0 %v529
        %v776 = vpop.f32.mrf.mxu0
        %v777 = vadd.f32 %v709, %v776
        %778 = vmatmul.f32.gmra.mxu0 %v531
        %v779 = vpop.f32.mrf.mxu0
        %v780 = vadd.f32 %v714, %v779
        %781 = vdwg.mxu0
        %782 = vmatpush.msra.mxu0 0.0
        %783 = vmatpush.msra.mxu0 0.0
        %784 = vmatpush.msra.mxu0 0.0
        %785 = vmatpush.msra.mxu0 0.0
        %786 = vmatpush.msra.mxu0 0.0
        %787 = vmatpush.msra.mxu0 0.0
        %788 = vmatpush.msra.mxu0 0.0
        %789 = vmatpush.msra.mxu0 0.0
        %790 = vmatpush.msra.mxu0 %v674
        %791 = vmatpush.msra.mxu0 %v671
        %792 = vmatpush.msra.mxu0 %v668
        %793 = vmatpush.msra.mxu0 %v665
        %794 = vmatpush.msra.mxu0 %v662
        %795 = vmatpush.msra.mxu0 %v659
        %796 = vmatpush.msra.mxu0 %v656
        %797 = vmatpush.msra.mxu0 %v653
        %798 = vmatmul.f32.gmra.mxu0 %v718
        %v799 = vpop.f32.mrf.mxu0
        %v800 = vadd.f32 %v759, %v799
        %801 = vmatmul.f32.gmra.mxu0 %v721
        %v802 = vpop.f32.mrf.mxu0
        %v803 = vadd.f32 %v762, %v802
        %804 = vmatmul.f32.gmra.mxu0 %v724
        %v805 = vpop.f32.mrf.mxu0
        %v806 = vadd.f32 %v765, %v805
        %807 = vmatmul.f32.gmra.mxu0 %v727
        %v808 = vpop.f32.mrf.mxu0
        %v809 = vadd.f32 %v768, %v808
        %810 = vmatmul.f32.gmra.mxu0 %v730
        %v811 = vpop.f32.mrf.mxu0
        %v812 = vadd.f32 %v771, %v811
        %813 = vmatmul.f32.gmra.mxu0 %v733
        %v814 = vpop.f32.mrf.mxu0
        %v815 = vadd.f32 %v774, %v814
        %816 = vmatmul.f32.gmra.mxu0 %v736
        %v817 = vpop.f32.mrf.mxu0
        %v818 = vadd.f32 %v777, %v817
        %819 = vmatmul.f32.gmra.mxu0 %v739
        %v820 = vpop.f32.mrf.mxu0
        %v821 = vadd.f32 %v780, %v820
        %822 = vdwg.mxu0
        %vm823 = vcmp.gt.f32.partialorder %v800, 0.0
        %vm824 = vcmp.gt.f32.partialorder %v803, 0.0
        %vm825 = vcmp.gt.f32.partialorder %v806, 0.0
        %vm826 = vcmp.gt.f32.partialorder %v809, 0.0
        %vm827 = vcmp.gt.f32.partialorder %v812, 0.0
        %vm828 = vcmp.gt.f32.partialorder %v815, 0.0
        %vm829 = vcmp.gt.f32.partialorder %v818, 0.0
        %vm830 = vcmp.gt.f32.partialorder %v821, 0.0
        %v831 = vmul.f32 %v800, 0.2
        %v832 = vmul.f32 %v803, 0.2
        %v833 = vmul.f32 %v806, 0.2
        %v834 = vmul.f32 %v809, 0.2
        %v835 = vmul.f32 %v812, 0.2
        %v836 = vmul.f32 %v815, 0.2
        %v837 = vmul.f32 %v818, 0.2
        %v838 = vmul.f32 %v821, 0.2
        %v839 = vsel %vm823, %v800, %v831
        %v840 = vsel %vm824, %v803, %v832
        %v841 = vsel %vm825, %v806, %v833
        %v842 = vsel %vm826, %v809, %v834
        %v843 = vsel %vm827, %v812, %v835
        %v844 = vsel %vm828, %v815, %v836
        %v845 = vsel %vm829, %v818, %v837
        %v846 = vsel %vm830, %v821, %v838
        %v847 = vld [vmem:[%s4] sm:$0xff]
        %v848 = vld [vmem:[%s4 + $0x8] sm:$0xff]
        %v849 = vld [vmem:[%s4 + $0x10] sm:$0xff]
        %v850 = vld [vmem:[%s4 + $0x18] sm:$0xff]
        %v851 = vld [vmem:[%s4 + $0x20] sm:$0xff]
        %v852 = vld [vmem:[%s4 + $0x28] sm:$0xff]
        %v853 = vld [vmem:[%s4 + $0x30] sm:$0xff]
        %v854 = vld [vmem:[%s4 + $0x38] sm:$0xff]
        %v855 = vld [vmem:[%s5] sm:$0xff]
        %v856 = vld [vmem:[%s5 + $0x8] sm:$0xff]
        %v857 = vld [vmem:[%s5 + $0x10] sm:$0xff]
        %v858 = vld [vmem:[%s5 + $0x18] sm:$0xff]
        %v859 = vld [vmem:[%s5 + $0x20] sm:$0xff]
        %v860 = vld [vmem:[%s5 + $0x28] sm:$0xff]
        %v861 = vld [vmem:[%s5 + $0x30] sm:$0xff]
        %v862 = vld [vmem:[%s5 + $0x38] sm:$0xff]
        %864 = vset.pattern.permute.xlu0 0
        %865 = vperm.xlu0 %864, %v855
        %v866 = vpop.permute.xlu0 %865
        %869 = vset.pattern.permute.xlu0 0
        %870 = vperm.xlu0 %869, %v856
        %v871 = vpop.permute.xlu0 %870
        %874 = vset.pattern.permute.xlu0 0
        %875 = vperm.xlu0 %874, %v857
        %v876 = vpop.permute.xlu0 %875
        %879 = vset.pattern.permute.xlu0 0
        %880 = vperm.xlu0 %879, %v858
        %v881 = vpop.permute.xlu0 %880
        %884 = vset.pattern.permute.xlu0 0
        %885 = vperm.xlu0 %884, %v859
        %v886 = vpop.permute.xlu0 %885
        %889 = vset.pattern.permute.xlu0 0
        %890 = vperm.xlu0 %889, %v860
        %v891 = vpop.permute.xlu0 %890
        %894 = vset.pattern.permute.xlu0 0
        %895 = vperm.xlu0 %894, %v861
        %v896 = vpop.permute.xlu0 %895
        %899 = vset.pattern.permute.xlu0 0
        %900 = vperm.xlu0 %899, %v862
        %v901 = vpop.permute.xlu0 %900
        %v904 = vsel %vm716, %v847, 0
        %v907 = vsel %vm716, %v848, 0
        %v910 = vsel %vm716, %v849, 0
        %v913 = vsel %vm716, %v850, 0
        %v916 = vsel %vm716, %v851, 0
        %v919 = vsel %vm716, %v852, 0
        %v922 = vsel %vm716, %v853, 0
        %v925 = vsel %vm716, %v854, 0
        %927 = vmatpush.msra.mxu0 0.0
        %928 = vmatpush.msra.mxu0 0.0
        %929 = vmatpush.msra.mxu0 0.0
        %930 = vmatpush.msra.mxu0 0.0
        %931 = vmatpush.msra.mxu0 0.0
        %932 = vmatpush.msra.mxu0 0.0
        %933 = vmatpush.msra.mxu0 0.0
        %934 = vmatpush.msra.mxu0 0.0
        %935 = vmatpush.msra.mxu0 %v846
        %936 = vmatpush.msra.mxu0 %v845
        %937 = vmatpush.msra.mxu0 %v844
        %938 = vmatpush.msra.mxu0 %v843
        %939 = vmatpush.msra.mxu0 %v842
        %940 = vmatpush.msra.mxu0 %v841
        %941 = vmatpush.msra.mxu0 %v840
        %942 = vmatpush.msra.mxu0 %v839
        %943 = vmatmul.f32.gmra.mxu0 %v904
        %v944 = vpop.f32.mrf.mxu0
        %v945 = vadd.f32 %v866, %v944
        %946 = vmatmul.f32.gmra.mxu0 %v907
        %v947 = vpop.f32.mrf.mxu0
        %v948 = vadd.f32 %v871, %v947
        %949 = vmatmul.f32.gmra.mxu0 %v910
        %v950 = vpop.f32.mrf.mxu0
        %v951 = vadd.f32 %v876, %v950
        %952 = vmatmul.f32.gmra.mxu0 %v913
        %v953 = vpop.f32.mrf.mxu0
        %v954 = vadd.f32 %v881, %v953
        %955 = vmatmul.f32.gmra.mxu0 %v916
        %v956 = vpop.f32.mrf.mxu0
        %v957 = vadd.f32 %v886, %v956
        %958 = vmatmul.f32.gmra.mxu0 %v919
        %v959 = vpop.f32.mrf.mxu0
        %v960 = vadd.f32 %v891, %v959
        %961 = vmatmul.f32.gmra.mxu0 %v922
        %v962 = vpop.f32.mrf.mxu0
        %v963 = vadd.f32 %v896, %v962
        %964 = vmatmul.f32.gmra.mxu0 %v925
        %v965 = vpop.f32.mrf.mxu0
        %v966 = vadd.f32 %v901, %v965
        %967 = vdwg.mxu0
        %v968 = vld [vmem:[%s6] sm:$0xff]
        %v969 = vld [vmem:[%s6 + $0x8] sm:$0xff]
        %v970 = vld [vmem:[%s6 + $0x10] sm:$0xff]
        %v971 = vld [vmem:[%s6 + $0x18] sm:$0xff]
        %v972 = vld [vmem:[%s6 + $0x20] sm:$0xff]
        %v973 = vld [vmem:[%s6 + $0x28] sm:$0xff]
        %v974 = vld [vmem:[%s6 + $0x30] sm:$0xff]
        %v975 = vld [vmem:[%s6 + $0x38] sm:$0xff]
        %v976 = vld [vmem:[%s7] sm:$0xff]
        %v977 = vld [vmem:[%s7 + $0x8] sm:$0xff]
        %v978 = vld [vmem:[%s7 + $0x10] sm:$0xff]
        %v979 = vld [vmem:[%s7 + $0x18] sm:$0xff]
        %v980 = vld [vmem:[%s7 + $0x20] sm:$0xff]
        %v981 = vld [vmem:[%s7 + $0x28] sm:$0xff]
        %v982 = vld [vmem:[%s7 + $0x30] sm:$0xff]
        %v983 = vld [vmem:[%s7 + $0x38] sm:$0xff]
        %985 = vset.pattern.permute.xlu0 0
        %986 = vperm.xlu0 %985, %v976
        %v987 = vpop.permute.xlu0 %986
        %990 = vset.pattern.permute.xlu0 0
        %991 = vperm.xlu0 %990, %v977
        %v992 = vpop.permute.xlu0 %991
        %995 = vset.pattern.permute.xlu0 0
        %996 = vperm.xlu0 %995, %v978
        %v997 = vpop.permute.xlu0 %996
        %1000 = vset.pattern.permute.xlu0 0
        %1001 = vperm.xlu0 %1000, %v979
        %v1002 = vpop.permute.xlu0 %1001
        %1005 = vset.pattern.permute.xlu0 0
        %1006 = vperm.xlu0 %1005, %v980
        %v1007 = vpop.permute.xlu0 %1006
        %1010 = vset.pattern.permute.xlu0 0
        %1011 = vperm.xlu0 %1010, %v981
        %v1012 = vpop.permute.xlu0 %1011
        %1015 = vset.pattern.permute.xlu0 0
        %1016 = vperm.xlu0 %1015, %v982
        %v1017 = vpop.permute.xlu0 %1016
        %1020 = vset.pattern.permute.xlu0 0
        %1021 = vperm.xlu0 %1020, %v983
        %v1022 = vpop.permute.xlu0 %1021
        %v1025 = vsel %vm716, %v968, 0
        %v1028 = vsel %vm716, %v969, 0
        %v1031 = vsel %vm716, %v970, 0
        %v1034 = vsel %vm716, %v971, 0
        %v1037 = vsel %vm716, %v972, 0
        %v1040 = vsel %vm716, %v973, 0
        %v1043 = vsel %vm716, %v974, 0
        %v1046 = vsel %vm716, %v975, 0
        %1048 = vmatpush.msra.mxu0 0.0
        %1049 = vmatpush.msra.mxu0 0.0
        %1050 = vmatpush.msra.mxu0 0.0
        %1051 = vmatpush.msra.mxu0 0.0
        %1052 = vmatpush.msra.mxu0 0.0
        %1053 = vmatpush.msra.mxu0 0.0
        %1054 = vmatpush.msra.mxu0 0.0
        %1055 = vmatpush.msra.mxu0 0.0
        %1056 = vmatpush.msra.mxu0 %v846
        %1057 = vmatpush.msra.mxu0 %v845
        %1058 = vmatpush.msra.mxu0 %v844
        %1059 = vmatpush.msra.mxu0 %v843
        %1060 = vmatpush.msra.mxu0 %v842
        %1061 = vmatpush.msra.mxu0 %v841
        %1062 = vmatpush.msra.mxu0 %v840
        %1063 = vmatpush.msra.mxu0 %v839
        %1064 = vmatmul.f32.gmra.mxu0 %v1025
        %v1065 = vpop.f32.mrf.mxu0
        %v1066 = vadd.f32 %v987, %v1065
        %1067 = vmatmul.f32.gmra.mxu0 %v1028
        %v1068 = vpop.f32.mrf.mxu0
        %v1069 = vadd.f32 %v992, %v1068
        %1070 = vmatmul.f32.gmra.mxu0 %v1031
        %v1071 = vpop.f32.mrf.mxu0
        %v1072 = vadd.f32 %v997, %v1071
        %1073 = vmatmul.f32.gmra.mxu0 %v1034
        %v1074 = vpop.f32.mrf.mxu0
        %v1075 = vadd.f32 %v1002, %v1074
        %1076 = vmatmul.f32.gmra.mxu0 %v1037
        %v1077 = vpop.f32.mrf.mxu0
        %v1078 = vadd.f32 %v1007, %v1077
        %1079 = vmatmul.f32.gmra.mxu0 %v1040
        %v1080 = vpop.f32.mrf.mxu0
        %v1081 = vadd.f32 %v1012, %v1080
        %1082 = vmatmul.f32.gmra.mxu0 %v1043
        %v1083 = vpop.f32.mrf.mxu0
        %v1084 = vadd.f32 %v1017, %v1083
        %1085 = vmatmul.f32.gmra.mxu0 %v1046
        %v1086 = vpop.f32.mrf.mxu0
        %v1087 = vadd.f32 %v1022, %v1086
        %1088 = vdwg.mxu0
        %v1089 = vmul.f32 %v945, 0.5
        %v1090 = vmul.f32 %v948, 0.5
        %v1091 = vmul.f32 %v951, 0.5
        %v1092 = vmul.f32 %v954, 0.5
        %v1093 = vmul.f32 %v957, 0.5
        %v1094 = vmul.f32 %v960, 0.5
        %v1095 = vmul.f32 %v963, 0.5
        %v1096 = vmul.f32 %v966, 0.5
        %v1097 = vtanh.pop %v1089
        %v1098 = vtanh.pop %v1090
        %v1099 = vtanh.pop %v1091
        %v1100 = vtanh.pop %v1092
        %v1101 = vtanh.pop %v1093
        %v1102 = vtanh.pop %v1094
        %v1103 = vtanh.pop %v1095
        %v1104 = vtanh.pop %v1096
        %v1105 = vadd.f32 %v1097, 1.0
        %v1106 = vadd.f32 %v1098, 1.0
        %v1107 = vadd.f32 %v1099, 1.0
        %v1108 = vadd.f32 %v1100, 1.0
        %v1109 = vadd.f32 %v1101, 1.0
        %v1110 = vadd.f32 %v1102, 1.0
        %v1111 = vadd.f32 %v1103, 1.0
        %v1112 = vadd.f32 %v1104, 1.0
        %v1113 = vmul.f32 %v1105, 0.5
        %v1114 = vmul.f32 %v1106, 0.5
        %v1115 = vmul.f32 %v1107, 0.5
        %v1116 = vmul.f32 %v1108, 0.5
        %v1117 = vmul.f32 %v1109, 0.5
        %v1118 = vmul.f32 %v1110, 0.5
        %v1119 = vmul.f32 %v1111, 0.5
        %v1120 = vmul.f32 %v1112, 0.5
        %v1121 = vmul.f32 %v1066, 0.5
        %v1122 = vmul.f32 %v1069, 0.5
        %v1123 = vmul.f32 %v1072, 0.5
        %v1124 = vmul.f32 %v1075, 0.5
        %v1125 = vmul.f32 %v1078, 0.5
        %v1126 = vmul.f32 %v1081, 0.5
        %v1127 = vmul.f32 %v1084, 0.5
        %v1128 = vmul.f32 %v1087, 0.5
        %v1129 = vtanh.pop %v1121
        %v1130 = vtanh.pop %v1122
        %v1131 = vtanh.pop %v1123
        %v1132 = vtanh.pop %v1124
        %v1133 = vtanh.pop %v1125
        %v1134 = vtanh.pop %v1126
        %v1135 = vtanh.pop %v1127
        %v1136 = vtanh.pop %v1128
        %v1137 = vadd.f32 %v1129, 1.0
        %v1138 = vadd.f32 %v1130, 1.0
        %v1139 = vadd.f32 %v1131, 1.0
        %v1140 = vadd.f32 %v1132, 1.0
        %v1141 = vadd.f32 %v1133, 1.0
        %v1142 = vadd.f32 %v1134, 1.0
        %v1143 = vadd.f32 %v1135, 1.0
        %v1144 = vadd.f32 %v1136, 1.0
        %v1145 = vmul.f32 %v1137, 0.5
        %v1146 = vmul.f32 %v1138, 0.5
        %v1147 = vmul.f32 %v1139, 0.5
        %v1148 = vmul.f32 %v1140, 0.5
        %v1149 = vmul.f32 %v1141, 0.5
        %v1150 = vmul.f32 %v1142, 0.5
        %v1151 = vmul.f32 %v1143, 0.5
        %v1152 = vmul.f32 %v1144, 0.5
        %v1153 = vmul.f32 %v1145, 0.99
        %v1154 = vmul.f32 %v1146, 0.99
        %v1155 = vmul.f32 %v1147, 0.99
        %v1156 = vmul.f32 %v1148, 0.99
        %v1157 = vmul.f32 %v1149, 0.99
        %v1158 = vmul.f32 %v1150, 0.99
        %v1159 = vmul.f32 %v1151, 0.99
        %v1160 = vmul.f32 %v1152, 0.99
        %v1161 = vadd.f32 %v1153, 0.01
        %v1162 = vadd.f32 %v1154, 0.01
        %v1163 = vadd.f32 %v1155, 0.01
        %v1164 = vadd.f32 %v1156, 0.01
        %v1165 = vadd.f32 %v1157, 0.01
        %v1166 = vadd.f32 %v1158, 0.01
        %v1167 = vadd.f32 %v1159, 0.01
        %v1168 = vadd.f32 %v1160, 0.01
        %v1169 = vld [vmem:[%s8] sm:$0xff]
        %v1170 = vld [vmem:[%s8 + $0x8] sm:$0xff]
        %v1171 = vld [vmem:[%s8 + $0x10] sm:$0xff]
        %v1172 = vld [vmem:[%s8 + $0x18] sm:$0xff]
        %v1174 = vsel %vm560, %v1113, 0
        %v1177 = vsel %vm560, %v1114, 0
        %v1180 = vsel %vm560, %v1115, 0
        %v1183 = vsel %vm560, %v1116, 0
        %v1186 = vsel %vm560, %v1117, 0
        %v1189 = vsel %vm560, %v1118, 0
        %v1192 = vsel %vm560, %v1119, 0
        %v1195 = vsel %vm560, %v1120, 0
        %1197 = vmatpush.msra.mxu0 0.0
        %1198 = vmatpush.msra.mxu0 0.0
        %1199 = vmatpush.msra.mxu0 0.0
        %1200 = vmatpush.msra.mxu0 0.0
        %1201 = vmatpush.msra.mxu0 0.0
        %1202 = vmatpush.msra.mxu0 0.0
        %1203 = vmatpush.msra.mxu0 0.0
        %1204 = vmatpush.msra.mxu0 0.0
        %1205 = vmatpush.msra.mxu0 0.0
        %1206 = vmatpush.msra.mxu0 0.0
        %1207 = vmatpush.msra.mxu0 0.0
        %1208 = vmatpush.msra.mxu0 0.0
        %1209 = vmatpush.msra.mxu0 %v1172
        %1210 = vmatpush.msra.mxu0 %v1171
        %1211 = vmatpush.msra.mxu0 %v1170
        %1212 = vmatpush.msra.mxu0 %v1169
        %1213 = vmatmul.f32.gmra.mxu0 %v1174
        %v1214 = vpop.f32.mrf.mxu0
        %v1215 = vadd.f32 0.0, %v1214
        %1216 = vmatmul.f32.gmra.mxu0 %v1177
        %v1217 = vpop.f32.mrf.mxu0
        %v1218 = vadd.f32 0.0, %v1217
        %1219 = vmatmul.f32.gmra.mxu0 %v1180
        %v1220 = vpop.f32.mrf.mxu0
        %v1221 = vadd.f32 0.0, %v1220
        %1222 = vmatmul.f32.gmra.mxu0 %v1183
        %v1223 = vpop.f32.mrf.mxu0
        %v1224 = vadd.f32 0.0, %v1223
        %1225 = vmatmul.f32.gmra.mxu0 %v1186
        %v1226 = vpop.f32.mrf.mxu0
        %v1227 = vadd.f32 0.0, %v1226
        %1228 = vmatmul.f32.gmra.mxu0 %v1189
        %v1229 = vpop.f32.mrf.mxu0
        %v1230 = vadd.f32 0.0, %v1229
        %1231 = vmatmul.f32.gmra.mxu0 %v1192
        %v1232 = vpop.f32.mrf.mxu0
        %v1233 = vadd.f32 0.0, %v1232
        %1234 = vmatmul.f32.gmra.mxu0 %v1195
        %v1235 = vpop.f32.mrf.mxu0
        %v1236 = vadd.f32 0.0, %v1235
        %1237 = vdwg.mxu0
        %v1239 = vsel %vm560, %v1161, 0
        %v1242 = vsel %vm560, %v1162, 0
        %v1245 = vsel %vm560, %v1163, 0
        %v1248 = vsel %vm560, %v1164, 0
        %v1251 = vsel %vm560, %v1165, 0
        %v1254 = vsel %vm560, %v1166, 0
        %v1257 = vsel %vm560, %v1167, 0
        %v1260 = vsel %vm560, %v1168, 0
        %1262 = vmatpush.msra.mxu0 0.0
        %1263 = vmatpush.msra.mxu0 0.0
        %1264 = vmatpush.msra.mxu0 0.0
        %1265 = vmatpush.msra.mxu0 0.0
        %1266 = vmatpush.msra.mxu0 0.0
        %1267 = vmatpush.msra.mxu0 0.0
        %1268 = vmatpush.msra.mxu0 0.0
        %1269 = vmatpush.msra.mxu0 0.0
        %1270 = vmatpush.msra.mxu0 0.0
        %1271 = vmatpush.msra.mxu0 0.0
        %1272 = vmatpush.msra.mxu0 0.0
        %1273 = vmatpush.msra.mxu0 0.0
        %1274 = vmatpush.msra.mxu0 %v1172
        %1275 = vmatpush.msra.mxu0 %v1171
        %1276 = vmatpush.msra.mxu0 %v1170
        %1277 = vmatpush.msra.mxu0 %v1169
        %1278 = vmatmul.f32.gmra.mxu0 %v1239
        %v1279 = vpop.f32.mrf.mxu0
        %v1280 = vadd.f32 0.0, %v1279
        %1281 = vmatmul.f32.gmra.mxu0 %v1242
        %v1282 = vpop.f32.mrf.mxu0
        %v1283 = vadd.f32 0.0, %v1282
        %1284 = vmatmul.f32.gmra.mxu0 %v1245
        %v1285 = vpop.f32.mrf.mxu0
        %v1286 = vadd.f32 0.0, %v1285
        %1287 = vmatmul.f32.gmra.mxu0 %v1248
        %v1288 = vpop.f32.mrf.mxu0
        %v1289 = vadd.f32 0.0, %v1288
        %1290 = vmatmul.f32.gmra.mxu0 %v1251
        %v1291 = vpop.f32.mrf.mxu0
        %v1292 = vadd.f32 0.0, %v1291
        %1293 = vmatmul.f32.gmra.mxu0 %v1254
        %v1294 = vpop.f32.mrf.mxu0
        %v1295 = vadd.f32 0.0, %v1294
        %1296 = vmatmul.f32.gmra.mxu0 %v1257
        %v1297 = vpop.f32.mrf.mxu0
        %v1298 = vadd.f32 0.0, %v1297
        %1299 = vmatmul.f32.gmra.mxu0 %v1260
        %v1300 = vpop.f32.mrf.mxu0
        %v1301 = vadd.f32 0.0, %v1300
        %1302 = vdwg.mxu0
        %v1303 = vadd.s32 %v542, 32
        %v1304 = vadd.s32 %v542, 40
        %v1305 = vadd.s32 %v542, 48
        %v1306 = vadd.s32 %v542, 56
        %v1307 = vadd.s32 %v542, 64
        %v1308 = vadd.s32 %v542, 72
        %v1309 = vadd.s32 %v542, 80
        %v1310 = vadd.s32 %v542, 88
        %v1311 = vadd.s32 %v542, 96
        %v1312 = vadd.s32 %v542, 104
        %v1313 = vadd.s32 %v542, 112
        %v1314 = vadd.s32 %v542, 120
        %vm1315 = vcmp.le.s32.totalorder %v542, %v547
        %vm1316 = vcmp.le.s32.totalorder %v543, %v547
        %vm1317 = vcmp.le.s32.totalorder %v544, %v547
        %vm1318 = vcmp.le.s32.totalorder %v545, %v547
        %vm1319 = vcmp.le.s32.totalorder %v1303, %v547
        %vm1320 = vcmp.le.s32.totalorder %v1304, %v547
        %vm1321 = vcmp.le.s32.totalorder %v1305, %v547
        %vm1322 = vcmp.le.s32.totalorder %v1306, %v547
        %vm1323 = vcmp.le.s32.totalorder %v1307, %v547
        %vm1324 = vcmp.le.s32.totalorder %v1308, %v547
        %vm1325 = vcmp.le.s32.totalorder %v1309, %v547
        %vm1326 = vcmp.le.s32.totalorder %v1310, %v547
        %vm1327 = vcmp.le.s32.totalorder %v1311, %v547
        %vm1328 = vcmp.le.s32.totalorder %v1312, %v547
        %vm1329 = vcmp.le.s32.totalorder %v1313, %v547
        %vm1330 = vcmp.le.s32.totalorder %v1314, %v547
        %v1331 = vsel %vm1315, 1.0, 0.0
        %v1332 = vsel %vm1316, 1.0, 0.0
        %v1333 = vsel %vm1317, 1.0, 0.0
        %v1334 = vsel %vm1318, 1.0, 0.0
        %v1335 = vsel %vm1319, 1.0, 0.0
        %v1336 = vsel %vm1320, 1.0, 0.0
        %v1337 = vsel %vm1321, 1.0, 0.0
        %v1338 = vsel %vm1322, 1.0, 0.0
        %v1339 = vsel %vm1323, 1.0, 0.0
        %v1340 = vsel %vm1324, 1.0, 0.0
        %v1341 = vsel %vm1325, 1.0, 0.0
        %v1342 = vsel %vm1326, 1.0, 0.0
        %v1343 = vsel %vm1327, 1.0, 0.0
        %v1344 = vsel %vm1328, 1.0, 0.0
        %v1345 = vsel %vm1329, 1.0, 0.0
        %v1346 = vsel %vm1330, 1.0, 0.0
        %v1347 = vmul.f32 %v1280, 3.1415927
        %v1348 = vmul.f32 %v1283, 3.1415927
        %v1349 = vmul.f32 %v1286, 3.1415927
        %v1350 = vmul.f32 %v1289, 3.1415927
        %v1351 = vmul.f32 %v1292, 3.1415927
        %v1352 = vmul.f32 %v1295, 3.1415927
        %v1353 = vmul.f32 %v1298, 3.1415927
        %v1354 = vmul.f32 %v1301, 3.1415927
        %1355 = vmatpush.msra.mxu0 %v1346
        %1356 = vmatpush.msra.mxu0 %v1345
        %1357 = vmatpush.msra.mxu0 %v1344
        %1358 = vmatpush.msra.mxu0 %v1343
        %1359 = vmatpush.msra.mxu0 %v1342
        %1360 = vmatpush.msra.mxu0 %v1341
        %1361 = vmatpush.msra.mxu0 %v1340
        %1362 = vmatpush.msra.mxu0 %v1339
        %1363 = vmatpush.msra.mxu0 %v1338
        %1364 = vmatpush.msra.mxu0 %v1337
        %1365 = vmatpush.msra.mxu0 %v1336
        %1366 = vmatpush.msra.mxu0 %v1335
        %1367 = vmatpush.msra.mxu0 %v1334
        %1368 = vmatpush.msra.mxu0 %v1333
        %1369 = vmatpush.msra.mxu0 %v1332
        %1370 = vmatpush.msra.mxu0 %v1331
        %1371 = vmatmul.f32.gmra.mxu0 %v1347
        %v1372 = vpop.f32.mrf.mxu0
        %v1373 = vadd.f32 0.0, %v1372
        %1374 = vmatmul.f32.gmra.mxu0 %v1348
        %v1375 = vpop.f32.mrf.mxu0
        %v1376 = vadd.f32 0.0, %v1375
        %1377 = vmatmul.f32.gmra.mxu0 %v1349
        %v1378 = vpop.f32.mrf.mxu0
        %v1379 = vadd.f32 0.0, %v1378
        %1380 = vmatmul.f32.gmra.mxu0 %v1350
        %v1381 = vpop.f32.mrf.mxu0
        %v1382 = vadd.f32 0.0, %v1381
        %1383 = vmatmul.f32.gmra.mxu0 %v1351
        %v1384 = vpop.f32.mrf.mxu0
        %v1385 = vadd.f32 0.0, %v1384
        %1386 = vmatmul.f32.gmra.mxu0 %v1352
        %v1387 = vpop.f32.mrf.mxu0
        %v1388 = vadd.f32 0.0, %v1387
        %1389 = vmatmul.f32.gmra.mxu0 %v1353
        %v1390 = vpop.f32.mrf.mxu0
        %v1391 = vadd.f32 0.0, %v1390
        %1392 = vmatmul.f32.gmra.mxu0 %v1354
        %v1393 = vpop.f32.mrf.mxu0
        %v1394 = vadd.f32 0.0, %v1393
        %1395 = vdwg.mxu0
        %v1396 = vand.u32 2147483647, %v1373
        %vm1397 = vcmp.le.f32.partialorder %v1396, 0.7853982
        %vm1398 = vcmp.lt.s32.totalorder %v1373, 0
        %v1399 = vand.u32 %v1373, 2139095040
        %v1400 = vshrl.u32 %v1399, 23
        %v1401 = vsub.s32 %v1400, 127
        %v1402 = vand.u32 2147483647, %v1373
        %v1403 = vand.u32 %v1402, 8388607
        %v1404 = vor.u32 %v1403, 8388608
        %v1405 = vsub.s32 0, %v1404
        %v1406 = vadd.s32 %v1401, 1
        %vm1407 = vcmp.gt.s32.totalorder %v1406, 0
        %v1408 = vsel %vm1407, %v1406, 0
        %v1409 = vshrl.u32 %v1408, 5
        %v1410 = vand.u32 %v1408, 31
        %v1411 = vsub.s32 32, %v1410
        %v1412 = vshrl.u32 683565275, %v1411
        %v1413 = vshll.u32 683565275, %v1410
        %v1414 = vshrl.u32 2475754826, %v1411
        %v1415 = vor.u32 %v1413, %v1414
        %v1416 = vshll.u32 2475754826, %v1410
        %v1417 = vshrl.u32 2131351028, %v1411
        %v1418 = vor.u32 %v1416, %v1417
        %v1419 = vshll.u32 2131351028, %v1410
        %v1420 = vshrl.u32 2102212464, %v1411
        %v1421 = vor.u32 %v1419, %v1420
        %v1422 = vshll.u32 2102212464, %v1410
        %v1423 = vshrl.u32 920167782, %v1411
        %v1424 = vor.u32 %v1422, %v1423
        %v1425 = vshll.u32 920167782, %v1410
        %v1426 = vshrl.u32 1326507024, %v1411
        %v1427 = vor.u32 %v1425, %v1426
        %vm1428 = vcmp.lt.s32.totalorder %v1409, 1
        %vm1429 = vcmp.lt.s32.totalorder %v1409, 2
        %vm1430 = vcmp.lt.s32.totalorder %v1409, 3
        %vm1431 = vcmp.lt.s32.totalorder %v1409, 4
        %v1432 = vsel %vm1428, %v1412, %v1415
        %v1433 = vsel %vm1431, %v1421, 2102212464
        %v1434 = vsel %vm1430, %v1418, %v1433
        %v1435 = vsel %vm1429, %v1432, %v1434
        %v1436 = vsel %vm1428, %v1415, %v1418
        %v1437 = vsel %vm1431, %v1424, 920167782
        %v1438 = vsel %vm1430, %v1421, %v1437
        %v1439 = vsel %vm1429, %v1436, %v1438
        %v1440 = vsel %vm1428, %v1418, %v1421
        %v1441 = vsel %vm1431, %v1427, 1326507024
        %v1442 = vsel %vm1430, %v1424, %v1441
        %v1443 = vsel %vm1429, %v1440, %v1442
        %v1444 = vshll.u32 %v1404, 8
        %v1445 = vand.u32 %v1444, 65535
        %v1446 = vshrl.u32 %v1444, 16
        %v1447 = vand.u32 %v1443, 65535
        %v1448 = vshrl.u32 %v1443, 16
        %v1449 = vmul.u32 %v1445, %v1447
        %v1450 = vmul.u32 %v1445, %v1448
        %v1451 = vmul.u32 %v1446, %v1447
        %v1452 = vmul.u32 %v1446, %v1448
        %v1453 = vshll.u32 %v1450, 16
        %v1454 = vshrl.u32 %v1450, 16
        %v1455 = vshll.u32 %v1451, 16
        %v1456 = vshrl.u32 %v1451, 16
        %vm1457 = vc.u32 %v1449, %v1453
        %v1458 = vsel %vm1457, 1, 0
        %v1459 = vadd.s32 %v1449, %v1453
        %v1460 = vadd.s32 %v1452, %v1458
        %vm1461 = vc.u32 %v1459, %v1455
        %v1462 = vsel %vm1461, 1, 0
        %v1463 = vadd.s32 %v1459, %v1455
        %v1464 = vadd.s32 %v1460, %v1462
        %v1465 = vadd.s32 %v1464, %v1454
        %v1466 = vadd.s32 %v1465, %v1456
        %v1467 = vand.u32 %v1444, 65535
        %v1468 = vshrl.u32 %v1444, 16
        %v1469 = vand.u32 %v1439, 65535
        %v1470 = vshrl.u32 %v1439, 16
        %v1471 = vmul.u32 %v1467, %v1469
        %v1472 = vmul.u32 %v1467, %v1470
        %v1473 = vmul.u32 %v1468, %v1469
        %v1474 = vmul.u32 %v1468, %v1470
        %v1475 = vshll.u32 %v1472, 16
        %v1476 = vshrl.u32 %v1472, 16
        %v1477 = vshll.u32 %v1473, 16
        %v1478 = vshrl.u32 %v1473, 16
        %vm1479 = vc.u32 %v1471, %v1475
        %v1480 = vsel %vm1479, 1, 0
        %v1481 = vadd.s32 %v1471, %v1475
        %v1482 = vadd.s32 %v1474, %v1480
        %vm1483 = vc.u32 %v1481, %v1477
        %v1484 = vsel %vm1483, 1, 0
        %v1485 = vadd.s32 %v1481, %v1477
        %v1486 = vadd.s32 %v1482, %v1484
        %v1487 = vadd.s32 %v1486, %v1476
        %v1488 = vadd.s32 %v1487, %v1478
        %v1489 = vmul.u32 %v1444, %v1435
        %v1490 = vadd.s32 %v1466, %v1485
        %vm1491 = vc.u32 %v1466, %v1485
        %v1492 = vadd.s32 %v1488, 1
        %v1493 = vsel %vm1491, %v1492, %v1488
        %v1494 = vadd.s32 %v1489, %v1493
        %v1495 = vadd.s32 %v1494, 536870912
        %v1496 = vshrl.u32 %v1495, 30
        %v1497 = vshll.u32 %v1496, 30
        %v1498 = vsub.s32 %v1494, %v1497
        %vm1499 = vcmp.lt.s32.totalorder %v1498, 0
        %v1500 = vsub.s32 0, %v1498
        %v1501 = vsel %vm1499, %v1500, %v1498
        %v1502 = vclz %v1501
        %v1503 = vsub.s32 %v1502, 2
        %vm1504 = vcmp.gt.s32.totalorder 0, %v1503
        %v1505 = vsel %vm1504, 0, %v1503
        %v1506 = vsub.s32 32, %v1505
        %v1507 = vshll.u32 %v1498, %v1505
        %v1508 = vshrl.u32 %v1490, %v1506
        %v1509 = vor.u32 %v1507, %v1508
        %v1510 = vsub.s32 4294967266, %v1505
        %v1511 = vadd.s32 %v1510, 127
        %v1512 = vshll.u32 %v1511, 23
        %v1513 = vor.u32 4788187, %v1512
        %v1514 = vand.u32 2147483647, %v1513
        %v1516 = vcvt.s32.f32 %v1509
        %v1517 = vmul.f32 %v1516, %v1514
        %v1518 = vxor.u32 %v1517, 2147483648
        %v1519 = vsel %vm1398, %v1518, %v1517
        %v1520 = vsub.s32 4, %v1496
        %v1521 = vsel %vm1398, %v1520, %v1496
        %v1522 = vsel %vm1397, %v1373, %v1519
        %v1523 = vsel %vm1397, 0, %v1521
        %v1524 = vmul.f32 %v1522, %v1522
        %v1525 = vmul.f32 %v1524, -0.001358992
        %v1526 = vadd.f32 %v1525, 0.041655596
        %v1527 = vmul.f32 %v1524, %v1526
        %v1528 = vadd.f32 %v1527, -0.4999988
        %v1529 = vmul.f32 %v1524, %v1528
        %v1530 = vadd.f32 1.0, %v1529
        %v1531 = vmul.f32 %v1522, %v1522
        %v1532 = vmul.f32 %v1531, -0.00019511016
        %v1533 = vadd.f32 %v1532, 0.008332121
        %v1534 = vmul.f32 %v1531, %v1533
        %v1535 = vadd.f32 %v1534, -0.16666654
        %v1536 = vmul.f32 %v1531, %v1535
        %v1537 = vadd.f32 %v1536, 1.0
        %v1538 = vmul.f32 %v1537, %v1522
        %vm1539 = vweird.f32 %v1373
        %v1540 = vadd.s32 %v1523, 3
        %v1541 = vand.u32 %v1540, 3
        %vm1542 = vcmp.lt.s32.totalorder %v1541, 2
        %vm1543 = vcmp.eq.s32.totalorder %v1541, 0
        %v1544 = vxor.u32 %v1538, 2147483648
        %v1545 = vsel %vm1543, %v1530, %v1544
        %vm1546 = vcmp.eq.s32.totalorder %v1541, 2
        %v1547 = vxor.u32 %v1530, 2147483648
        %v1548 = vsel %vm1546, %v1547, %v1538
        %v1549 = vsel %vm1542, %v1545, %v1548
        %v1550 = vsel %vm1539, nan, %v1549
        %v1551 = vand.u32 2147483647, %v1376
        %vm1552 = vcmp.le.f32.partialorder %v1551, 0.7853982
        %vm1553 = vcmp.lt.s32.totalorder %v1376, 0
        %v1554 = vand.u32 %v1376, 2139095040
        %v1555 = vshrl.u32 %v1554, 23
        %v1556 = vsub.s32 %v1555, 127
        %v1557 = vand.u32 2147483647, %v1376
        %v1558 = vand.u32 %v1557, 8388607
        %v1559 = vor.u32 %v1558, 8388608
        %v1560 = vsub.s32 0, %v1559
        %v1561 = vadd.s32 %v1556, 1
        %vm1562 = vcmp.gt.s32.totalorder %v1561, 0
        %v1563 = vsel %vm1562, %v1561, 0
        %v1564 = vshrl.u32 %v1563, 5
        %v1565 = vand.u32 %v1563, 31
        %v1566 = vsub.s32 32, %v1565
        %v1567 = vshrl.u32 683565275, %v1566
        %v1568 = vshll.u32 683565275, %v1565
        %v1569 = vshrl.u32 2475754826, %v1566
        %v1570 = vor.u32 %v1568, %v1569
        %v1571 = vshll.u32 2475754826, %v1565
        %v1572 = vshrl.u32 2131351028, %v1566
        %v1573 = vor.u32 %v1571, %v1572
        %v1574 = vshll.u32 2131351028, %v1565
        %v1575 = vshrl.u32 2102212464, %v1566
        %v1576 = vor.u32 %v1574, %v1575
        %v1577 = vshll.u32 2102212464, %v1565
        %v1578 = vshrl.u32 920167782, %v1566
        %v1579 = vor.u32 %v1577, %v1578
        %v1580 = vshll.u32 920167782, %v1565
        %v1581 = vshrl.u32 1326507024, %v1566
        %v1582 = vor.u32 %v1580, %v1581
        %vm1583 = vcmp.lt.s32.totalorder %v1564, 1
        %vm1584 = vcmp.lt.s32.totalorder %v1564, 2
        %vm1585 = vcmp.lt.s32.totalorder %v1564, 3
        %vm1586 = vcmp.lt.s32.totalorder %v1564, 4
        %v1587 = vsel %vm1583, %v1567, %v1570
        %v1588 = vsel %vm1586, %v1576, 2102212464
        %v1589 = vsel %vm1585, %v1573, %v1588
        %v1590 = vsel %vm1584, %v1587, %v1589
        %v1591 = vsel %vm1583, %v1570, %v1573
        %v1592 = vsel %vm1586, %v1579, 920167782
        %v1593 = vsel %vm1585, %v1576, %v1592
        %v1594 = vsel %vm1584, %v1591, %v1593
        %v1595 = vsel %vm1583, %v1573, %v1576
        %v1596 = vsel %vm1586, %v1582, 1326507024
        %v1597 = vsel %vm1585, %v1579, %v1596
        %v1598 = vsel %vm1584, %v1595, %v1597
        %v1599 = vshll.u32 %v1559, 8
        %v1600 = vand.u32 %v1599, 65535
        %v1601 = vshrl.u32 %v1599, 16
        %v1602 = vand.u32 %v1598, 65535
        %v1603 = vshrl.u32 %v1598, 16
        %v1604 = vmul.u32 %v1600, %v1602
        %v1605 = vmul.u32 %v1600, %v1603
        %v1606 = vmul.u32 %v1601, %v1602
        %v1607 = vmul.u32 %v1601, %v1603
        %v1608 = vshll.u32 %v1605, 16
        %v1609 = vshrl.u32 %v1605, 16
        %v1610 = vshll.u32 %v1606, 16
        %v1611 = vshrl.u32 %v1606, 16
        %vm1612 = vc.u32 %v1604, %v1608
        %v1613 = vsel %vm1612, 1, 0
        %v1614 = vadd.s32 %v1604, %v1608
        %v1615 = vadd.s32 %v1607, %v1613
        %vm1616 = vc.u32 %v1614, %v1610
        %v1617 = vsel %vm1616, 1, 0
        %v1618 = vadd.s32 %v1614, %v1610
        %v1619 = vadd.s32 %v1615, %v1617
        %v1620 = vadd.s32 %v1619, %v1609
        %v1621 = vadd.s32 %v1620, %v1611
        %v1622 = vand.u32 %v1599, 65535
        %v1623 = vshrl.u32 %v1599, 16
        %v1624 = vand.u32 %v1594, 65535
        %v1625 = vshrl.u32 %v1594, 16
        %v1626 = vmul.u32 %v1622, %v1624
        %v1627 = vmul.u32 %v1622, %v1625
        %v1628 = vmul.u32 %v1623, %v1624
        %v1629 = vmul.u32 %v1623, %v1625
        %v1630 = vshll.u32 %v1627, 16
        %v1631 = vshrl.u32 %v1627, 16
        %v1632 = vshll.u32 %v1628, 16
        %v1633 = vshrl.u32 %v1628, 16
        %vm1634 = vc.u32 %v1626, %v1630
        %v1635 = vsel %vm1634, 1, 0
        %v1636 = vadd.s32 %v1626, %v1630
        %v1637 = vadd.s32 %v1629, %v1635
        %vm1638 = vc.u32 %v1636, %v1632
        %v1639 = vsel %vm1638, 1, 0
        %v1640 = vadd.s32 %v1636, %v1632
        %v1641 = vadd.s32 %v1637, %v1639
        %v1642 = vadd.s32 %v1641, %v1631
        %v1643 = vadd.s32 %v1642, %v1633
        %v1644 = vmul.u32 %v1599, %v1590
        %v1645 = vadd.s32 %v1621, %v1640
        %vm1646 = vc.u32 %v1621, %v1640
        %v1647 = vadd.s32 %v1643, 1
        %v1648 = vsel %vm1646, %v1647, %v1643
        %v1649 = vadd.s32 %v1644, %v1648
        %v1650 = vadd.s32 %v1649, 536870912
        %v1651 = vshrl.u32 %v1650, 30
        %v1652 = vshll.u32 %v1651, 30
        %v1653 = vsub.s32 %v1649, %v1652
        %vm1654 = vcmp.lt.s32.totalorder %v1653, 0
        %v1655 = vsub.s32 0, %v1653
        %v1656 = vsel %vm1654, %v1655, %v1653
        %v1657 = vclz %v1656
        %v1658 = vsub.s32 %v1657, 2
        %vm1659 = vcmp.gt.s32.totalorder 0, %v1658
        %v1660 = vsel %vm1659, 0, %v1658
        %v1661 = vsub.s32 32, %v1660
        %v1662 = vshll.u32 %v1653, %v1660
        %v1663 = vshrl.u32 %v1645, %v1661
        %v1664 = vor.u32 %v1662, %v1663
        %v1665 = vsub.s32 4294967266, %v1660
        %v1666 = vadd.s32 %v1665, 127
        %v1667 = vshll.u32 %v1666, 23
        %v1668 = vor.u32 4788187, %v1667
        %v1669 = vand.u32 2147483647, %v1668
        %v1671 = vcvt.s32.f32 %v1664
        %v1672 = vmul.f32 %v1671, %v1669
        %v1673 = vxor.u32 %v1672, 2147483648
        %v1674 = vsel %vm1553, %v1673, %v1672
        %v1675 = vsub.s32 4, %v1651
        %v1676 = vsel %vm1553, %v1675, %v1651
        %v1677 = vsel %vm1552, %v1376, %v1674
        %v1678 = vsel %vm1552, 0, %v1676
        %v1679 = vmul.f32 %v1677, %v1677
        %v1680 = vmul.f32 %v1679, -0.001358992
        %v1681 = vadd.f32 %v1680, 0.041655596
        %v1682 = vmul.f32 %v1679, %v1681
        %v1683 = vadd.f32 %v1682, -0.4999988
        %v1684 = vmul.f32 %v1679, %v1683
        %v1685 = vadd.f32 1.0, %v1684
        %v1686 = vmul.f32 %v1677, %v1677
        %v1687 = vmul.f32 %v1686, -0.00019511016
        %v1688 = vadd.f32 %v1687, 0.008332121
        %v1689 = vmul.f32 %v1686, %v1688
        %v1690 = vadd.f32 %v1689, -0.16666654
        %v1691 = vmul.f32 %v1686, %v1690
        %v1692 = vadd.f32 %v1691, 1.0
        %v1693 = vmul.f32 %v1692, %v1677
        %vm1694 = vweird.f32 %v1376
        %v1695 = vadd.s32 %v1678, 3
        %v1696 = vand.u32 %v1695, 3
        %vm1697 = vcmp.lt.s32.totalorder %v1696, 2
        %vm1698 = vcmp.eq.s32.totalorder %v1696, 0
        %v1699 = vxor.u32 %v1693, 2147483648
        %v1700 = vsel %vm1698, %v1685, %v1699
        %vm1701 = vcmp.eq.s32.totalorder %v1696, 2
        %v1702 = vxor.u32 %v1685, 2147483648
        %v1703 = vsel %vm1701, %v1702, %v1693
        %v1704 = vsel %vm1697, %v1700, %v1703
        %v1705 = vsel %vm1694, nan, %v1704
        %v1706 = vand.u32 2147483647, %v1379
        %vm1707 = vcmp.le.f32.partialorder %v1706, 0.7853982
        %vm1708 = vcmp.lt.s32.totalorder %v1379, 0
        %v1709 = vand.u32 %v1379, 2139095040
        %v1710 = vshrl.u32 %v1709, 23
        %v1711 = vsub.s32 %v1710, 127
        %v1712 = vand.u32 2147483647, %v1379
        %v1713 = vand.u32 %v1712, 8388607
        %v1714 = vor.u32 %v1713, 8388608
        %v1715 = vsub.s32 0, %v1714
        %v1716 = vadd.s32 %v1711, 1
        %vm1717 = vcmp.gt.s32.totalorder %v1716, 0
        %v1718 = vsel %vm1717, %v1716, 0
        %v1719 = vshrl.u32 %v1718, 5
        %v1720 = vand.u32 %v1718, 31
        %v1721 = vsub.s32 32, %v1720
        %v1722 = vshrl.u32 683565275, %v1721
        %v1723 = vshll.u32 683565275, %v1720
        %v1724 = vshrl.u32 2475754826, %v1721
        %v1725 = vor.u32 %v1723, %v1724
        %v1726 = vshll.u32 2475754826, %v1720
        %v1727 = vshrl.u32 2131351028, %v1721
        %v1728 = vor.u32 %v1726, %v1727
        %v1729 = vshll.u32 2131351028, %v1720
        %v1730 = vshrl.u32 2102212464, %v1721
        %v1731 = vor.u32 %v1729, %v1730
        %v1732 = vshll.u32 2102212464, %v1720
        %v1733 = vshrl.u32 920167782, %v1721
        %v1734 = vor.u32 %v1732, %v1733
        %v1735 = vshll.u32 920167782, %v1720
        %v1736 = vshrl.u32 1326507024, %v1721
        %v1737 = vor.u32 %v1735, %v1736
        %vm1738 = vcmp.lt.s32.totalorder %v1719, 1
        %vm1739 = vcmp.lt.s32.totalorder %v1719, 2
        %vm1740 = vcmp.lt.s32.totalorder %v1719, 3
        %vm1741 = vcmp.lt.s32.totalorder %v1719, 4
        %v1742 = vsel %vm1738, %v1722, %v1725
        %v1743 = vsel %vm1741, %v1731, 2102212464
        %v1744 = vsel %vm1740, %v1728, %v1743
        %v1745 = vsel %vm1739, %v1742, %v1744
        %v1746 = vsel %vm1738, %v1725, %v1728
        %v1747 = vsel %vm1741, %v1734, 920167782
        %v1748 = vsel %vm1740, %v1731, %v1747
        %v1749 = vsel %vm1739, %v1746, %v1748
        %v1750 = vsel %vm1738, %v1728, %v1731
        %v1751 = vsel %vm1741, %v1737, 1326507024
        %v1752 = vsel %vm1740, %v1734, %v1751
        %v1753 = vsel %vm1739, %v1750, %v1752
        %v1754 = vshll.u32 %v1714, 8
        %v1755 = vand.u32 %v1754, 65535
        %v1756 = vshrl.u32 %v1754, 16
        %v1757 = vand.u32 %v1753, 65535
        %v1758 = vshrl.u32 %v1753, 16
        %v1759 = vmul.u32 %v1755, %v1757
        %v1760 = vmul.u32 %v1755, %v1758
        %v1761 = vmul.u32 %v1756, %v1757
        %v1762 = vmul.u32 %v1756, %v1758
        %v1763 = vshll.u32 %v1760, 16
        %v1764 = vshrl.u32 %v1760, 16
        %v1765 = vshll.u32 %v1761, 16
        %v1766 = vshrl.u32 %v1761, 16
        %vm1767 = vc.u32 %v1759, %v1763
        %v1768 = vsel %vm1767, 1, 0
        %v1769 = vadd.s32 %v1759, %v1763
        %v1770 = vadd.s32 %v1762, %v1768
        %vm1771 = vc.u32 %v1769, %v1765
        %v1772 = vsel %vm1771, 1, 0
        %v1773 = vadd.s32 %v1769, %v1765
        %v1774 = vadd.s32 %v1770, %v1772
        %v1775 = vadd.s32 %v1774, %v1764
        %v1776 = vadd.s32 %v1775, %v1766
        %v1777 = vand.u32 %v1754, 65535
        %v1778 = vshrl.u32 %v1754, 16
        %v1779 = vand.u32 %v1749, 65535
        %v1780 = vshrl.u32 %v1749, 16
        %v1781 = vmul.u32 %v1777, %v1779
        %v1782 = vmul.u32 %v1777, %v1780
        %v1783 = vmul.u32 %v1778, %v1779
        %v1784 = vmul.u32 %v1778, %v1780
        %v1785 = vshll.u32 %v1782, 16
        %v1786 = vshrl.u32 %v1782, 16
        %v1787 = vshll.u32 %v1783, 16
        %v1788 = vshrl.u32 %v1783, 16
        %vm1789 = vc.u32 %v1781, %v1785
        %v1790 = vsel %vm1789, 1, 0
        %v1791 = vadd.s32 %v1781, %v1785
        %v1792 = vadd.s32 %v1784, %v1790
        %vm1793 = vc.u32 %v1791, %v1787
        %v1794 = vsel %vm1793, 1, 0
        %v1795 = vadd.s32 %v1791, %v1787
        %v1796 = vadd.s32 %v1792, %v1794
        %v1797 = vadd.s32 %v1796, %v1786
        %v1798 = vadd.s32 %v1797, %v1788
        %v1799 = vmul.u32 %v1754, %v1745
        %v1800 = vadd.s32 %v1776, %v1795
        %vm1801 = vc.u32 %v1776, %v1795
        %v1802 = vadd.s32 %v1798, 1
        %v1803 = vsel %vm1801, %v1802, %v1798
        %v1804 = vadd.s32 %v1799, %v1803
        %v1805 = vadd.s32 %v1804, 536870912
        %v1806 = vshrl.u32 %v1805, 30
        %v1807 = vshll.u32 %v1806, 30
        %v1808 = vsub.s32 %v1804, %v1807
        %vm1809 = vcmp.lt.s32.totalorder %v1808, 0
        %v1810 = vsub.s32 0, %v1808
        %v1811 = vsel %vm1809, %v1810, %v1808
        %v1812 = vclz %v1811
        %v1813 = vsub.s32 %v1812, 2
        %vm1814 = vcmp.gt.s32.totalorder 0, %v1813
        %v1815 = vsel %vm1814, 0, %v1813
        %v1816 = vsub.s32 32, %v1815
        %v1817 = vshll.u32 %v1808, %v1815
        %v1818 = vshrl.u32 %v1800, %v1816
        %v1819 = vor.u32 %v1817, %v1818
        %v1820 = vsub.s32 4294967266, %v1815
        %v1821 = vadd.s32 %v1820, 127
        %v1822 = vshll.u32 %v1821, 23
        %v1823 = vor.u32 4788187, %v1822
        %v1824 = vand.u32 2147483647, %v1823
        %v1826 = vcvt.s32.f32 %v1819
        %v1827 = vmul.f32 %v1826, %v1824
        %v1828 = vxor.u32 %v1827, 2147483648
        %v1829 = vsel %vm1708, %v1828, %v1827
        %v1830 = vsub.s32 4, %v1806
        %v1831 = vsel %vm1708, %v1830, %v1806
        %v1832 = vsel %vm1707, %v1379, %v1829
        %v1833 = vsel %vm1707, 0, %v1831
        %v1834 = vmul.f32 %v1832, %v1832
        %v1835 = vmul.f32 %v1834, -0.001358992
        %v1836 = vadd.f32 %v1835, 0.041655596
        %v1837 = vmul.f32 %v1834, %v1836
        %v1838 = vadd.f32 %v1837, -0.4999988
        %v1839 = vmul.f32 %v1834, %v1838
        %v1840 = vadd.f32 1.0, %v1839
        %v1841 = vmul.f32 %v1832, %v1832
        %v1842 = vmul.f32 %v1841, -0.00019511016
        %v1843 = vadd.f32 %v1842, 0.008332121
        %v1844 = vmul.f32 %v1841, %v1843
        %v1845 = vadd.f32 %v1844, -0.16666654
        %v1846 = vmul.f32 %v1841, %v1845
        %v1847 = vadd.f32 %v1846, 1.0
        %v1848 = vmul.f32 %v1847, %v1832
        %vm1849 = vweird.f32 %v1379
        %v1850 = vadd.s32 %v1833, 3
        %v1851 = vand.u32 %v1850, 3
        %vm1852 = vcmp.lt.s32.totalorder %v1851, 2
        %vm1853 = vcmp.eq.s32.totalorder %v1851, 0
        %v1854 = vxor.u32 %v1848, 2147483648
        %v1855 = vsel %vm1853, %v1840, %v1854
        %vm1856 = vcmp.eq.s32.totalorder %v1851, 2
        %v1857 = vxor.u32 %v1840, 2147483648
        %v1858 = vsel %vm1856, %v1857, %v1848
        %v1859 = vsel %vm1852, %v1855, %v1858
        %v1860 = vsel %vm1849, nan, %v1859
        %v1861 = vand.u32 2147483647, %v1382
        %vm1862 = vcmp.le.f32.partialorder %v1861, 0.7853982
        %vm1863 = vcmp.lt.s32.totalorder %v1382, 0
        %v1864 = vand.u32 %v1382, 2139095040
        %v1865 = vshrl.u32 %v1864, 23
        %v1866 = vsub.s32 %v1865, 127
        %v1867 = vand.u32 2147483647, %v1382
        %v1868 = vand.u32 %v1867, 8388607
        %v1869 = vor.u32 %v1868, 8388608
        %v1870 = vsub.s32 0, %v1869
        %v1871 = vadd.s32 %v1866, 1
        %vm1872 = vcmp.gt.s32.totalorder %v1871, 0
        %v1873 = vsel %vm1872, %v1871, 0
        %v1874 = vshrl.u32 %v1873, 5
        %v1875 = vand.u32 %v1873, 31
        %v1876 = vsub.s32 32, %v1875
        %v1877 = vshrl.u32 683565275, %v1876
        %v1878 = vshll.u32 683565275, %v1875
        %v1879 = vshrl.u32 2475754826, %v1876
        %v1880 = vor.u32 %v1878, %v1879
        %v1881 = vshll.u32 2475754826, %v1875
        %v1882 = vshrl.u32 2131351028, %v1876
        %v1883 = vor.u32 %v1881, %v1882
        %v1884 = vshll.u32 2131351028, %v1875
        %v1885 = vshrl.u32 2102212464, %v1876
        %v1886 = vor.u32 %v1884, %v1885
        %v1887 = vshll.u32 2102212464, %v1875
        %v1888 = vshrl.u32 920167782, %v1876
        %v1889 = vor.u32 %v1887, %v1888
        %v1890 = vshll.u32 920167782, %v1875
        %v1891 = vshrl.u32 1326507024, %v1876
        %v1892 = vor.u32 %v1890, %v1891
        %vm1893 = vcmp.lt.s32.totalorder %v1874, 1
        %vm1894 = vcmp.lt.s32.totalorder %v1874, 2
        %vm1895 = vcmp.lt.s32.totalorder %v1874, 3
        %vm1896 = vcmp.lt.s32.totalorder %v1874, 4
        %v1897 = vsel %vm1893, %v1877, %v1880
        %v1898 = vsel %vm1896, %v1886, 2102212464
        %v1899 = vsel %vm1895, %v1883, %v1898
        %v1900 = vsel %vm1894, %v1897, %v1899
        %v1901 = vsel %vm1893, %v1880, %v1883
        %v1902 = vsel %vm1896, %v1889, 920167782
        %v1903 = vsel %vm1895, %v1886, %v1902
        %v1904 = vsel %vm1894, %v1901, %v1903
        %v1905 = vsel %vm1893, %v1883, %v1886
        %v1906 = vsel %vm1896, %v1892, 1326507024
        %v1907 = vsel %vm1895, %v1889, %v1906
        %v1908 = vsel %vm1894, %v1905, %v1907
        %v1909 = vshll.u32 %v1869, 8
        %v1910 = vand.u32 %v1909, 65535
        %v1911 = vshrl.u32 %v1909, 16
        %v1912 = vand.u32 %v1908, 65535
        %v1913 = vshrl.u32 %v1908, 16
        %v1914 = vmul.u32 %v1910, %v1912
        %v1915 = vmul.u32 %v1910, %v1913
        %v1916 = vmul.u32 %v1911, %v1912
        %v1917 = vmul.u32 %v1911, %v1913
        %v1918 = vshll.u32 %v1915, 16
        %v1919 = vshrl.u32 %v1915, 16
        %v1920 = vshll.u32 %v1916, 16
        %v1921 = vshrl.u32 %v1916, 16
        %vm1922 = vc.u32 %v1914, %v1918
        %v1923 = vsel %vm1922, 1, 0
        %v1924 = vadd.s32 %v1914, %v1918
        %v1925 = vadd.s32 %v1917, %v1923
        %vm1926 = vc.u32 %v1924, %v1920
        %v1927 = vsel %vm1926, 1, 0
        %v1928 = vadd.s32 %v1924, %v1920
        %v1929 = vadd.s32 %v1925, %v1927
        %v1930 = vadd.s32 %v1929, %v1919
        %v1931 = vadd.s32 %v1930, %v1921
        %v1932 = vand.u32 %v1909, 65535
        %v1933 = vshrl.u32 %v1909, 16
        %v1934 = vand.u32 %v1904, 65535
        %v1935 = vshrl.u32 %v1904, 16
        %v1936 = vmul.u32 %v1932, %v1934
        %v1937 = vmul.u32 %v1932, %v1935
        %v1938 = vmul.u32 %v1933, %v1934
        %v1939 = vmul.u32 %v1933, %v1935
        %v1940 = vshll.u32 %v1937, 16
        %v1941 = vshrl.u32 %v1937, 16
        %v1942 = vshll.u32 %v1938, 16
        %v1943 = vshrl.u32 %v1938, 16
        %vm1944 = vc.u32 %v1936, %v1940
        %v1945 = vsel %vm1944, 1, 0
        %v1946 = vadd.s32 %v1936, %v1940
        %v1947 = vadd.s32 %v1939, %v1945
        %vm1948 = vc.u32 %v1946, %v1942
        %v1949 = vsel %vm1948, 1, 0
        %v1950 = vadd.s32 %v1946, %v1942
        %v1951 = vadd.s32 %v1947, %v1949
        %v1952 = vadd.s32 %v1951, %v1941
        %v1953 = vadd.s32 %v1952, %v1943
        %v1954 = vmul.u32 %v1909, %v1900
        %v1955 = vadd.s32 %v1931, %v1950
        %vm1956 = vc.u32 %v1931, %v1950
        %v1957 = vadd.s32 %v1953, 1
        %v1958 = vsel %vm1956, %v1957, %v1953
        %v1959 = vadd.s32 %v1954, %v1958
        %v1960 = vadd.s32 %v1959, 536870912
        %v1961 = vshrl.u32 %v1960, 30
        %v1962 = vshll.u32 %v1961, 30
        %v1963 = vsub.s32 %v1959, %v1962
        %vm1964 = vcmp.lt.s32.totalorder %v1963, 0
        %v1965 = vsub.s32 0, %v1963
        %v1966 = vsel %vm1964, %v1965, %v1963
        %v1967 = vclz %v1966
        %v1968 = vsub.s32 %v1967, 2
        %vm1969 = vcmp.gt.s32.totalorder 0, %v1968
        %v1970 = vsel %vm1969, 0, %v1968
        %v1971 = vsub.s32 32, %v1970
        %v1972 = vshll.u32 %v1963, %v1970
        %v1973 = vshrl.u32 %v1955, %v1971
        %v1974 = vor.u32 %v1972, %v1973
        %v1975 = vsub.s32 4294967266, %v1970
        %v1976 = vadd.s32 %v1975, 127
        %v1977 = vshll.u32 %v1976, 23
        %v1978 = vor.u32 4788187, %v1977
        %v1979 = vand.u32 2147483647, %v1978
        %v1981 = vcvt.s32.f32 %v1974
        %v1982 = vmul.f32 %v1981, %v1979
        %v1983 = vxor.u32 %v1982, 2147483648
        %v1984 = vsel %vm1863, %v1983, %v1982
        %v1985 = vsub.s32 4, %v1961
        %v1986 = vsel %vm1863, %v1985, %v1961
        %v1987 = vsel %vm1862, %v1382, %v1984
        %v1988 = vsel %vm1862, 0, %v1986
        %v1989 = vmul.f32 %v1987, %v1987
        %v1990 = vmul.f32 %v1989, -0.001358992
        %v1991 = vadd.f32 %v1990, 0.041655596
        %v1992 = vmul.f32 %v1989, %v1991
        %v1993 = vadd.f32 %v1992, -0.4999988
        %v1994 = vmul.f32 %v1989, %v1993
        %v1995 = vadd.f32 1.0, %v1994
        %v1996 = vmul.f32 %v1987, %v1987
        %v1997 = vmul.f32 %v1996, -0.00019511016
        %v1998 = vadd.f32 %v1997, 0.008332121
        %v1999 = vmul.f32 %v1996, %v1998
        %v2000 = vadd.f32 %v1999, -0.16666654
        %v2001 = vmul.f32 %v1996, %v2000
        %v2002 = vadd.f32 %v2001, 1.0
        %v2003 = vmul.f32 %v2002, %v1987
        %vm2004 = vweird.f32 %v1382
        %v2005 = vadd.s32 %v1988, 3
        %v2006 = vand.u32 %v2005, 3
        %vm2007 = vcmp.lt.s32.totalorder %v2006, 2
        %vm2008 = vcmp.eq.s32.totalorder %v2006, 0
        %v2009 = vxor.u32 %v2003, 2147483648
        %v2010 = vsel %vm2008, %v1995, %v2009
        %vm2011 = vcmp.eq.s32.totalorder %v2006, 2
        %v2012 = vxor.u32 %v1995, 2147483648
        %v2013 = vsel %vm2011, %v2012, %v2003
        %v2014 = vsel %vm2007, %v2010, %v2013
        %v2015 = vsel %vm2004, nan, %v2014
        %v2016 = vand.u32 2147483647, %v1385
        %vm2017 = vcmp.le.f32.partialorder %v2016, 0.7853982
        %vm2018 = vcmp.lt.s32.totalorder %v1385, 0
        %v2019 = vand.u32 %v1385, 2139095040
        %v2020 = vshrl.u32 %v2019, 23
        %v2021 = vsub.s32 %v2020, 127
        %v2022 = vand.u32 2147483647, %v1385
        %v2023 = vand.u32 %v2022, 8388607
        %v2024 = vor.u32 %v2023, 8388608
        %v2025 = vsub.s32 0, %v2024
        %v2026 = vadd.s32 %v2021, 1
        %vm2027 = vcmp.gt.s32.totalorder %v2026, 0
        %v2028 = vsel %vm2027, %v2026, 0
        %v2029 = vshrl.u32 %v2028, 5
        %v2030 = vand.u32 %v2028, 31
        %v2031 = vsub.s32 32, %v2030
        %v2032 = vshrl.u32 683565275, %v2031
        %v2033 = vshll.u32 683565275, %v2030
        %v2034 = vshrl.u32 2475754826, %v2031
        %v2035 = vor.u32 %v2033, %v2034
        %v2036 = vshll.u32 2475754826, %v2030
        %v2037 = vshrl.u32 2131351028, %v2031
        %v2038 = vor.u32 %v2036, %v2037
        %v2039 = vshll.u32 2131351028, %v2030
        %v2040 = vshrl.u32 2102212464, %v2031
        %v2041 = vor.u32 %v2039, %v2040
        %v2042 = vshll.u32 2102212464, %v2030
        %v2043 = vshrl.u32 920167782, %v2031
        %v2044 = vor.u32 %v2042, %v2043
        %v2045 = vshll.u32 920167782, %v2030
        %v2046 = vshrl.u32 1326507024, %v2031
        %v2047 = vor.u32 %v2045, %v2046
        %vm2048 = vcmp.lt.s32.totalorder %v2029, 1
        %vm2049 = vcmp.lt.s32.totalorder %v2029, 2
        %vm2050 = vcmp.lt.s32.totalorder %v2029, 3
        %vm2051 = vcmp.lt.s32.totalorder %v2029, 4
        %v2052 = vsel %vm2048, %v2032, %v2035
        %v2053 = vsel %vm2051, %v2041, 2102212464
        %v2054 = vsel %vm2050, %v2038, %v2053
        %v2055 = vsel %vm2049, %v2052, %v2054
        %v2056 = vsel %vm2048, %v2035, %v2038
        %v2057 = vsel %vm2051, %v2044, 920167782
        %v2058 = vsel %vm2050, %v2041, %v2057
        %v2059 = vsel %vm2049, %v2056, %v2058
        %v2060 = vsel %vm2048, %v2038, %v2041
        %v2061 = vsel %vm2051, %v2047, 1326507024
        %v2062 = vsel %vm2050, %v2044, %v2061
        %v2063 = vsel %vm2049, %v2060, %v2062
        %v2064 = vshll.u32 %v2024, 8
        %v2065 = vand.u32 %v2064, 65535
        %v2066 = vshrl.u32 %v2064, 16
        %v2067 = vand.u32 %v2063, 65535
        %v2068 = vshrl.u32 %v2063, 16
        %v2069 = vmul.u32 %v2065, %v2067
        %v2070 = vmul.u32 %v2065, %v2068
        %v2071 = vmul.u32 %v2066, %v2067
        %v2072 = vmul.u32 %v2066, %v2068
        %v2073 = vshll.u32 %v2070, 16
        %v2074 = vshrl.u32 %v2070, 16
        %v2075 = vshll.u32 %v2071, 16
        %v2076 = vshrl.u32 %v2071, 16
        %vm2077 = vc.u32 %v2069, %v2073
        %v2078 = vsel %vm2077, 1, 0
        %v2079 = vadd.s32 %v2069, %v2073
        %v2080 = vadd.s32 %v2072, %v2078
        %vm2081 = vc.u32 %v2079, %v2075
        %v2082 = vsel %vm2081, 1, 0
        %v2083 = vadd.s32 %v2079, %v2075
        %v2084 = vadd.s32 %v2080, %v2082
        %v2085 = vadd.s32 %v2084, %v2074
        %v2086 = vadd.s32 %v2085, %v2076
        %v2087 = vand.u32 %v2064, 65535
        %v2088 = vshrl.u32 %v2064, 16
        %v2089 = vand.u32 %v2059, 65535
        %v2090 = vshrl.u32 %v2059, 16
        %v2091 = vmul.u32 %v2087, %v2089
        %v2092 = vmul.u32 %v2087, %v2090
        %v2093 = vmul.u32 %v2088, %v2089
        %v2094 = vmul.u32 %v2088, %v2090
        %v2095 = vshll.u32 %v2092, 16
        %v2096 = vshrl.u32 %v2092, 16
        %v2097 = vshll.u32 %v2093, 16
        %v2098 = vshrl.u32 %v2093, 16
        %vm2099 = vc.u32 %v2091, %v2095
        %v2100 = vsel %vm2099, 1, 0
        %v2101 = vadd.s32 %v2091, %v2095
        %v2102 = vadd.s32 %v2094, %v2100
        %vm2103 = vc.u32 %v2101, %v2097
        %v2104 = vsel %vm2103, 1, 0
        %v2105 = vadd.s32 %v2101, %v2097
        %v2106 = vadd.s32 %v2102, %v2104
        %v2107 = vadd.s32 %v2106, %v2096
        %v2108 = vadd.s32 %v2107, %v2098
        %v2109 = vmul.u32 %v2064, %v2055
        %v2110 = vadd.s32 %v2086, %v2105
        %vm2111 = vc.u32 %v2086, %v2105
        %v2112 = vadd.s32 %v2108, 1
        %v2113 = vsel %vm2111, %v2112, %v2108
        %v2114 = vadd.s32 %v2109, %v2113
        %v2115 = vadd.s32 %v2114, 536870912
        %v2116 = vshrl.u32 %v2115, 30
        %v2117 = vshll.u32 %v2116, 30
        %v2118 = vsub.s32 %v2114, %v2117
        %vm2119 = vcmp.lt.s32.totalorder %v2118, 0
        %v2120 = vsub.s32 0, %v2118
        %v2121 = vsel %vm2119, %v2120, %v2118
        %v2122 = vclz %v2121
        %v2123 = vsub.s32 %v2122, 2
        %vm2124 = vcmp.gt.s32.totalorder 0, %v2123
        %v2125 = vsel %vm2124, 0, %v2123
        %v2126 = vsub.s32 32, %v2125
        %v2127 = vshll.u32 %v2118, %v2125
        %v2128 = vshrl.u32 %v2110, %v2126
        %v2129 = vor.u32 %v2127, %v2128
        %v2130 = vsub.s32 4294967266, %v2125
        %v2131 = vadd.s32 %v2130, 127
        %v2132 = vshll.u32 %v2131, 23
        %v2133 = vor.u32 4788187, %v2132
        %v2134 = vand.u32 2147483647, %v2133
        %v2136 = vcvt.s32.f32 %v2129
        %v2137 = vmul.f32 %v2136, %v2134
        %v2138 = vxor.u32 %v2137, 2147483648
        %v2139 = vsel %vm2018, %v2138, %v2137
        %v2140 = vsub.s32 4, %v2116
        %v2141 = vsel %vm2018, %v2140, %v2116
        %v2142 = vsel %vm2017, %v1385, %v2139
        %v2143 = vsel %vm2017, 0, %v2141
        %v2144 = vmul.f32 %v2142, %v2142
        %v2145 = vmul.f32 %v2144, -0.001358992
        %v2146 = vadd.f32 %v2145, 0.041655596
        %v2147 = vmul.f32 %v2144, %v2146
        %v2148 = vadd.f32 %v2147, -0.4999988
        %v2149 = vmul.f32 %v2144, %v2148
        %v2150 = vadd.f32 1.0, %v2149
        %v2151 = vmul.f32 %v2142, %v2142
        %v2152 = vmul.f32 %v2151, -0.00019511016
        %v2153 = vadd.f32 %v2152, 0.008332121
        %v2154 = vmul.f32 %v2151, %v2153
        %v2155 = vadd.f32 %v2154, -0.16666654
        %v2156 = vmul.f32 %v2151, %v2155
        %v2157 = vadd.f32 %v2156, 1.0
        %v2158 = vmul.f32 %v2157, %v2142
        %vm2159 = vweird.f32 %v1385
        %v2160 = vadd.s32 %v2143, 3
        %v2161 = vand.u32 %v2160, 3
        %vm2162 = vcmp.lt.s32.totalorder %v2161, 2
        %vm2163 = vcmp.eq.s32.totalorder %v2161, 0
        %v2164 = vxor.u32 %v2158, 2147483648
        %v2165 = vsel %vm2163, %v2150, %v2164
        %vm2166 = vcmp.eq.s32.totalorder %v2161, 2
        %v2167 = vxor.u32 %v2150, 2147483648
        %v2168 = vsel %vm2166, %v2167, %v2158
        %v2169 = vsel %vm2162, %v2165, %v2168
        %v2170 = vsel %vm2159, nan, %v2169
        %v2171 = vand.u32 2147483647, %v1388
        %vm2172 = vcmp.le.f32.partialorder %v2171, 0.7853982
        %vm2173 = vcmp.lt.s32.totalorder %v1388, 0
        %v2174 = vand.u32 %v1388, 2139095040
        %v2175 = vshrl.u32 %v2174, 23
        %v2176 = vsub.s32 %v2175, 127
        %v2177 = vand.u32 2147483647, %v1388
        %v2178 = vand.u32 %v2177, 8388607
        %v2179 = vor.u32 %v2178, 8388608
        %v2180 = vsub.s32 0, %v2179
        %v2181 = vadd.s32 %v2176, 1
        %vm2182 = vcmp.gt.s32.totalorder %v2181, 0
        %v2183 = vsel %vm2182, %v2181, 0
        %v2184 = vshrl.u32 %v2183, 5
        %v2185 = vand.u32 %v2183, 31
        %v2186 = vsub.s32 32, %v2185
        %v2187 = vshrl.u32 683565275, %v2186
        %v2188 = vshll.u32 683565275, %v2185
        %v2189 = vshrl.u32 2475754826, %v2186
        %v2190 = vor.u32 %v2188, %v2189
        %v2191 = vshll.u32 2475754826, %v2185
        %v2192 = vshrl.u32 2131351028, %v2186
        %v2193 = vor.u32 %v2191, %v2192
        %v2194 = vshll.u32 2131351028, %v2185
        %v2195 = vshrl.u32 2102212464, %v2186
        %v2196 = vor.u32 %v2194, %v2195
        %v2197 = vshll.u32 2102212464, %v2185
        %v2198 = vshrl.u32 920167782, %v2186
        %v2199 = vor.u32 %v2197, %v2198
        %v2200 = vshll.u32 920167782, %v2185
        %v2201 = vshrl.u32 1326507024, %v2186
        %v2202 = vor.u32 %v2200, %v2201
        %vm2203 = vcmp.lt.s32.totalorder %v2184, 1
        %vm2204 = vcmp.lt.s32.totalorder %v2184, 2
        %vm2205 = vcmp.lt.s32.totalorder %v2184, 3
        %vm2206 = vcmp.lt.s32.totalorder %v2184, 4
        %v2207 = vsel %vm2203, %v2187, %v2190
        %v2208 = vsel %vm2206, %v2196, 2102212464
        %v2209 = vsel %vm2205, %v2193, %v2208
        %v2210 = vsel %vm2204, %v2207, %v2209
        %v2211 = vsel %vm2203, %v2190, %v2193
        %v2212 = vsel %vm2206, %v2199, 920167782
        %v2213 = vsel %vm2205, %v2196, %v2212
        %v2214 = vsel %vm2204, %v2211, %v2213
        %v2215 = vsel %vm2203, %v2193, %v2196
        %v2216 = vsel %vm2206, %v2202, 1326507024
        %v2217 = vsel %vm2205, %v2199, %v2216
        %v2218 = vsel %vm2204, %v2215, %v2217
        %v2219 = vshll.u32 %v2179, 8
        %v2220 = vand.u32 %v2219, 65535
        %v2221 = vshrl.u32 %v2219, 16
        %v2222 = vand.u32 %v2218, 65535
        %v2223 = vshrl.u32 %v2218, 16
        %v2224 = vmul.u32 %v2220, %v2222
        %v2225 = vmul.u32 %v2220, %v2223
        %v2226 = vmul.u32 %v2221, %v2222
        %v2227 = vmul.u32 %v2221, %v2223
        %v2228 = vshll.u32 %v2225, 16
        %v2229 = vshrl.u32 %v2225, 16
        %v2230 = vshll.u32 %v2226, 16
        %v2231 = vshrl.u32 %v2226, 16
        %vm2232 = vc.u32 %v2224, %v2228
        %v2233 = vsel %vm2232, 1, 0
        %v2234 = vadd.s32 %v2224, %v2228
        %v2235 = vadd.s32 %v2227, %v2233
        %vm2236 = vc.u32 %v2234, %v2230
        %v2237 = vsel %vm2236, 1, 0
        %v2238 = vadd.s32 %v2234, %v2230
        %v2239 = vadd.s32 %v2235, %v2237
        %v2240 = vadd.s32 %v2239, %v2229
        %v2241 = vadd.s32 %v2240, %v2231
        %v2242 = vand.u32 %v2219, 65535
        %v2243 = vshrl.u32 %v2219, 16
        %v2244 = vand.u32 %v2214, 65535
        %v2245 = vshrl.u32 %v2214, 16
        %v2246 = vmul.u32 %v2242, %v2244
        %v2247 = vmul.u32 %v2242, %v2245
        %v2248 = vmul.u32 %v2243, %v2244
        %v2249 = vmul.u32 %v2243, %v2245
        %v2250 = vshll.u32 %v2247, 16
        %v2251 = vshrl.u32 %v2247, 16
        %v2252 = vshll.u32 %v2248, 16
        %v2253 = vshrl.u32 %v2248, 16
        %vm2254 = vc.u32 %v2246, %v2250
        %v2255 = vsel %vm2254, 1, 0
        %v2256 = vadd.s32 %v2246, %v2250
        %v2257 = vadd.s32 %v2249, %v2255
        %vm2258 = vc.u32 %v2256, %v2252
        %v2259 = vsel %vm2258, 1, 0
        %v2260 = vadd.s32 %v2256, %v2252
        %v2261 = vadd.s32 %v2257, %v2259
        %v2262 = vadd.s32 %v2261, %v2251
        %v2263 = vadd.s32 %v2262, %v2253
        %v2264 = vmul.u32 %v2219, %v2210
        %v2265 = vadd.s32 %v2241, %v2260
        %vm2266 = vc.u32 %v2241, %v2260
        %v2267 = vadd.s32 %v2263, 1
        %v2268 = vsel %vm2266, %v2267, %v2263
        %v2269 = vadd.s32 %v2264, %v2268
        %v2270 = vadd.s32 %v2269, 536870912
        %v2271 = vshrl.u32 %v2270, 30
        %v2272 = vshll.u32 %v2271, 30
        %v2273 = vsub.s32 %v2269, %v2272
        %vm2274 = vcmp.lt.s32.totalorder %v2273, 0
        %v2275 = vsub.s32 0, %v2273
        %v2276 = vsel %vm2274, %v2275, %v2273
        %v2277 = vclz %v2276
        %v2278 = vsub.s32 %v2277, 2
        %vm2279 = vcmp.gt.s32.totalorder 0, %v2278
        %v2280 = vsel %vm2279, 0, %v2278
        %v2281 = vsub.s32 32, %v2280
        %v2282 = vshll.u32 %v2273, %v2280
        %v2283 = vshrl.u32 %v2265, %v2281
        %v2284 = vor.u32 %v2282, %v2283
        %v2285 = vsub.s32 4294967266, %v2280
        %v2286 = vadd.s32 %v2285, 127
        %v2287 = vshll.u32 %v2286, 23
        %v2288 = vor.u32 4788187, %v2287
        %v2289 = vand.u32 2147483647, %v2288
        %v2291 = vcvt.s32.f32 %v2284
        %v2292 = vmul.f32 %v2291, %v2289
        %v2293 = vxor.u32 %v2292, 2147483648
        %v2294 = vsel %vm2173, %v2293, %v2292
        %v2295 = vsub.s32 4, %v2271
        %v2296 = vsel %vm2173, %v2295, %v2271
        %v2297 = vsel %vm2172, %v1388, %v2294
        %v2298 = vsel %vm2172, 0, %v2296
        %v2299 = vmul.f32 %v2297, %v2297
        %v2300 = vmul.f32 %v2299, -0.001358992
        %v2301 = vadd.f32 %v2300, 0.041655596
        %v2302 = vmul.f32 %v2299, %v2301
        %v2303 = vadd.f32 %v2302, -0.4999988
        %v2304 = vmul.f32 %v2299, %v2303
        %v2305 = vadd.f32 1.0, %v2304
        %v2306 = vmul.f32 %v2297, %v2297
        %v2307 = vmul.f32 %v2306, -0.00019511016
        %v2308 = vadd.f32 %v2307, 0.008332121
        %v2309 = vmul.f32 %v2306, %v2308
        %v2310 = vadd.f32 %v2309, -0.16666654
        %v2311 = vmul.f32 %v2306, %v2310
        %v2312 = vadd.f32 %v2311, 1.0
        %v2313 = vmul.f32 %v2312, %v2297
        %vm2314 = vweird.f32 %v1388
        %v2315 = vadd.s32 %v2298, 3
        %v2316 = vand.u32 %v2315, 3
        %vm2317 = vcmp.lt.s32.totalorder %v2316, 2
        %vm2318 = vcmp.eq.s32.totalorder %v2316, 0
        %v2319 = vxor.u32 %v2313, 2147483648
        %v2320 = vsel %vm2318, %v2305, %v2319
        %vm2321 = vcmp.eq.s32.totalorder %v2316, 2
        %v2322 = vxor.u32 %v2305, 2147483648
        %v2323 = vsel %vm2321, %v2322, %v2313
        %v2324 = vsel %vm2317, %v2320, %v2323
        %v2325 = vsel %vm2314, nan, %v2324
        %v2326 = vand.u32 2147483647, %v1391
        %vm2327 = vcmp.le.f32.partialorder %v2326, 0.7853982
        %vm2328 = vcmp.lt.s32.totalorder %v1391, 0
        %v2329 = vand.u32 %v1391, 2139095040
        %v2330 = vshrl.u32 %v2329, 23
        %v2331 = vsub.s32 %v2330, 127
        %v2332 = vand.u32 2147483647, %v1391
        %v2333 = vand.u32 %v2332, 8388607
        %v2334 = vor.u32 %v2333, 8388608
        %v2335 = vsub.s32 0, %v2334
        %v2336 = vadd.s32 %v2331, 1
        %vm2337 = vcmp.gt.s32.totalorder %v2336, 0
        %v2338 = vsel %vm2337, %v2336, 0
        %v2339 = vshrl.u32 %v2338, 5
        %v2340 = vand.u32 %v2338, 31
        %v2341 = vsub.s32 32, %v2340
        %v2342 = vshrl.u32 683565275, %v2341
        %v2343 = vshll.u32 683565275, %v2340
        %v2344 = vshrl.u32 2475754826, %v2341
        %v2345 = vor.u32 %v2343, %v2344
        %v2346 = vshll.u32 2475754826, %v2340
        %v2347 = vshrl.u32 2131351028, %v2341
        %v2348 = vor.u32 %v2346, %v2347
        %v2349 = vshll.u32 2131351028, %v2340
        %v2350 = vshrl.u32 2102212464, %v2341
        %v2351 = vor.u32 %v2349, %v2350
        %v2352 = vshll.u32 2102212464, %v2340
        %v2353 = vshrl.u32 920167782, %v2341
        %v2354 = vor.u32 %v2352, %v2353
        %v2355 = vshll.u32 920167782, %v2340
        %v2356 = vshrl.u32 1326507024, %v2341
        %v2357 = vor.u32 %v2355, %v2356
        %vm2358 = vcmp.lt.s32.totalorder %v2339, 1
        %vm2359 = vcmp.lt.s32.totalorder %v2339, 2
        %vm2360 = vcmp.lt.s32.totalorder %v2339, 3
        %vm2361 = vcmp.lt.s32.totalorder %v2339, 4
        %v2362 = vsel %vm2358, %v2342, %v2345
        %v2363 = vsel %vm2361, %v2351, 2102212464
        %v2364 = vsel %vm2360, %v2348, %v2363
        %v2365 = vsel %vm2359, %v2362, %v2364
        %v2366 = vsel %vm2358, %v2345, %v2348
        %v2367 = vsel %vm2361, %v2354, 920167782
        %v2368 = vsel %vm2360, %v2351, %v2367
        %v2369 = vsel %vm2359, %v2366, %v2368
        %v2370 = vsel %vm2358, %v2348, %v2351
        %v2371 = vsel %vm2361, %v2357, 1326507024
        %v2372 = vsel %vm2360, %v2354, %v2371
        %v2373 = vsel %vm2359, %v2370, %v2372
        %v2374 = vshll.u32 %v2334, 8
        %v2375 = vand.u32 %v2374, 65535
        %v2376 = vshrl.u32 %v2374, 16
        %v2377 = vand.u32 %v2373, 65535
        %v2378 = vshrl.u32 %v2373, 16
        %v2379 = vmul.u32 %v2375, %v2377
        %v2380 = vmul.u32 %v2375, %v2378
        %v2381 = vmul.u32 %v2376, %v2377
        %v2382 = vmul.u32 %v2376, %v2378
        %v2383 = vshll.u32 %v2380, 16
        %v2384 = vshrl.u32 %v2380, 16
        %v2385 = vshll.u32 %v2381, 16
        %v2386 = vshrl.u32 %v2381, 16
        %vm2387 = vc.u32 %v2379, %v2383
        %v2388 = vsel %vm2387, 1, 0
        %v2389 = vadd.s32 %v2379, %v2383
        %v2390 = vadd.s32 %v2382, %v2388
        %vm2391 = vc.u32 %v2389, %v2385
        %v2392 = vsel %vm2391, 1, 0
        %v2393 = vadd.s32 %v2389, %v2385
        %v2394 = vadd.s32 %v2390, %v2392
        %v2395 = vadd.s32 %v2394, %v2384
        %v2396 = vadd.s32 %v2395, %v2386
        %v2397 = vand.u32 %v2374, 65535
        %v2398 = vshrl.u32 %v2374, 16
        %v2399 = vand.u32 %v2369, 65535
        %v2400 = vshrl.u32 %v2369, 16
        %v2401 = vmul.u32 %v2397, %v2399
        %v2402 = vmul.u32 %v2397, %v2400
        %v2403 = vmul.u32 %v2398, %v2399
        %v2404 = vmul.u32 %v2398, %v2400
        %v2405 = vshll.u32 %v2402, 16
        %v2406 = vshrl.u32 %v2402, 16
        %v2407 = vshll.u32 %v2403, 16
        %v2408 = vshrl.u32 %v2403, 16
        %vm2409 = vc.u32 %v2401, %v2405
        %v2410 = vsel %vm2409, 1, 0
        %v2411 = vadd.s32 %v2401, %v2405
        %v2412 = vadd.s32 %v2404, %v2410
        %vm2413 = vc.u32 %v2411, %v2407
        %v2414 = vsel %vm2413, 1, 0
        %v2415 = vadd.s32 %v2411, %v2407
        %v2416 = vadd.s32 %v2412, %v2414
        %v2417 = vadd.s32 %v2416, %v2406
        %v2418 = vadd.s32 %v2417, %v2408
        %v2419 = vmul.u32 %v2374, %v2365
        %v2420 = vadd.s32 %v2396, %v2415
        %vm2421 = vc.u32 %v2396, %v2415
        %v2422 = vadd.s32 %v2418, 1
        %v2423 = vsel %vm2421, %v2422, %v2418
        %v2424 = vadd.s32 %v2419, %v2423
        %v2425 = vadd.s32 %v2424, 536870912
        %v2426 = vshrl.u32 %v2425, 30
        %v2427 = vshll.u32 %v2426, 30
        %v2428 = vsub.s32 %v2424, %v2427
        %vm2429 = vcmp.lt.s32.totalorder %v2428, 0
        %v2430 = vsub.s32 0, %v2428
        %v2431 = vsel %vm2429, %v2430, %v2428
        %v2432 = vclz %v2431
        %v2433 = vsub.s32 %v2432, 2
        %vm2434 = vcmp.gt.s32.totalorder 0, %v2433
        %v2435 = vsel %vm2434, 0, %v2433
        %v2436 = vsub.s32 32, %v2435
        %v2437 = vshll.u32 %v2428, %v2435
        %v2438 = vshrl.u32 %v2420, %v2436
        %v2439 = vor.u32 %v2437, %v2438
        %v2440 = vsub.s32 4294967266, %v2435
        %v2441 = vadd.s32 %v2440, 127
        %v2442 = vshll.u32 %v2441, 23
        %v2443 = vor.u32 4788187, %v2442
        %v2444 = vand.u32 2147483647, %v2443
        %v2446 = vcvt.s32.f32 %v2439
        %v2447 = vmul.f32 %v2446, %v2444
        %v2448 = vxor.u32 %v2447, 2147483648
        %v2449 = vsel %vm2328, %v2448, %v2447
        %v2450 = vsub.s32 4, %v2426
        %v2451 = vsel %vm2328, %v2450, %v2426
        %v2452 = vsel %vm2327, %v1391, %v2449
        %v2453 = vsel %vm2327, 0, %v2451
        %v2454 = vmul.f32 %v2452, %v2452
        %v2455 = vmul.f32 %v2454, -0.001358992
        %v2456 = vadd.f32 %v2455, 0.041655596
        %v2457 = vmul.f32 %v2454, %v2456
        %v2458 = vadd.f32 %v2457, -0.4999988
        %v2459 = vmul.f32 %v2454, %v2458
        %v2460 = vadd.f32 1.0, %v2459
        %v2461 = vmul.f32 %v2452, %v2452
        %v2462 = vmul.f32 %v2461, -0.00019511016
        %v2463 = vadd.f32 %v2462, 0.008332121
        %v2464 = vmul.f32 %v2461, %v2463
        %v2465 = vadd.f32 %v2464, -0.16666654
        %v2466 = vmul.f32 %v2461, %v2465
        %v2467 = vadd.f32 %v2466, 1.0
        %v2468 = vmul.f32 %v2467, %v2452
        %vm2469 = vweird.f32 %v1391
        %v2470 = vadd.s32 %v2453, 3
        %v2471 = vand.u32 %v2470, 3
        %vm2472 = vcmp.lt.s32.totalorder %v2471, 2
        %vm2473 = vcmp.eq.s32.totalorder %v2471, 0
        %v2474 = vxor.u32 %v2468, 2147483648
        %v2475 = vsel %vm2473, %v2460, %v2474
        %vm2476 = vcmp.eq.s32.totalorder %v2471, 2
        %v2477 = vxor.u32 %v2460, 2147483648
        %v2478 = vsel %vm2476, %v2477, %v2468
        %v2479 = vsel %vm2472, %v2475, %v2478
        %v2480 = vsel %vm2469, nan, %v2479
        %v2481 = vand.u32 2147483647, %v1394
        %vm2482 = vcmp.le.f32.partialorder %v2481, 0.7853982
        %vm2483 = vcmp.lt.s32.totalorder %v1394, 0
        %v2484 = vand.u32 %v1394, 2139095040
        %v2485 = vshrl.u32 %v2484, 23
        %v2486 = vsub.s32 %v2485, 127
        %v2487 = vand.u32 2147483647, %v1394
        %v2488 = vand.u32 %v2487, 8388607
        %v2489 = vor.u32 %v2488, 8388608
        %v2490 = vsub.s32 0, %v2489
        %v2491 = vadd.s32 %v2486, 1
        %vm2492 = vcmp.gt.s32.totalorder %v2491, 0
        %v2493 = vsel %vm2492, %v2491, 0
        %v2494 = vshrl.u32 %v2493, 5
        %v2495 = vand.u32 %v2493, 31
        %v2496 = vsub.s32 32, %v2495
        %v2497 = vshrl.u32 683565275, %v2496
        %v2498 = vshll.u32 683565275, %v2495
        %v2499 = vshrl.u32 2475754826, %v2496
        %v2500 = vor.u32 %v2498, %v2499
        %v2501 = vshll.u32 2475754826, %v2495
        %v2502 = vshrl.u32 2131351028, %v2496
        %v2503 = vor.u32 %v2501, %v2502
        %v2504 = vshll.u32 2131351028, %v2495
        %v2505 = vshrl.u32 2102212464, %v2496
        %v2506 = vor.u32 %v2504, %v2505
        %v2507 = vshll.u32 2102212464, %v2495
        %v2508 = vshrl.u32 920167782, %v2496
        %v2509 = vor.u32 %v2507, %v2508
        %v2510 = vshll.u32 920167782, %v2495
        %v2511 = vshrl.u32 1326507024, %v2496
        %v2512 = vor.u32 %v2510, %v2511
        %vm2513 = vcmp.lt.s32.totalorder %v2494, 1
        %vm2514 = vcmp.lt.s32.totalorder %v2494, 2
        %vm2515 = vcmp.lt.s32.totalorder %v2494, 3
        %vm2516 = vcmp.lt.s32.totalorder %v2494, 4
        %v2517 = vsel %vm2513, %v2497, %v2500
        %v2518 = vsel %vm2516, %v2506, 2102212464
        %v2519 = vsel %vm2515, %v2503, %v2518
        %v2520 = vsel %vm2514, %v2517, %v2519
        %v2521 = vsel %vm2513, %v2500, %v2503
        %v2522 = vsel %vm2516, %v2509, 920167782
        %v2523 = vsel %vm2515, %v2506, %v2522
        %v2524 = vsel %vm2514, %v2521, %v2523
        %v2525 = vsel %vm2513, %v2503, %v2506
        %v2526 = vsel %vm2516, %v2512, 1326507024
        %v2527 = vsel %vm2515, %v2509, %v2526
        %v2528 = vsel %vm2514, %v2525, %v2527
        %v2529 = vshll.u32 %v2489, 8
        %v2530 = vand.u32 %v2529, 65535
        %v2531 = vshrl.u32 %v2529, 16
        %v2532 = vand.u32 %v2528, 65535
        %v2533 = vshrl.u32 %v2528, 16
        %v2534 = vmul.u32 %v2530, %v2532
        %v2535 = vmul.u32 %v2530, %v2533
        %v2536 = vmul.u32 %v2531, %v2532
        %v2537 = vmul.u32 %v2531, %v2533
        %v2538 = vshll.u32 %v2535, 16
        %v2539 = vshrl.u32 %v2535, 16
        %v2540 = vshll.u32 %v2536, 16
        %v2541 = vshrl.u32 %v2536, 16
        %vm2542 = vc.u32 %v2534, %v2538
        %v2543 = vsel %vm2542, 1, 0
        %v2544 = vadd.s32 %v2534, %v2538
        %v2545 = vadd.s32 %v2537, %v2543
        %vm2546 = vc.u32 %v2544, %v2540
        %v2547 = vsel %vm2546, 1, 0
        %v2548 = vadd.s32 %v2544, %v2540
        %v2549 = vadd.s32 %v2545, %v2547
        %v2550 = vadd.s32 %v2549, %v2539
        %v2551 = vadd.s32 %v2550, %v2541
        %v2552 = vand.u32 %v2529, 65535
        %v2553 = vshrl.u32 %v2529, 16
        %v2554 = vand.u32 %v2524, 65535
        %v2555 = vshrl.u32 %v2524, 16
        %v2556 = vmul.u32 %v2552, %v2554
        %v2557 = vmul.u32 %v2552, %v2555
        %v2558 = vmul.u32 %v2553, %v2554
        %v2559 = vmul.u32 %v2553, %v2555
        %v2560 = vshll.u32 %v2557, 16
        %v2561 = vshrl.u32 %v2557, 16
        %v2562 = vshll.u32 %v2558, 16
        %v2563 = vshrl.u32 %v2558, 16
        %vm2564 = vc.u32 %v2556, %v2560
        %v2565 = vsel %vm2564, 1, 0
        %v2566 = vadd.s32 %v2556, %v2560
        %v2567 = vadd.s32 %v2559, %v2565
        %vm2568 = vc.u32 %v2566, %v2562
        %v2569 = vsel %vm2568, 1, 0
        %v2570 = vadd.s32 %v2566, %v2562
        %v2571 = vadd.s32 %v2567, %v2569
        %v2572 = vadd.s32 %v2571, %v2561
        %v2573 = vadd.s32 %v2572, %v2563
        %v2574 = vmul.u32 %v2529, %v2520
        %v2575 = vadd.s32 %v2551, %v2570
        %vm2576 = vc.u32 %v2551, %v2570
        %v2577 = vadd.s32 %v2573, 1
        %v2578 = vsel %vm2576, %v2577, %v2573
        %v2579 = vadd.s32 %v2574, %v2578
        %v2580 = vadd.s32 %v2579, 536870912
        %v2581 = vshrl.u32 %v2580, 30
        %v2582 = vshll.u32 %v2581, 30
        %v2583 = vsub.s32 %v2579, %v2582
        %vm2584 = vcmp.lt.s32.totalorder %v2583, 0
        %v2585 = vsub.s32 0, %v2583
        %v2586 = vsel %vm2584, %v2585, %v2583
        %v2587 = vclz %v2586
        %v2588 = vsub.s32 %v2587, 2
        %vm2589 = vcmp.gt.s32.totalorder 0, %v2588
        %v2590 = vsel %vm2589, 0, %v2588
        %v2591 = vsub.s32 32, %v2590
        %v2592 = vshll.u32 %v2583, %v2590
        %v2593 = vshrl.u32 %v2575, %v2591
        %v2594 = vor.u32 %v2592, %v2593
        %v2595 = vsub.s32 4294967266, %v2590
        %v2596 = vadd.s32 %v2595, 127
        %v2597 = vshll.u32 %v2596, 23
        %v2598 = vor.u32 4788187, %v2597
        %v2599 = vand.u32 2147483647, %v2598
        %v2601 = vcvt.s32.f32 %v2594
        %v2602 = vmul.f32 %v2601, %v2599
        %v2603 = vxor.u32 %v2602, 2147483648
        %v2604 = vsel %vm2483, %v2603, %v2602
        %v2605 = vsub.s32 4, %v2581
        %v2606 = vsel %vm2483, %v2605, %v2581
        %v2607 = vsel %vm2482, %v1394, %v2604
        %v2608 = vsel %vm2482, 0, %v2606
        %v2609 = vmul.f32 %v2607, %v2607
        %v2610 = vmul.f32 %v2609, -0.001358992
        %v2611 = vadd.f32 %v2610, 0.041655596
        %v2612 = vmul.f32 %v2609, %v2611
        %v2613 = vadd.f32 %v2612, -0.4999988
        %v2614 = vmul.f32 %v2609, %v2613
        %v2615 = vadd.f32 1.0, %v2614
        %v2616 = vmul.f32 %v2607, %v2607
        %v2617 = vmul.f32 %v2616, -0.00019511016
        %v2618 = vadd.f32 %v2617, 0.008332121
        %v2619 = vmul.f32 %v2616, %v2618
        %v2620 = vadd.f32 %v2619, -0.16666654
        %v2621 = vmul.f32 %v2616, %v2620
        %v2622 = vadd.f32 %v2621, 1.0
        %v2623 = vmul.f32 %v2622, %v2607
        %vm2624 = vweird.f32 %v1394
        %v2625 = vadd.s32 %v2608, 3
        %v2626 = vand.u32 %v2625, 3
        %vm2627 = vcmp.lt.s32.totalorder %v2626, 2
        %vm2628 = vcmp.eq.s32.totalorder %v2626, 0
        %v2629 = vxor.u32 %v2623, 2147483648
        %v2630 = vsel %vm2628, %v2615, %v2629
        %vm2631 = vcmp.eq.s32.totalorder %v2626, 2
        %v2632 = vxor.u32 %v2615, 2147483648
        %v2633 = vsel %vm2631, %v2632, %v2623
        %v2634 = vsel %vm2627, %v2630, %v2633
        %v2635 = vsel %vm2624, nan, %v2634
        %v2636 = vmul.f32 %v1550, %v1215
        %v2637 = vmul.f32 %v1705, %v1218
        %v2638 = vmul.f32 %v1860, %v1221
        %v2639 = vmul.f32 %v2015, %v1224
        %v2640 = vmul.f32 %v2170, %v1227
        %v2641 = vmul.f32 %v2325, %v1230
        %v2642 = vmul.f32 %v2480, %v1233
        %v2643 = vmul.f32 %v2635, %v1236
        %v2644 = vld [vmem:[%s9] sm:$0xff]
        %v2645 = vld [vmem:[%s9 + $0x8] sm:$0xff]
        %v2646 = vld [vmem:[%s9 + $0x10] sm:$0xff]
        %v2647 = vld [vmem:[%s9 + $0x18] sm:$0xff]
        %v2648 = vld [vmem:[%s9 + $0x20] sm:$0xff]
        %v2649 = vld [vmem:[%s9 + $0x28] sm:$0xff]
        %v2650 = vld [vmem:[%s9 + $0x30] sm:$0xff]
        %v2651 = vld [vmem:[%s9 + $0x38] sm:$0xff]
        %v2652 = vld [vmem:[%s10] sm:$0xff]
        %v2653 = vld [vmem:[%s10 + $0x8] sm:$0xff]
        %v2654 = vld [vmem:[%s10 + $0x10] sm:$0xff]
        %v2655 = vld [vmem:[%s10 + $0x18] sm:$0xff]
        %v2656 = vld [vmem:[%s10 + $0x20] sm:$0xff]
        %v2657 = vld [vmem:[%s10 + $0x28] sm:$0xff]
        %v2658 = vld [vmem:[%s10 + $0x30] sm:$0xff]
        %v2659 = vld [vmem:[%s10 + $0x38] sm:$0xff]
        %2661 = vset.pattern.permute.xlu0 0
        %2662 = vperm.xlu0 %2661, %v2652
        %v2663 = vpop.permute.xlu0 %2662
        %2666 = vset.pattern.permute.xlu0 0
        %2667 = vperm.xlu0 %2666, %v2653
        %v2668 = vpop.permute.xlu0 %2667
        %2671 = vset.pattern.permute.xlu0 0
        %2672 = vperm.xlu0 %2671, %v2654
        %v2673 = vpop.permute.xlu0 %2672
        %2676 = vset.pattern.permute.xlu0 0
        %2677 = vperm.xlu0 %2676, %v2655
        %v2678 = vpop.permute.xlu0 %2677
        %2681 = vset.pattern.permute.xlu0 0
        %2682 = vperm.xlu0 %2681, %v2656
        %v2683 = vpop.permute.xlu0 %2682
        %2686 = vset.pattern.permute.xlu0 0
        %2687 = vperm.xlu0 %2686, %v2657
        %v2688 = vpop.permute.xlu0 %2687
        %2691 = vset.pattern.permute.xlu0 0
        %2692 = vperm.xlu0 %2691, %v2658
        %v2693 = vpop.permute.xlu0 %2692
        %2696 = vset.pattern.permute.xlu0 0
        %2697 = vperm.xlu0 %2696, %v2659
        %v2698 = vpop.permute.xlu0 %2697
        %v2701 = vsel %vm716, %v2644, 0
        %v2704 = vsel %vm716, %v2645, 0
        %v2707 = vsel %vm716, %v2646, 0
        %v2710 = vsel %vm716, %v2647, 0
        %v2713 = vsel %vm716, %v2648, 0
        %v2716 = vsel %vm716, %v2649, 0
        %v2719 = vsel %vm716, %v2650, 0
        %v2722 = vsel %vm716, %v2651, 0
        %2724 = vmatpush.msra.mxu0 0.0
        %2725 = vmatpush.msra.mxu0 0.0
        %2726 = vmatpush.msra.mxu0 0.0
        %2727 = vmatpush.msra.mxu0 0.0
        %2728 = vmatpush.msra.mxu0 0.0
        %2729 = vmatpush.msra.mxu0 0.0
        %2730 = vmatpush.msra.mxu0 0.0
        %2731 = vmatpush.msra.mxu0 0.0
        %2732 = vmatpush.msra.mxu0 %v846
        %2733 = vmatpush.msra.mxu0 %v845
        %2734 = vmatpush.msra.mxu0 %v844
        %2735 = vmatpush.msra.mxu0 %v843
        %2736 = vmatpush.msra.mxu0 %v842
        %2737 = vmatpush.msra.mxu0 %v841
        %2738 = vmatpush.msra.mxu0 %v840
        %2739 = vmatpush.msra.mxu0 %v839
        %2740 = vmatmul.f32.gmra.mxu0 %v2701
        %v2741 = vpop.f32.mrf.mxu0
        %v2742 = vadd.f32 %v2663, %v2741
        %2743 = vmatmul.f32.gmra.mxu0 %v2704
        %v2744 = vpop.f32.mrf.mxu0
        %v2745 = vadd.f32 %v2668, %v2744
        %2746 = vmatmul.f32.gmra.mxu0 %v2707
        %v2747 = vpop.f32.mrf.mxu0
        %v2748 = vadd.f32 %v2673, %v2747
        %2749 = vmatmul.f32.gmra.mxu0 %v2710
        %v2750 = vpop.f32.mrf.mxu0
        %v2751 = vadd.f32 %v2678, %v2750
        %2752 = vmatmul.f32.gmra.mxu0 %v2713
        %v2753 = vpop.f32.mrf.mxu0
        %v2754 = vadd.f32 %v2683, %v2753
        %2755 = vmatmul.f32.gmra.mxu0 %v2716
        %v2756 = vpop.f32.mrf.mxu0
        %v2757 = vadd.f32 %v2688, %v2756
        %2758 = vmatmul.f32.gmra.mxu0 %v2719
        %v2759 = vpop.f32.mrf.mxu0
        %v2760 = vadd.f32 %v2693, %v2759
        %2761 = vmatmul.f32.gmra.mxu0 %v2722
        %v2762 = vpop.f32.mrf.mxu0
        %v2763 = vadd.f32 %v2698, %v2762
        %2764 = vdwg.mxu0
        %v2765 = vld [vmem:[%s11] sm:$0x1f]
        %v2766 = vld [vmem:[%s12] sm:$0x1f]
        %2768 = vset.pattern.permute.xlu0 0
        %2769 = vperm.xlu0 %2768, %v2766
        %v2770 = vpop.permute.xlu0 %2769
        %v2773 = vsel %vm716, %v2765, 0
        %2775 = vmatpush.msra.mxu0 0.0
        %2776 = vmatpush.msra.mxu0 0.0
        %2777 = vmatpush.msra.mxu0 0.0
        %2778 = vmatpush.msra.mxu0 0.0
        %2779 = vmatpush.msra.mxu0 0.0
        %2780 = vmatpush.msra.mxu0 0.0
        %2781 = vmatpush.msra.mxu0 0.0
        %2782 = vmatpush.msra.mxu0 0.0
        %2783 = vmatpush.msra.mxu0 %v2763
        %2784 = vmatpush.msra.mxu0 %v2760
        %2785 = vmatpush.msra.mxu0 %v2757
        %2786 = vmatpush.msra.mxu0 %v2754
        %2787 = vmatpush.msra.mxu0 %v2751
        %2788 = vmatpush.msra.mxu0 %v2748
        %2789 = vmatpush.msra.mxu0 %v2745
        %2790 = vmatpush.msra.mxu0 %v2742
        %2791 = vmatmul.f32.gmra.mxu0 %v2773
        %v2792 = vpop.f32.mrf.mxu0
        %v2793 = vadd.f32 %v2770, %v2792
        %2794 = vdwg.mxu0
        %v2795 = vand.u32 2147483647, %v2793
        %v2796 = vld [vmem:[%s508] sm:$0xf]
        %v2798 = vsel %vm560, %v2796, 0
        %2800 = vmatpush.msra.mxu0 0.0
        %2801 = vmatpush.msra.mxu0 0.0
        %2802 = vmatpush.msra.mxu0 0.0
        %2803 = vmatpush.msra.mxu0 0.0
        %2804 = vmatpush.msra.mxu0 0.0
        %2805 = vmatpush.msra.mxu0 0.0
        %2806 = vmatpush.msra.mxu0 0.0
        %2807 = vmatpush.msra.mxu0 0.0
        %2808 = vmatpush.msra.mxu0 0.0
        %2809 = vmatpush.msra.mxu0 0.0
        %2810 = vmatpush.msra.mxu0 0.0
        %2811 = vmatpush.msra.mxu0 0.0
        %2812 = vmatpush.msra.mxu0 %v634
        %2813 = vmatpush.msra.mxu0 %v633
        %2814 = vmatpush.msra.mxu0 %v632
        %2815 = vmatpush.msra.mxu0 %v631
        %2816 = vmatmul.f32.gmra.mxu0 %v2798
        %v2817 = vpop.f32.mrf.mxu0
        %v2818 = vadd.f32 0.0, %v2817
        %2819 = vdwg.mxu0
        %v2821 = vrot.slane %v2818, 4
        %vm2823 = vcmask 1043456
        %v2824 = vsel %vm2823, %v2796, %v2821
        %v2825 = vld [vmem:[%s13] sm:$0xff]
        %v2826 = vld [vmem:[%s13 + $0x8] sm:$0x3]
        %vm2827 = vcmask 64512
        %v2829 = vsel %vm2827, %v2825, 0
        %v2832 = vsel %vm2827, %v2826, 0
        %2834 = vmatpush.msra.mxu0 0.0
        %2835 = vmatpush.msra.mxu0 0.0
        %2836 = vmatpush.msra.mxu0 0.0
        %2837 = vmatpush.msra.mxu0 0.0
        %2838 = vmatpush.msra.mxu0 0.0
        %2839 = vmatpush.msra.mxu0 0.0
        %2840 = vmatpush.msra.mxu0 0.0
        %2841 = vmatpush.msra.mxu0 0.0
        %2842 = vmatpush.msra.mxu0 0.0
        %2843 = vmatpush.msra.mxu0 0.0
        %2844 = vmatpush.msra.mxu0 0.0
        %2845 = vmatpush.msra.mxu0 0.0
        %2846 = vmatpush.msra.mxu0 0.0
        %2847 = vmatpush.msra.mxu0 0.0
        %2848 = vmatpush.msra.mxu0 0.0
        %2849 = vmatpush.msra.mxu0 %v2824
        %2850 = vmatmul.f32.gmra.mxu0 %v2829
        %v2851 = vpop.f32.mrf.mxu0
        %v2852 = vadd.f32 0.0, %v2851
        %2853 = vmatmul.f32.gmra.mxu0 %v2832
        %v2854 = vpop.f32.mrf.mxu0
        %v2855 = vadd.f32 0.0, %v2854
        %2856 = vdwg.mxu0
        %v2858 = vrot.slane %v2795, 3
        %vm2860 = vcmask 1044480
        %v2861 = vsel %vm2860, %v2795, %v2858
        %v2862 = vmul.f32 %v2852, %v2861
        %v2863 = vmul.f32 %v2855, %v2858
        %v2864 = vld [vmem:[%s14] sm:$0xff]
        %vm2865 = vcmask 80896
        %v2867 = vsel %vm2865, %v2864, 0
        %vm2869 = vcmask 1041408
        %v2871 = vsel %vm2869, %v2863, 0
        %2873 = vmatpush.msra.mxu0 0.0
        %2874 = vmatpush.msra.mxu0 0.0
        %2875 = vmatpush.msra.mxu0 0.0
        %2876 = vmatpush.msra.mxu0 0.0
        %2877 = vmatpush.msra.mxu0 0.0
        %2878 = vmatpush.msra.mxu0 0.0
        %2879 = vmatpush.msra.mxu0 0.0
        %2880 = vmatpush.msra.mxu0 0.0
        %2881 = vmatpush.msra.mxu0 0.0
        %2882 = vmatpush.msra.mxu0 0.0
        %2883 = vmatpush.msra.mxu0 0.0
        %2884 = vmatpush.msra.mxu0 0.0
        %2885 = vmatpush.msra.mxu0 0.0
        %2886 = vmatpush.msra.mxu0 0.0
        %2887 = vmatpush.msra.mxu0 %v2871
        %2888 = vmatpush.msra.mxu0 %v2862
        %2889 = vmatmul.f32.gmra.mxu0 %v2867
        %v2890 = vpop.f32.mrf.mxu0
        %v2891 = vadd.f32 0.0, %v2890
        %2892 = vdwg.mxu0
        %v2893 = vmul.u32 %v542, 4
        %v2894 = vmul.u32 %v543, 4
        %v2895 = vmul.u32 %v544, 4
        %v2896 = vmul.u32 %v545, 4
        %vm2897 = vcmp.eq.s32.totalorder %v547, %v2893
        %vm2898 = vcmp.eq.s32.totalorder %v547, %v2894
        %vm2899 = vcmp.eq.s32.totalorder %v547, %v2895
        %vm2900 = vcmp.eq.s32.totalorder %v547, %v2896
        %v2901 = vsel %vm2897, 1.0, 0.0
        %v2902 = vsel %vm2898, 1.0, 0.0
        %v2903 = vsel %vm2899, 1.0, 0.0
        %v2904 = vsel %vm2900, 1.0, 0.0
        %v2905 = vadd.s32 %v2893, 1
        %v2906 = vadd.s32 %v2894, 1
        %v2907 = vadd.s32 %v2895, 1
        %v2908 = vadd.s32 %v2896, 1
        %vm2909 = vcmp.eq.s32.totalorder %v547, %v2905
        %vm2910 = vcmp.eq.s32.totalorder %v547, %v2906
        %vm2911 = vcmp.eq.s32.totalorder %v547, %v2907
        %vm2912 = vcmp.eq.s32.totalorder %v547, %v2908
        %v2913 = vsel %vm2909, 1.0, 0.0
        %v2914 = vsel %vm2910, 1.0, 0.0
        %v2915 = vsel %vm2911, 1.0, 0.0
        %v2916 = vsel %vm2912, 1.0, 0.0
        %v2918 = vrot.slane %v2891, 1
        %v2919 = vsel %vm560, %v2918, 0
        %2921 = vmatpush.msra.mxu0 0.0
        %2922 = vmatpush.msra.mxu0 0.0
        %2923 = vmatpush.msra.mxu0 0.0
        %2924 = vmatpush.msra.mxu0 0.0
        %2925 = vmatpush.msra.mxu0 0.0
        %2926 = vmatpush.msra.mxu0 0.0
        %2927 = vmatpush.msra.mxu0 0.0
        %2928 = vmatpush.msra.mxu0 0.0
        %2929 = vmatpush.msra.mxu0 0.0
        %2930 = vmatpush.msra.mxu0 0.0
        %2931 = vmatpush.msra.mxu0 0.0
        %2932 = vmatpush.msra.mxu0 0.0
        %2933 = vmatpush.msra.mxu0 %v2916
        %2934 = vmatpush.msra.mxu0 %v2915
        %2935 = vmatpush.msra.mxu0 %v2914
        %2936 = vmatpush.msra.mxu0 %v2913
        %2937 = vmatmul.f32.gmra.mxu0 %v2919
        %v2938 = vpop.f32.mrf.mxu0
        %v2939 = vadd.f32 0.0, %v2938
        %2940 = vdwg.mxu0
        %v2941 = vsel %vm560, %v2891, 0
        %2943 = vmatpush.msra.mxu0 0.0
        %2944 = vmatpush.msra.mxu0 0.0
        %2945 = vmatpush.msra.mxu0 0.0
        %2946 = vmatpush.msra.mxu0 0.0
        %2947 = vmatpush.msra.mxu0 0.0
        %2948 = vmatpush.msra.mxu0 0.0
        %2949 = vmatpush.msra.mxu0 0.0
        %2950 = vmatpush.msra.mxu0 0.0
        %2951 = vmatpush.msra.mxu0 0.0
        %2952 = vmatpush.msra.mxu0 0.0
        %2953 = vmatpush.msra.mxu0 0.0
        %2954 = vmatpush.msra.mxu0 0.0
        %2955 = vmatpush.msra.mxu0 %v2904
        %2956 = vmatpush.msra.mxu0 %v2903
        %2957 = vmatpush.msra.mxu0 %v2902
        %2958 = vmatpush.msra.mxu0 %v2901
        %2959 = vmatmul.f32.gmra.mxu0 %v2941
        %v2960 = vpop.f32.mrf.mxu0
        %v2961 = vadd.f32 %v2939, %v2960
        %2962 = vdwg.mxu0
        %v2963 = vadd.s32 %v2893, 2
        %v2964 = vadd.s32 %v2894, 2
        %v2965 = vadd.s32 %v2895, 2
        %v2966 = vadd.s32 %v2896, 2
        %vm2967 = vcmp.eq.s32.totalorder %v547, %v2963
        %vm2968 = vcmp.eq.s32.totalorder %v547, %v2964
        %vm2969 = vcmp.eq.s32.totalorder %v547, %v2965
        %vm2970 = vcmp.eq.s32.totalorder %v547, %v2966
        %v2971 = vsel %vm2967, 1.0, 0.0
        %v2972 = vsel %vm2968, 1.0, 0.0
        %v2973 = vsel %vm2969, 1.0, 0.0
        %v2974 = vsel %vm2970, 1.0, 0.0
        %v2975 = vrot.slane %v2891, 2
        %v2976 = vsel %vm560, %v2975, 0
        %2978 = vmatpush.msra.mxu0 0.0
        %2979 = vmatpush.msra.mxu0 0.0
        %2980 = vmatpush.msra.mxu0 0.0
        %2981 = vmatpush.msra.mxu0 0.0
        %2982 = vmatpush.msra.mxu0 0.0
        %2983 = vmatpush.msra.mxu0 0.0
        %2984 = vmatpush.msra.mxu0 0.0
        %2985 = vmatpush.msra.mxu0 0.0
        %2986 = vmatpush.msra.mxu0 0.0
        %2987 = vmatpush.msra.mxu0 0.0
        %2988 = vmatpush.msra.mxu0 0.0
        %2989 = vmatpush.msra.mxu0 0.0
        %2990 = vmatpush.msra.mxu0 %v2974
        %2991 = vmatpush.msra.mxu0 %v2973
        %2992 = vmatpush.msra.mxu0 %v2972
        %2993 = vmatpush.msra.mxu0 %v2971
        %2994 = vmatmul.f32.gmra.mxu0 %v2976
        %v2995 = vpop.f32.mrf.mxu0
        %v2996 = vadd.f32 0.0, %v2995
        %2997 = vdwg.mxu0
        %v2998 = vadd.f32 %v2961, %v2996
        %v2999 = vadd.s32 %v2893, 3
        %v3000 = vadd.s32 %v2894, 3
        %v3001 = vadd.s32 %v2895, 3
        %v3002 = vadd.s32 %v2896, 3
        %vm3003 = vcmp.eq.s32.totalorder %v547, %v2999
        %vm3004 = vcmp.eq.s32.totalorder %v547, %v3000
        %vm3005 = vcmp.eq.s32.totalorder %v547, %v3001
        %vm3006 = vcmp.eq.s32.totalorder %v547, %v3002
        %v3007 = vsel %vm3003, 1.0, 0.0
        %v3008 = vsel %vm3004, 1.0, 0.0
        %v3009 = vsel %vm3005, 1.0, 0.0
        %v3010 = vsel %vm3006, 1.0, 0.0
        %v3011 = vrot.slane %v2891, 3
        %v3012 = vsel %vm560, %v3011, 0
        %3014 = vmatpush.msra.mxu0 0.0
        %3015 = vmatpush.msra.mxu0 0.0
        %3016 = vmatpush.msra.mxu0 0.0
        %3017 = vmatpush.msra.mxu0 0.0
        %3018 = vmatpush.msra.mxu0 0.0
        %3019 = vmatpush.msra.mxu0 0.0
        %3020 = vmatpush.msra.mxu0 0.0
        %3021 = vmatpush.msra.mxu0 0.0
        %3022 = vmatpush.msra.mxu0 0.0
        %3023 = vmatpush.msra.mxu0 0.0
        %3024 = vmatpush.msra.mxu0 0.0
        %3025 = vmatpush.msra.mxu0 0.0
        %3026 = vmatpush.msra.mxu0 %v3010
        %3027 = vmatpush.msra.mxu0 %v3009
        %3028 = vmatpush.msra.mxu0 %v3008
        %3029 = vmatpush.msra.mxu0 %v3007
        %3030 = vmatmul.f32.gmra.mxu0 %v3012
        %v3031 = vpop.f32.mrf.mxu0
        %v3032 = vadd.f32 0.0, %v3031
        %3033 = vdwg.mxu0
        %v3034 = vadd.f32 %v2998, %v3032
        %v3035 = vadd.s32 %v2893, 4
        %v3036 = vadd.s32 %v2894, 4
        %v3037 = vadd.s32 %v2895, 4
        %v3038 = vadd.s32 %v2896, 4
        %vm3039 = vcmp.eq.s32.totalorder %v547, %v3035
        %vm3040 = vcmp.eq.s32.totalorder %v547, %v3036
        %vm3041 = vcmp.eq.s32.totalorder %v547, %v3037
        %vm3042 = vcmp.eq.s32.totalorder %v547, %v3038
        %v3043 = vsel %vm3039, 1.0, 0.0
        %v3044 = vsel %vm3040, 1.0, 0.0
        %v3045 = vsel %vm3041, 1.0, 0.0
        %v3046 = vsel %vm3042, 1.0, 0.0
        %v3047 = vrot.slane %v2891, 4
        %v3048 = vsel %vm560, %v3047, 0
        %3050 = vmatpush.msra.mxu0 0.0
        %3051 = vmatpush.msra.mxu0 0.0
        %3052 = vmatpush.msra.mxu0 0.0
        %3053 = vmatpush.msra.mxu0 0.0
        %3054 = vmatpush.msra.mxu0 0.0
        %3055 = vmatpush.msra.mxu0 0.0
        %3056 = vmatpush.msra.mxu0 0.0
        %3057 = vmatpush.msra.mxu0 0.0
        %3058 = vmatpush.msra.mxu0 0.0
        %3059 = vmatpush.msra.mxu0 0.0
        %3060 = vmatpush.msra.mxu0 0.0
        %3061 = vmatpush.msra.mxu0 0.0
        %3062 = vmatpush.msra.mxu0 %v3046
        %3063 = vmatpush.msra.mxu0 %v3045
        %3064 = vmatpush.msra.mxu0 %v3044
        %3065 = vmatpush.msra.mxu0 %v3043
        %3066 = vmatmul.f32.gmra.mxu0 %v3048
        %v3067 = vpop.f32.mrf.mxu0
        %v3068 = vadd.f32 0.0, %v3067
        %3069 = vdwg.mxu0
        %v3070 = vadd.f32 %v3034, %v3068
        %v3071 = vadd.s32 %v2893, 5
        %v3072 = vadd.s32 %v2894, 5
        %v3073 = vadd.s32 %v2895, 5
        %v3074 = vadd.s32 %v2896, 5
        %vm3075 = vcmp.eq.s32.totalorder %v547, %v3071
        %vm3076 = vcmp.eq.s32.totalorder %v547, %v3072
        %vm3077 = vcmp.eq.s32.totalorder %v547, %v3073
        %vm3078 = vcmp.eq.s32.totalorder %v547, %v3074
        %v3079 = vsel %vm3075, 1.0, 0.0
        %v3080 = vsel %vm3076, 1.0, 0.0
        %v3081 = vsel %vm3077, 1.0, 0.0
        %v3082 = vsel %vm3078, 1.0, 0.0
        %v3083 = vrot.slane %v2891, 5
        %v3084 = vsel %vm560, %v3083, 0
        %3086 = vmatpush.msra.mxu0 0.0
        %3087 = vmatpush.msra.mxu0 0.0
        %3088 = vmatpush.msra.mxu0 0.0
        %3089 = vmatpush.msra.mxu0 0.0
        %3090 = vmatpush.msra.mxu0 0.0
        %3091 = vmatpush.msra.mxu0 0.0
        %3092 = vmatpush.msra.mxu0 0.0
        %3093 = vmatpush.msra.mxu0 0.0
        %3094 = vmatpush.msra.mxu0 0.0
        %3095 = vmatpush.msra.mxu0 0.0
        %3096 = vmatpush.msra.mxu0 0.0
        %3097 = vmatpush.msra.mxu0 0.0
        %3098 = vmatpush.msra.mxu0 %v3082
        %3099 = vmatpush.msra.mxu0 %v3081
        %3100 = vmatpush.msra.mxu0 %v3080
        %3101 = vmatpush.msra.mxu0 %v3079
        %3102 = vmatmul.f32.gmra.mxu0 %v3084
        %v3103 = vpop.f32.mrf.mxu0
        %v3104 = vadd.f32 0.0, %v3103
        %3105 = vdwg.mxu0
        %v3106 = vadd.f32 %v3070, %v3104
        %v3107 = vadd.s32 %v2893, 6
        %v3108 = vadd.s32 %v2894, 6
        %v3109 = vadd.s32 %v2895, 6
        %v3110 = vadd.s32 %v2896, 6
        %vm3111 = vcmp.eq.s32.totalorder %v547, %v3107
        %vm3112 = vcmp.eq.s32.totalorder %v547, %v3108
        %vm3113 = vcmp.eq.s32.totalorder %v547, %v3109
        %vm3114 = vcmp.eq.s32.totalorder %v547, %v3110
        %v3115 = vsel %vm3111, 1.0, 0.0
        %v3116 = vsel %vm3112, 1.0, 0.0
        %v3117 = vsel %vm3113, 1.0, 0.0
        %v3118 = vsel %vm3114, 1.0, 0.0
        %v3119 = vrot.slane %v2891, 6
        %v3120 = vsel %vm560, %v3119, 0
        %3122 = vmatpush.msra.mxu0 0.0
        %3123 = vmatpush.msra.mxu0 0.0
        %3124 = vmatpush.msra.mxu0 0.0
        %3125 = vmatpush.msra.mxu0 0.0
        %3126 = vmatpush.msra.mxu0 0.0
        %3127 = vmatpush.msra.mxu0 0.0
        %3128 = vmatpush.msra.mxu0 0.0
        %3129 = vmatpush.msra.mxu0 0.0
        %3130 = vmatpush.msra.mxu0 0.0
        %3131 = vmatpush.msra.mxu0 0.0
        %3132 = vmatpush.msra.mxu0 0.0
        %3133 = vmatpush.msra.mxu0 0.0
        %3134 = vmatpush.msra.mxu0 %v3118
        %3135 = vmatpush.msra.mxu0 %v3117
        %3136 = vmatpush.msra.mxu0 %v3116
        %3137 = vmatpush.msra.mxu0 %v3115
        %3138 = vmatmul.f32.gmra.mxu0 %v3120
        %v3139 = vpop.f32.mrf.mxu0
        %v3140 = vadd.f32 0.0, %v3139
        %3141 = vdwg.mxu0
        %v3142 = vadd.f32 %v3106, %v3140
        %v3143 = vadd.s32 %v2893, 7
        %v3144 = vadd.s32 %v2894, 7
        %v3145 = vadd.s32 %v2895, 7
        %v3146 = vadd.s32 %v2896, 7
        %vm3147 = vcmp.eq.s32.totalorder %v547, %v3143
        %vm3148 = vcmp.eq.s32.totalorder %v547, %v3144
        %vm3149 = vcmp.eq.s32.totalorder %v547, %v3145
        %vm3150 = vcmp.eq.s32.totalorder %v547, %v3146
        %v3151 = vsel %vm3147, 1.0, 0.0
        %v3152 = vsel %vm3148, 1.0, 0.0
        %v3153 = vsel %vm3149, 1.0, 0.0
        %v3154 = vsel %vm3150, 1.0, 0.0
        %v3155 = vrot.slane %v2891, 7
        %v3156 = vsel %vm560, %v3155, 0
        %3158 = vmatpush.msra.mxu0 0.0
        %3159 = vmatpush.msra.mxu0 0.0
        %3160 = vmatpush.msra.mxu0 0.0
        %3161 = vmatpush.msra.mxu0 0.0
        %3162 = vmatpush.msra.mxu0 0.0
        %3163 = vmatpush.msra.mxu0 0.0
        %3164 = vmatpush.msra.mxu0 0.0
        %3165 = vmatpush.msra.mxu0 0.0
        %3166 = vmatpush.msra.mxu0 0.0
        %3167 = vmatpush.msra.mxu0 0.0
        %3168 = vmatpush.msra.mxu0 0.0
        %3169 = vmatpush.msra.mxu0 0.0
        %3170 = vmatpush.msra.mxu0 %v3154
        %3171 = vmatpush.msra.mxu0 %v3153
        %3172 = vmatpush.msra.mxu0 %v3152
        %3173 = vmatpush.msra.mxu0 %v3151
        %3174 = vmatmul.f32.gmra.mxu0 %v3156
        %v3175 = vpop.f32.mrf.mxu0
        %v3176 = vadd.f32 0.0, %v3175
        %3177 = vdwg.mxu0
        %v3178 = vadd.f32 %v3142, %v3176
        %v3180 = vsel %vm716, 1.0, 0
        %3182 = vmatpush.msra.mxu0 0.0
        %3183 = vmatpush.msra.mxu0 0.0
        %3184 = vmatpush.msra.mxu0 0.0
        %3185 = vmatpush.msra.mxu0 0.0
        %3186 = vmatpush.msra.mxu0 0.0
        %3187 = vmatpush.msra.mxu0 0.0
        %3188 = vmatpush.msra.mxu0 0.0
        %3189 = vmatpush.msra.mxu0 0.0
        %3190 = vmatpush.msra.mxu0 %v2643
        %3191 = vmatpush.msra.mxu0 %v2642
        %3192 = vmatpush.msra.mxu0 %v2641
        %3193 = vmatpush.msra.mxu0 %v2640
        %3194 = vmatpush.msra.mxu0 %v2639
        %3195 = vmatpush.msra.mxu0 %v2638
        %3196 = vmatpush.msra.mxu0 %v2637
        %3197 = vmatpush.msra.mxu0 %v2636
        %3198 = vmatmul.f32.gmra.mxu0 %v3180
        %v3199 = vpop.f32.mrf.mxu0
        %v3200 = vadd.f32 %v3178, %v3199
        %3201 = vdwg.mxu0
        %3202 = vst [vmem:[%s499] sm:$0x1] %v3200
        %s3203 = sand.u32 %s362, 1
        %s3204 = scalar_lea.sflag [#allocation3], %s3203
        %s3205 = sand.u32 %s362, 1
        %s3206 = scalar_lea.vmem [#allocation2], %s3205
        // Predicated region
        $region81: #{tpu_custom_call.1} parent=79 // pred_check
          %p3207 = pneg %p372
        $region82: #{tpu_custom_call.1} parent=79 // pred_check_branch
          %3209 = sbr.rel (%p3207) target = $region84
        $region83: #{tpu_custom_call.1} parent=79 // pred_region
          %3211 = vsyncadd %s3204, 0
          %s3212 = scalar_lea.hbm %s15, %s29
          %s3214 = sshll.u32 %s3206, 4
          %s3215 = int_to_ptr.vmem [resolvable:$true] %s3214
          %s3216 = sshll.u32 %s3212, 4
          %s3217 = int_to_ptr.hbm [resolvable:$true] %s3216
          %3219 = dma.vmem_to_hbm [thread:$0]  %s3215, 16, %s3217, %s3204
        $region84: #{tpu_custom_call.1} parent=79 // pred_fallthru
          _
      $region80: #{tpu_custom_call.1} parent=5 // pred_fallthru
        _
      %p3220 = scmp.le.s32.totalorder 2, %s24
      // Predicated region
      $region85: #{tpu_custom_call.1} parent=5 // pred_check
        %p3221 = pneg %p3220
      $region86: #{tpu_custom_call.1} parent=5 // pred_check_branch
        %3223 = sbr.rel (%p3221) target = $region88
      $region87: #{tpu_custom_call.1} parent=5 // pred_region
        %s3224 = ssub.s32 %s24, 2
        // Predicated region
        $region89: #{tpu_custom_call.1} parent=87 // pred_check
          %p3225 = pneg %p378
        $region90: #{tpu_custom_call.1} parent=87 // pred_check_branch
          %3227 = sbr.rel (%p3225) target = $region92
        $region91: #{tpu_custom_call.1} parent=87 // pred_region
          %s3228 = sand.u32 %s363, 1
          %s3229 = scalar_lea.sflag [#allocation3], %s3228
          %s3230 = sand.u32 %s363, 1
          %s3231 = scalar_lea.vmem [#allocation2], %s3230
          %3233 = dma.done %s3229, 16
        $region92: #{tpu_custom_call.1} parent=87 // pred_fallthru
          _
      $region88: #{tpu_custom_call.1} parent=5 // pred_fallthru
        _
    $region6: #{tpu_custom_call.1} parent=1 // loop_footer
      %s28 = sadd.s32 1, %s24
    $region7: #{tpu_custom_call.1} parent=1 // loop_footer_branch
      %23 = sbr.rel target = $region3
    $region8: #{tpu_custom_call.1} parent=1 // loop_exit
      _
    %3234 = vsyncpa [#allocation3], 1
    %s3235 = scalar_lea.sflag [#allocation3], 1
    %3236 = vsyncpa %s3235, 1

</llo_original>
